<compile_context>
chip_gen: v7x
topology: tpu7x:2x2x1
jax: 0.10.0
libtpu: 0.0.40
codegen_flags: <defaults>
</compile_context>

<pallas_src>
import jax
import jax.numpy as jnp
import numpy as np
from jax.experimental import pallas as pl
from jax.experimental.pallas import tpu as pltpu

# ---- model hyper-parameters (small, consistent with the module __init__) ----
BS = 2          # batch size
N = 8           # n_nodes
DIMS = 3        # coordinate dims
IN_NF = 4       # in_node_nf
HID = 32        # hidden_nf
OUT_NF = 5      # out_node_nf
OUT_E_NF = 2    # out_edge_nf
NL = 4          # n_layers
E_IN = 2 * HID + 1 + 1   # [h_i, h_j, ||x_i-x_j||^2, edge_attr]
NN = BS * N     # total nodes  (16)
E = BS * N * N  # total edges  (128) -- the lane dimension of the edge path
OUT_PAD = 8     # transposed output channel padding (rows)

f32 = jnp.float32
bf16 = jnp.bfloat16


def _silu(v):
    # x * sigmoid(x); exp and the (approx) reciprocal both go to the EUP slot.
    return v * pl.reciprocal(1.0 + jnp.exp(-v), approx=True)


def egnn_kernel(node_ref, edge_ref, rc_ref, r_ref, wsq_ref, wvec_ref, outp_ref, out_ref):
    """Whole batch + whole EGNN, transposed (lane-dense edge path), single invocation."""
    nd = node_ref[...]                               # (8, NN) f32: [h^T(4); x^T(3); nm^T(1)]
    nmT = nd[IN_NF + DIMS:IN_NF + DIMS + 1]          # (1, NN)
    h_inT = nd[0:IN_NF] * nmT                        # (IN_NF, NN)   input masking
    xT = nd[IN_NF:IN_NF + DIMS] * nmT                # (DIMS,  NN)

    ed = edge_ref[...]                               # (2, E) f32: [ea^T; em^T]
    emT = ed[1:2]                                    # (1, E)
    eaT = ed[0:1] * emT                              # (1, E)

    rc_bf = rc_ref[...]                              # (2*NN, E) bf16  [RT; CT] (exact 0/1)
    r_bf = r_ref[...]                                # (E, NN)  bf16   R = S^T

    # --- node embedding (transposed): hT = Wemb^T @ h^T + bemb ---
    wemb = wvec_ref[NL]                              # (HID, 8) f32: [Wemb^T | bemb | pad]
    hT = (jnp.dot(wemb[:, 0:IN_NF], h_inT, preferred_element_type=f32)
          + wemb[:, IN_NF:IN_NF + 1])                # (HID, NN)

    # --- pairwise squared distances: one gather matmul, radial on the VPU ---
    rc_f = rc_bf.astype(f32)
    dsel = rc_f[0:NN] - rc_f[NN:2 * NN]              # (NN, E): RT - CT (exact +-1/0)
    d = jnp.dot(xT, dsel, preferred_element_type=f32)            # (DIMS, E)
    radialT = d[0:1] * d[0:1] + d[1:2] * d[1:2] + d[2:3] * d[2:3]  # (1, E)

    edge_T = jnp.zeros((HID, E), f32)                # last-layer edge messages (transposed)
    for l in range(NL):                              # static layer loop, unrolled
        wl = wsq_ref[l]                              # (160, 64) bf16 per-layer slab
        we1ab = wl[0:2 * HID, 0:HID]                 # (64, 32)  [We1a^T; We1b^T]
        we2 = wl[2 * HID:3 * HID, 0:HID]             # (32, 32)  We2^T
        wn1 = wl[3 * HID:4 * HID, 0:2 * HID]         # (32, 64)  Wn1^T
        wn2 = wl[4 * HID:5 * HID, 0:HID]             # (32, 32)  Wn2^T
        wv = wvec_ref[l]                             # (HID, 8) f32 bias / rank-1 columns
        be1 = wv[:, 0:1]
        be2 = wv[:, 1:2]
        bn1 = wv[:, 2:3]
        bn2 = wv[:, 3:4]
        w_r = wv[:, 4:5]
        w_ea = wv[:, 5:6]

        # edge MLP (fused projection + fused selection, all lane-dense)
        hab = jnp.dot(we1ab, hT.astype(bf16), preferred_element_type=f32)    # (64, NN)
        hab_side = jnp.concatenate([hab[0:HID], hab[HID:2 * HID]], axis=1)   # (HID, 2*NN)
        pre = jnp.dot(hab_side.astype(bf16), rc_bf, preferred_element_type=f32)  # (HID, E)
        pre = pre + w_r * radialT + w_ea * eaT + be1
        m = _silu(pre)
        m = _silu(jnp.dot(we2, m.astype(bf16), preferred_element_type=f32) + be2)
        m = m * emT                                                           # edge mask

        # neighbor sum-aggregation as one MXU matmul against R = S^T
        agg = jnp.dot(m.astype(bf16), r_bf, preferred_element_type=f32)       # (HID, NN)

        # node MLP (fused first layer), recurrent residual + node mask
        cat_n = jnp.concatenate([hT, agg], axis=0).astype(bf16)               # (2*HID, NN)
        out = _silu(jnp.dot(wn1, cat_n, preferred_element_type=f32) + bn1)    # (HID, NN)
        out = jnp.dot(wn2, out.astype(bf16), preferred_element_type=f32) + bn2
        hT = (hT + out) * nmT
        edge_T = m

    # --- output decoders (transposed, padded to 8 output channels, f32 epilogue) ---
    wo = outp_ref[0]                                 # (8, HID+1): [Wout^T | bout], zero rows
    we_o = outp_ref[1]                               # (8, HID+1): [Weout^T | beout]
    h_out = (jnp.dot(wo[:, 0:HID], hT, preferred_element_type=f32)
             + wo[:, HID:HID + 1]) * nmT             # (8, NN)
    e_out = (jnp.dot(we_o[:, 0:HID], edge_T, preferred_element_type=f32)
             + we_o[:, HID:HID + 1]) * emT           # (8, E)

    h_wide = jnp.concatenate([h_out, jnp.zeros((OUT_PAD, E - NN), f32)], axis=1)  # (8, E)
    out_ref[...] = jnp.concatenate([h_wide, e_out], axis=0)                       # (16, E)


def _selection_constants():
    """Lane-dense selection constants, precomputed once (no in-kernel iota rebuild)."""
    e_idx = np.arange(E)
    b = e_idx // (N * N)
    rem = e_idx % (N * N)
    rownode = b * N + rem // N
    colnode = b * N + rem % N
    nodes = np.arange(NN)
    RT = (nodes[:, None] == rownode[None, :]).astype(np.float32)   # (NN, E)
    CT = (nodes[:, None] == colnode[None, :]).astype(np.float32)   # (NN, E)
    rc = np.concatenate([RT, CT], axis=0)                          # (2*NN, E)
    R = np.ascontiguousarray(RT.T)                                 # (E, NN) = S^T
    return jnp.asarray(rc, bf16), jnp.asarray(R, bf16)


def _pack_params(p):
    """Pre-transpose / pack all weights for the transposed lane-dense data path."""
    A_T = jnp.swapaxes(p["We1"][:, :HID, :], 1, 2)           # (NL, HID, HID) = We1a^T
    B_T = jnp.swapaxes(p["We1"][:, HID:2 * HID, :], 1, 2)    # (NL, HID, HID) = We1b^T
    we1ab_t = jnp.concatenate([A_T, B_T], axis=1)            # (NL, 2*HID, HID)
    we2_t = jnp.swapaxes(p["We2"], 1, 2)                     # (NL, HID, HID)
    wn1_t = jnp.swapaxes(p["Wn1"], 1, 2)                     # (NL, HID, 2*HID)
    wn2_t = jnp.swapaxes(p["Wn2"], 1, 2)                     # (NL, HID, HID)

    def padc(w):  # pad last dim to 2*HID columns
        return jnp.pad(w, ((0, 0), (0, 0), (0, 2 * HID - w.shape[2])))

    # per-layer square-weight slab: rows [We1ab^T(64); We2^T(32); Wn1^T(32); Wn2^T(32)]
    wsq = jnp.concatenate([padc(we1ab_t), padc(we2_t), wn1_t, padc(wn2_t)],
                          axis=1).astype(bf16)               # (NL, 5*HID, 2*HID) = (4,160,64)

    # per-layer column vectors [be1, be2, bn1, bn2, w_r, w_ea], plus the embedding at index NL
    vec = jnp.stack([p["be1"][:, 0, :], p["be2"][:, 0, :], p["bn1"][:, 0, :],
                     p["bn2"][:, 0, :], p["We1"][:, 2 * HID, :],
                     p["We1"][:, 2 * HID + 1, :]], axis=-1)  # (NL, HID, 6)
    vec = jnp.pad(vec, ((0, 0), (0, 0), (0, 2)))             # (NL, HID, 8)
    emb = jnp.concatenate([p["Wemb"].T, p["bemb"].T], axis=1)        # (HID, IN_NF+1)
    emb = jnp.pad(emb, ((0, 0), (0, 8 - (IN_NF + 1))))[None]         # (1, HID, 8)
    wvec = jnp.concatenate([vec, emb], axis=0).astype(f32)   # (NL+1, HID, 8)

    def pack_o(W, b):  # -> (8, HID+1): rows = (padded) output channels, cols = [W^T | bias]
        wt = jnp.concatenate([W, b], axis=0).T
        return jnp.pad(wt, ((0, OUT_PAD - wt.shape[0]), (0, 0)))

    outp = jnp.stack([pack_o(p["Wout"], p["bout"]),
                      pack_o(p["Weout"], p["beout"])], axis=0).astype(f32)   # (2, 8, HID+1)
    return wsq, wvec, outp


def egnn_output_he(x, h, edge_attr, node_mask, edge_mask, params):
    bs, n, dims = x.shape
    # the kernel is specialized to the module's static shapes (review concern)
    assert bs == BS and n == N and dims == DIMS and h.shape[2] == IN_NF

    node_in_T = jnp.concatenate(
        [h.reshape(NN, IN_NF), x.reshape(NN, DIMS), node_mask.reshape(NN, 1)],
        axis=1).T.astype(f32)                                # (8, NN)
    edge_in_T = jnp.concatenate(
        [edge_attr.reshape(E, 1), edge_mask.reshape(E, 1)], axis=1).T.astype(f32)   # (2, E)

    rc, R = _selection_constants()
    wsq, wvec, outp = _pack_params(params)

    args = (node_in_T, edge_in_T, rc, R, wsq, wvec, outp)

    def full_spec(shape):
        nd_ = len(shape)
        return pl.BlockSpec(shape, lambda i, _nd=nd_: (0,) * _nd)

    out = pl.pallas_call(
        egnn_kernel,
        out_shape=jax.ShapeDtypeStruct((2 * OUT_PAD, E), f32),
        grid=(1,),   # whole problem (<~100 KiB) resident in VMEM; single pipeline step.
                     # TODO(synk): on v7x a grid=(BS,) "parallel" split would use both TCs.
        in_specs=[full_spec(a.shape) for a in args],
        out_specs=full_spec((2 * OUT_PAD, E)),
        compiler_params=pltpu.CompilerParams(dimension_semantics=("arbitrary",)),
    )(*args)

    # wrapper-side un-transpose / slicing of the single lane-dense output slab
    h_final = out[0:OUT_NF, 0:NN].T.reshape(bs, n, OUT_NF)
    e_final = out[OUT_PAD:OUT_PAD + OUT_E_NF, :].T.reshape(bs, n * n, OUT_E_NF)
    return h_final, e_final


# ---------------- pure-JAX reference (same math, f32) for verification ----------------
def _ref_single(x, h, ea, nm, em, p):
    x = x * nm
    h = h * nm
    ea = ea * em
    h = h @ p["Wemb"] + p["bemb"]
    n = x.shape[0]
    x_row = jnp.repeat(x, n, axis=0)
    x_col = jnp.tile(x, (n, 1))
    d = x_row - x_col
    radial = jnp.sum(d * d, axis=-1, keepdims=True)
    ef = jnp.zeros((n * n, HID), jnp.float32)
    for l in range(NL):
        h_row = jnp.repeat(h, n, axis=0)
        h_col = jnp.tile(h, (n, 1))
        e_in = jnp.concatenate([h_row, h_col, radial, ea], axis=-1)
        m = jax.nn.silu(e_in @ p["We1"][l] + p["be1"][l])
        m = jax.nn.silu(m @ p["We2"][l] + p["be2"][l])
        m = m * em
        agg = jnp.sum(m.reshape(n, n, HID), axis=1)
        out = jax.nn.silu(jnp.concatenate([h, agg], axis=-1) @ p["Wn1"][l] + p["bn1"][l])
        out = out @ p["Wn2"][l] + p["bn2"][l]
        h = (h + out) * nm
        ef = m
    h_fin = (h @ p["Wout"] + p["bout"]) * nm
    e_fin = (ef @ p["Weout"] + p["beout"]) * em
    return h_fin, e_fin


def _init_linear(key, fan_in, fan_out, stacked=None):
    k1, k2 = jax.random.split(key)
    bound = 1.0 / np.sqrt(fan_in)
    wshape = (fan_in, fan_out) if stacked is None else (stacked, fan_in, fan_out)
    bshape = (1, fan_out) if stacked is None else (stacked, 1, fan_out)
    W = jax.random.uniform(k1, wshape, jnp.float32, -bound, bound)
    b = jax.random.uniform(k2, bshape, jnp.float32, -bound, bound)
    return W, b


def make_params(key):
    keys = jax.random.split(key, 7)
    p = {}
    p["Wemb"], p["bemb"] = _init_linear(keys[0], IN_NF, HID)
    p["We1"], p["be1"] = _init_linear(keys[1], E_IN, HID, stacked=NL)
    p["We2"], p["be2"] = _init_linear(keys[2], HID, HID, stacked=NL)
    p["Wn1"], p["bn1"] = _init_linear(keys[3], 2 * HID, HID, stacked=NL)
    p["Wn2"], p["bn2"] = _init_linear(keys[4], HID, HID, stacked=NL)
    p["Wout"], p["bout"] = _init_linear(keys[5], HID, OUT_NF)
    p["Weout"], p["beout"] = _init_linear(keys[6], HID, OUT_E_NF)
    return p


if __name__ == "__main__":
    key = jax.random.PRNGKey(0)
    k_x, k_h, k_e, k_p = jax.random.split(key, 4)

    x = jax.random.normal(k_x, (BS, N, DIMS), jnp.float32)
    h = jax.random.normal(k_h, (BS, N, IN_NF), jnp.float32)
    edge_attr = jax.random.normal(k_e, (BS, N * N, 1), jnp.float32)

    # masks: first graph fully present, second graph with 6/8 nodes
    lens = jnp.array([N, 6])
    node_mask = (jnp.arange(N)[None, :] < lens[:, None]).astype(jnp.float32)[..., None]  # (BS,N,1)
    nm2d = node_mask[..., 0]
    eye = jnp.eye(N, dtype=jnp.float32)
    edge_mask = (nm2d[:, :, None] * nm2d[:, None, :] * (1.0 - eye)).reshape(BS, N * N, 1)

    params = make_params(k_p)

    h_final, e_final = jax.jit(egnn_output_he)(x, h, edge_attr, node_mask, edge_mask, params)
    jax.block_until_ready((h_final, e_final))

    h_ref, e_ref = jax.vmap(_ref_single, in_axes=(0, 0, 0, 0, 0, None))(
        x, h, edge_attr, node_mask, edge_mask, params)

    # 2e-2 tolerance: the kernel runs its layer-loop matmuls on bf16 MXU operands
    # (f32 accumulation) and uses the EUP approximate reciprocal inside SiLU.
    np.testing.assert_allclose(np.asarray(h_final), np.asarray(h_ref), rtol=2e-2, atol=2e-2)
    np.testing.assert_allclose(np.asarray(e_final), np.asarray(e_ref), rtol=2e-2, atol=2e-2)

    assert h_final.shape == (BS, N, OUT_NF)
    assert e_final.shape == (BS, N * N, OUT_E_NF)
    print("KERNEL_OK")
</pallas_src>

<mosaic_0001>
module attributes {stable_mosaic.version = 11 : i64} {
  func.func @egnn_kernel(%arg0: i32, %arg1: memref<8x16xf32, #tpu.memory_space<vmem>>, %arg2: memref<2x128xf32, #tpu.memory_space<vmem>>, %arg3: memref<32x128xbf16, #tpu.memory_space<vmem>>, %arg4: memref<128x16xbf16, #tpu.memory_space<vmem>>, %arg5: memref<4x160x64xbf16, #tpu.memory_space<vmem>>, %arg6: memref<5x32x8xf32, #tpu.memory_space<vmem>>, %arg7: memref<2x8x33xf32, #tpu.memory_space<vmem>>, %arg8: memref<16x128xf32, #tpu.memory_space<vmem>>) attributes {dimension_semantics = [#tpu.dimension_semantics<arbitrary>], iteration_bounds = array<i64: 1>, scalar_prefetch = 0 : i64, scratch_operands = 0 : i64, tpu.core_type = #tpu.core_type<tc>, window_params = [{pipeline_mode = #tpu.pipeline_mode<synchronous>, transform_indices = @transform_0, window_bounds = array<i64: 8, 16>}, {pipeline_mode = #tpu.pipeline_mode<synchronous>, transform_indices = @transform_1, window_bounds = array<i64: 2, 128>}, {pipeline_mode = #tpu.pipeline_mode<synchronous>, transform_indices = @transform_2, window_bounds = array<i64: 32, 128>}, {pipeline_mode = #tpu.pipeline_mode<synchronous>, transform_indices = @transform_3, window_bounds = array<i64: 128, 16>}, {pipeline_mode = #tpu.pipeline_mode<synchronous>, transform_indices = @transform_4, window_bounds = array<i64: 4, 160, 64>}, {pipeline_mode = #tpu.pipeline_mode<synchronous>, transform_indices = @transform_5, window_bounds = array<i64: 5, 32, 8>}, {pipeline_mode = #tpu.pipeline_mode<synchronous>, transform_indices = @transform_6, window_bounds = array<i64: 2, 8, 33>}, {pipeline_mode = #tpu.pipeline_mode<synchronous>, transform_indices = @transform_7, window_bounds = array<i64: 16, 128>}]} {
    %c0 = arith.constant 0 : index
    %c0_0 = arith.constant 0 : index
    %0 = vector.load %arg1[%c0, %c0_0] : memref<8x16xf32, #tpu.memory_space<vmem>>, vector<8x16xf32>
    %1 = vector.extract_strided_slice %0 {offsets = [7, 0], sizes = [1, 16], strides = [1, 1]} : vector<8x16xf32> to vector<1x16xf32>
    %2 = vector.extract_strided_slice %0 {offsets = [0, 0], sizes = [4, 16], strides = [1, 1]} : vector<8x16xf32> to vector<4x16xf32>
    %3 = vector.broadcast %1 : vector<1x16xf32> to vector<4x16xf32>
    %4 = arith.mulf %2, %3 : vector<4x16xf32>
    %5 = vector.extract_strided_slice %0 {offsets = [4, 0], sizes = [3, 16], strides = [1, 1]} : vector<8x16xf32> to vector<3x16xf32>
    %6 = vector.broadcast %1 : vector<1x16xf32> to vector<3x16xf32>
    %7 = arith.mulf %5, %6 : vector<3x16xf32>
    %c0_1 = arith.constant 0 : index
    %c0_2 = arith.constant 0 : index
    %8 = vector.load %arg2[%c0_1, %c0_2] : memref<2x128xf32, #tpu.memory_space<vmem>>, vector<2x128xf32>
    %9 = vector.extract_strided_slice %8 {offsets = [1, 0], sizes = [1, 128], strides = [1, 1]} : vector<2x128xf32> to vector<1x128xf32>
    %10 = vector.extract_strided_slice %8 {offsets = [0, 0], sizes = [1, 128], strides = [1, 1]} : vector<2x128xf32> to vector<1x128xf32>
    %11 = arith.mulf %10, %9 : vector<1x128xf32>
    %c0_3 = arith.constant 0 : index
    %c0_4 = arith.constant 0 : index
    %12 = vector.load %arg3[%c0_3, %c0_4] : memref<32x128xbf16, #tpu.memory_space<vmem>>, vector<32x128xbf16>
    %c0_5 = arith.constant 0 : index
    %c0_6 = arith.constant 0 : index
    %13 = vector.load %arg4[%c0_5, %c0_6] : memref<128x16xbf16, #tpu.memory_space<vmem>>, vector<128x16xbf16>
    %c4 = arith.constant 4 : index
    %c0_7 = arith.constant 0 : index
    %c0_8 = arith.constant 0 : index
    %14 = vector.load %arg6[%c4, %c0_7, %c0_8] : memref<5x32x8xf32, #tpu.memory_space<vmem>>, vector<1x32x8xf32>
    %15 = vector.shape_cast %14 : vector<1x32x8xf32> to vector<32x8xf32>
    %16 = vector.extract_strided_slice %15 {offsets = [0, 0], sizes = [32, 4], strides = [1, 1]} : vector<32x8xf32> to vector<32x4xf32>
    %cst = arith.constant dense<0.000000e+00> : vector<32x16xf32>
    %17 = tpu.matmul %16, %4, %cst {dimension_numbers = #tpu.dot_dimension_numbers<[1], [0], [0], [1], [0, 0, 1, 1], [], []>} : vector<32x4xf32>, vector<4x16xf32>, vector<32x16xf32> -> vector<32x16xf32>
    %18 = vector.extract_strided_slice %15 {offsets = [0, 4], sizes = [32, 1], strides = [1, 1]} : vector<32x8xf32> to vector<32x1xf32>
    %19 = vector.broadcast %18 : vector<32x1xf32> to vector<32x16xf32>
    %20 = arith.addf %17, %19 : vector<32x16xf32>
    %21 = arith.extf %12 : vector<32x128xbf16> to vector<32x128xf32>
    %22 = vector.extract_strided_slice %21 {offsets = [0, 0], sizes = [16, 128], strides = [1, 1]} : vector<32x128xf32> to vector<16x128xf32>
    %23 = vector.extract_strided_slice %21 {offsets = [16, 0], sizes = [16, 128], strides = [1, 1]} : vector<32x128xf32> to vector<16x128xf32>
    %24 = arith.subf %22, %23 : vector<16x128xf32>
    %cst_9 = arith.constant dense<0.000000e+00> : vector<3x128xf32>
    %25 = tpu.matmul %7, %24, %cst_9 {dimension_numbers = #tpu.dot_dimension_numbers<[1], [0], [0], [1], [0, 0, 1, 1], [], []>} : vector<3x16xf32>, vector<16x128xf32>, vector<3x128xf32> -> vector<3x128xf32>
    %26 = vector.extract_strided_slice %25 {offsets = [0, 0], sizes = [1, 128], strides = [1, 1]} : vector<3x128xf32> to vector<1x128xf32>
    %27 = vector.extract_strided_slice %25 {offsets = [0, 0], sizes = [1, 128], strides = [1, 1]} : vector<3x128xf32> to vector<1x128xf32>
    %28 = arith.mulf %26, %27 : vector<1x128xf32>
    %29 = vector.extract_strided_slice %25 {offsets = [1, 0], sizes = [1, 128], strides = [1, 1]} : vector<3x128xf32> to vector<1x128xf32>
    %30 = vector.extract_strided_slice %25 {offsets = [1, 0], sizes = [1, 128], strides = [1, 1]} : vector<3x128xf32> to vector<1x128xf32>
    %31 = arith.mulf %29, %30 : vector<1x128xf32>
    %32 = arith.addf %28, %31 : vector<1x128xf32>
    %33 = vector.extract_strided_slice %25 {offsets = [2, 0], sizes = [1, 128], strides = [1, 1]} : vector<3x128xf32> to vector<1x128xf32>
    %34 = vector.extract_strided_slice %25 {offsets = [2, 0], sizes = [1, 128], strides = [1, 1]} : vector<3x128xf32> to vector<1x128xf32>
    %35 = arith.mulf %33, %34 : vector<1x128xf32>
    %36 = arith.addf %32, %35 : vector<1x128xf32>
    %c0_10 = arith.constant 0 : index
    %c0_11 = arith.constant 0 : index
    %c0_12 = arith.constant 0 : index
    %37 = vector.load %arg5[%c0_10, %c0_11, %c0_12] : memref<4x160x64xbf16, #tpu.memory_space<vmem>>, vector<1x160x64xbf16>
    %38 = vector.shape_cast %37 : vector<1x160x64xbf16> to vector<160x64xbf16>
    %39 = vector.extract_strided_slice %38 {offsets = [0, 0], sizes = [64, 32], strides = [1, 1]} : vector<160x64xbf16> to vector<64x32xbf16>
    %40 = vector.extract_strided_slice %38 {offsets = [64, 0], sizes = [32, 32], strides = [1, 1]} : vector<160x64xbf16> to vector<32x32xbf16>
    %41 = vector.extract_strided_slice %38 {offsets = [96, 0], sizes = [32, 64], strides = [1, 1]} : vector<160x64xbf16> to vector<32x64xbf16>
    %42 = vector.extract_strided_slice %38 {offsets = [128, 0], sizes = [32, 32], strides = [1, 1]} : vector<160x64xbf16> to vector<32x32xbf16>
    %c0_13 = arith.constant 0 : index
    %c0_14 = arith.constant 0 : index
    %c0_15 = arith.constant 0 : index
    %43 = vector.load %arg6[%c0_13, %c0_14, %c0_15] : memref<5x32x8xf32, #tpu.memory_space<vmem>>, vector<1x32x8xf32>
    %44 = vector.shape_cast %43 : vector<1x32x8xf32> to vector<32x8xf32>
    %45 = vector.extract_strided_slice %44 {offsets = [0, 0], sizes = [32, 1], strides = [1, 1]} : vector<32x8xf32> to vector<32x1xf32>
    %46 = vector.extract_strided_slice %44 {offsets = [0, 1], sizes = [32, 1], strides = [1, 1]} : vector<32x8xf32> to vector<32x1xf32>
    %47 = vector.extract_strided_slice %44 {offsets = [0, 2], sizes = [32, 1], strides = [1, 1]} : vector<32x8xf32> to vector<32x1xf32>
    %48 = vector.extract_strided_slice %44 {offsets = [0, 3], sizes = [32, 1], strides = [1, 1]} : vector<32x8xf32> to vector<32x1xf32>
    %49 = vector.extract_strided_slice %44 {offsets = [0, 4], sizes = [32, 1], strides = [1, 1]} : vector<32x8xf32> to vector<32x1xf32>
    %50 = vector.extract_strided_slice %44 {offsets = [0, 5], sizes = [32, 1], strides = [1, 1]} : vector<32x8xf32> to vector<32x1xf32>
    %51 = arith.truncf %20 : vector<32x16xf32> to vector<32x16xbf16>
    %cst_16 = arith.constant dense<0.000000e+00> : vector<64x16xf32>
    %52 = tpu.matmul %39, %51, %cst_16 {dimension_numbers = #tpu.dot_dimension_numbers<[1], [0], [0], [1], [0, 0, 1, 1], [], []>} : vector<64x32xbf16>, vector<32x16xbf16>, vector<64x16xf32> -> vector<64x16xf32>
    %53 = vector.extract_strided_slice %52 {offsets = [0, 0], sizes = [32, 16], strides = [1, 1]} : vector<64x16xf32> to vector<32x16xf32>
    %54 = vector.extract_strided_slice %52 {offsets = [32, 0], sizes = [32, 16], strides = [1, 1]} : vector<64x16xf32> to vector<32x16xf32>
    %55 = tpu.concatenate %53, %54 in 1 : vector<32x16xf32>, vector<32x16xf32> -> vector<32x32xf32>
    %56 = arith.truncf %55 : vector<32x32xf32> to vector<32x32xbf16>
    %cst_17 = arith.constant dense<0.000000e+00> : vector<32x128xf32>
    %57 = tpu.matmul %56, %12, %cst_17 {dimension_numbers = #tpu.dot_dimension_numbers<[1], [0], [0], [1], [0, 0, 1, 1], [], []>} : vector<32x32xbf16>, vector<32x128xbf16>, vector<32x128xf32> -> vector<32x128xf32>
    %58 = vector.broadcast %49 : vector<32x1xf32> to vector<32x128xf32>
    %59 = vector.broadcast %36 : vector<1x128xf32> to vector<32x128xf32>
    %60 = arith.mulf %58, %59 : vector<32x128xf32>
    %61 = arith.addf %57, %60 : vector<32x128xf32>
    %62 = vector.broadcast %50 : vector<32x1xf32> to vector<32x128xf32>
    %63 = vector.broadcast %11 : vector<1x128xf32> to vector<32x128xf32>
    %64 = arith.mulf %62, %63 : vector<32x128xf32>
    %65 = arith.addf %61, %64 : vector<32x128xf32>
    %66 = vector.broadcast %45 : vector<32x1xf32> to vector<32x128xf32>
    %67 = arith.addf %65, %66 : vector<32x128xf32>
    %cst_18 = arith.constant 0.000000e+00 : f32
    %68 = vector.broadcast %cst_18 : f32 to vector<32x128xf32>
    %69 = arith.subf %68, %67 : vector<32x128xf32>
    %70 = math.exp %69 : vector<32x128xf32>
    %cst_19 = arith.constant 1.000000e+00 : f32
    %71 = vector.broadcast %cst_19 : f32 to vector<32x128xf32>
    %72 = arith.addf %71, %70 : vector<32x128xf32>
    %73 = tpu.reciprocal %72 {approx = true} : vector<32x128xf32> -> vector<32x128xf32>
    %74 = arith.mulf %67, %73 : vector<32x128xf32>
    %75 = arith.truncf %74 : vector<32x128xf32> to vector<32x128xbf16>
    %cst_20 = arith.constant dense<0.000000e+00> : vector<32x128xf32>
    %76 = tpu.matmul %40, %75, %cst_20 {dimension_numbers = #tpu.dot_dimension_numbers<[1], [0], [0], [1], [0, 0, 1, 1], [], []>} : vector<32x32xbf16>, vector<32x128xbf16>, vector<32x128xf32> -> vector<32x128xf32>
    %77 = vector.broadcast %46 : vector<32x1xf32> to vector<32x128xf32>
    %78 = arith.addf %76, %77 : vector<32x128xf32>
    %cst_21 = arith.constant 0.000000e+00 : f32
    %79 = vector.broadcast %cst_21 : f32 to vector<32x128xf32>
    %80 = arith.subf %79, %78 : vector<32x128xf32>
    %81 = math.exp %80 : vector<32x128xf32>
    %cst_22 = arith.constant 1.000000e+00 : f32
    %82 = vector.broadcast %cst_22 : f32 to vector<32x128xf32>
    %83 = arith.addf %82, %81 : vector<32x128xf32>
    %84 = tpu.reciprocal %83 {approx = true} : vector<32x128xf32> -> vector<32x128xf32>
    %85 = arith.mulf %78, %84 : vector<32x128xf32>
    %86 = vector.broadcast %9 : vector<1x128xf32> to vector<32x128xf32>
    %87 = arith.mulf %85, %86 : vector<32x128xf32>
    %88 = arith.truncf %87 : vector<32x128xf32> to vector<32x128xbf16>
    %cst_23 = arith.constant dense<0.000000e+00> : vector<32x16xf32>
    %89 = tpu.matmul %88, %13, %cst_23 {dimension_numbers = #tpu.dot_dimension_numbers<[1], [0], [0], [1], [0, 0, 1, 1], [], []>} : vector<32x128xbf16>, vector<128x16xbf16>, vector<32x16xf32> -> vector<32x16xf32>
    %90 = tpu.concatenate %20, %89 in 0 : vector<32x16xf32>, vector<32x16xf32> -> vector<64x16xf32>
    %91 = arith.truncf %90 : vector<64x16xf32> to vector<64x16xbf16>
    %cst_24 = arith.constant dense<0.000000e+00> : vector<32x16xf32>
    %92 = tpu.matmul %41, %91, %cst_24 {dimension_numbers = #tpu.dot_dimension_numbers<[1], [0], [0], [1], [0, 0, 1, 1], [], []>} : vector<32x64xbf16>, vector<64x16xbf16>, vector<32x16xf32> -> vector<32x16xf32>
    %93 = vector.broadcast %47 : vector<32x1xf32> to vector<32x16xf32>
    %94 = arith.addf %92, %93 : vector<32x16xf32>
    %cst_25 = arith.constant 0.000000e+00 : f32
    %95 = vector.broadcast %cst_25 : f32 to vector<32x16xf32>
    %96 = arith.subf %95, %94 : vector<32x16xf32>
    %97 = math.exp %96 : vector<32x16xf32>
    %cst_26 = arith.constant 1.000000e+00 : f32
    %98 = vector.broadcast %cst_26 : f32 to vector<32x16xf32>
    %99 = arith.addf %98, %97 : vector<32x16xf32>
    %100 = tpu.reciprocal %99 {approx = true} : vector<32x16xf32> -> vector<32x16xf32>
    %101 = arith.mulf %94, %100 : vector<32x16xf32>
    %102 = arith.truncf %101 : vector<32x16xf32> to vector<32x16xbf16>
    %cst_27 = arith.constant dense<0.000000e+00> : vector<32x16xf32>
    %103 = tpu.matmul %42, %102, %cst_27 {dimension_numbers = #tpu.dot_dimension_numbers<[1], [0], [0], [1], [0, 0, 1, 1], [], []>} : vector<32x32xbf16>, vector<32x16xbf16>, vector<32x16xf32> -> vector<32x16xf32>
    %104 = vector.broadcast %48 : vector<32x1xf32> to vector<32x16xf32>
    %105 = arith.addf %103, %104 : vector<32x16xf32>
    %106 = arith.addf %20, %105 : vector<32x16xf32>
    %107 = vector.broadcast %1 : vector<1x16xf32> to vector<32x16xf32>
    %108 = arith.mulf %106, %107 : vector<32x16xf32>
    %c1 = arith.constant 1 : index
    %c0_28 = arith.constant 0 : index
    %c0_29 = arith.constant 0 : index
    %109 = vector.load %arg5[%c1, %c0_28, %c0_29] : memref<4x160x64xbf16, #tpu.memory_space<vmem>>, vector<1x160x64xbf16>
    %110 = vector.shape_cast %109 : vector<1x160x64xbf16> to vector<160x64xbf16>
    %111 = vector.extract_strided_slice %110 {offsets = [0, 0], sizes = [64, 32], strides = [1, 1]} : vector<160x64xbf16> to vector<64x32xbf16>
    %112 = vector.extract_strided_slice %110 {offsets = [64, 0], sizes = [32, 32], strides = [1, 1]} : vector<160x64xbf16> to vector<32x32xbf16>
    %113 = vector.extract_strided_slice %110 {offsets = [96, 0], sizes = [32, 64], strides = [1, 1]} : vector<160x64xbf16> to vector<32x64xbf16>
    %114 = vector.extract_strided_slice %110 {offsets = [128, 0], sizes = [32, 32], strides = [1, 1]} : vector<160x64xbf16> to vector<32x32xbf16>
    %c1_30 = arith.constant 1 : index
    %c0_31 = arith.constant 0 : index
    %c0_32 = arith.constant 0 : index
    %115 = vector.load %arg6[%c1_30, %c0_31, %c0_32] : memref<5x32x8xf32, #tpu.memory_space<vmem>>, vector<1x32x8xf32>
    %116 = vector.shape_cast %115 : vector<1x32x8xf32> to vector<32x8xf32>
    %117 = vector.extract_strided_slice %116 {offsets = [0, 0], sizes = [32, 1], strides = [1, 1]} : vector<32x8xf32> to vector<32x1xf32>
    %118 = vector.extract_strided_slice %116 {offsets = [0, 1], sizes = [32, 1], strides = [1, 1]} : vector<32x8xf32> to vector<32x1xf32>
    %119 = vector.extract_strided_slice %116 {offsets = [0, 2], sizes = [32, 1], strides = [1, 1]} : vector<32x8xf32> to vector<32x1xf32>
    %120 = vector.extract_strided_slice %116 {offsets = [0, 3], sizes = [32, 1], strides = [1, 1]} : vector<32x8xf32> to vector<32x1xf32>
    %121 = vector.extract_strided_slice %116 {offsets = [0, 4], sizes = [32, 1], strides = [1, 1]} : vector<32x8xf32> to vector<32x1xf32>
    %122 = vector.extract_strided_slice %116 {offsets = [0, 5], sizes = [32, 1], strides = [1, 1]} : vector<32x8xf32> to vector<32x1xf32>
    %123 = arith.truncf %108 : vector<32x16xf32> to vector<32x16xbf16>
    %cst_33 = arith.constant dense<0.000000e+00> : vector<64x16xf32>
    %124 = tpu.matmul %111, %123, %cst_33 {dimension_numbers = #tpu.dot_dimension_numbers<[1], [0], [0], [1], [0, 0, 1, 1], [], []>} : vector<64x32xbf16>, vector<32x16xbf16>, vector<64x16xf32> -> vector<64x16xf32>
    %125 = vector.extract_strided_slice %124 {offsets = [0, 0], sizes = [32, 16], strides = [1, 1]} : vector<64x16xf32> to vector<32x16xf32>
    %126 = vector.extract_strided_slice %124 {offsets = [32, 0], sizes = [32, 16], strides = [1, 1]} : vector<64x16xf32> to vector<32x16xf32>
    %127 = tpu.concatenate %125, %126 in 1 : vector<32x16xf32>, vector<32x16xf32> -> vector<32x32xf32>
    %128 = arith.truncf %127 : vector<32x32xf32> to vector<32x32xbf16>
    %cst_34 = arith.constant dense<0.000000e+00> : vector<32x128xf32>
    %129 = tpu.matmul %128, %12, %cst_34 {dimension_numbers = #tpu.dot_dimension_numbers<[1], [0], [0], [1], [0, 0, 1, 1], [], []>} : vector<32x32xbf16>, vector<32x128xbf16>, vector<32x128xf32> -> vector<32x128xf32>
    %130 = vector.broadcast %121 : vector<32x1xf32> to vector<32x128xf32>
    %131 = vector.broadcast %36 : vector<1x128xf32> to vector<32x128xf32>
    %132 = arith.mulf %130, %131 : vector<32x128xf32>
    %133 = arith.addf %129, %132 : vector<32x128xf32>
    %134 = vector.broadcast %122 : vector<32x1xf32> to vector<32x128xf32>
    %135 = vector.broadcast %11 : vector<1x128xf32> to vector<32x128xf32>
    %136 = arith.mulf %134, %135 : vector<32x128xf32>
    %137 = arith.addf %133, %136 : vector<32x128xf32>
    %138 = vector.broadcast %117 : vector<32x1xf32> to vector<32x128xf32>
    %139 = arith.addf %137, %138 : vector<32x128xf32>
    %cst_35 = arith.constant 0.000000e+00 : f32
    %140 = vector.broadcast %cst_35 : f32 to vector<32x128xf32>
    %141 = arith.subf %140, %139 : vector<32x128xf32>
    %142 = math.exp %141 : vector<32x128xf32>
    %cst_36 = arith.constant 1.000000e+00 : f32
    %143 = vector.broadcast %cst_36 : f32 to vector<32x128xf32>
    %144 = arith.addf %143, %142 : vector<32x128xf32>
    %145 = tpu.reciprocal %144 {approx = true} : vector<32x128xf32> -> vector<32x128xf32>
    %146 = arith.mulf %139, %145 : vector<32x128xf32>
    %147 = arith.truncf %146 : vector<32x128xf32> to vector<32x128xbf16>
    %cst_37 = arith.constant dense<0.000000e+00> : vector<32x128xf32>
    %148 = tpu.matmul %112, %147, %cst_37 {dimension_numbers = #tpu.dot_dimension_numbers<[1], [0], [0], [1], [0, 0, 1, 1], [], []>} : vector<32x32xbf16>, vector<32x128xbf16>, vector<32x128xf32> -> vector<32x128xf32>
    %149 = vector.broadcast %118 : vector<32x1xf32> to vector<32x128xf32>
    %150 = arith.addf %148, %149 : vector<32x128xf32>
    %cst_38 = arith.constant 0.000000e+00 : f32
    %151 = vector.broadcast %cst_38 : f32 to vector<32x128xf32>
    %152 = arith.subf %151, %150 : vector<32x128xf32>
    %153 = math.exp %152 : vector<32x128xf32>
    %cst_39 = arith.constant 1.000000e+00 : f32
    %154 = vector.broadcast %cst_39 : f32 to vector<32x128xf32>
    %155 = arith.addf %154, %153 : vector<32x128xf32>
    %156 = tpu.reciprocal %155 {approx = true} : vector<32x128xf32> -> vector<32x128xf32>
    %157 = arith.mulf %150, %156 : vector<32x128xf32>
    %158 = vector.broadcast %9 : vector<1x128xf32> to vector<32x128xf32>
    %159 = arith.mulf %157, %158 : vector<32x128xf32>
    %160 = arith.truncf %159 : vector<32x128xf32> to vector<32x128xbf16>
    %cst_40 = arith.constant dense<0.000000e+00> : vector<32x16xf32>
    %161 = tpu.matmul %160, %13, %cst_40 {dimension_numbers = #tpu.dot_dimension_numbers<[1], [0], [0], [1], [0, 0, 1, 1], [], []>} : vector<32x128xbf16>, vector<128x16xbf16>, vector<32x16xf32> -> vector<32x16xf32>
    %162 = tpu.concatenate %108, %161 in 0 : vector<32x16xf32>, vector<32x16xf32> -> vector<64x16xf32>
    %163 = arith.truncf %162 : vector<64x16xf32> to vector<64x16xbf16>
    %cst_41 = arith.constant dense<0.000000e+00> : vector<32x16xf32>
    %164 = tpu.matmul %113, %163, %cst_41 {dimension_numbers = #tpu.dot_dimension_numbers<[1], [0], [0], [1], [0, 0, 1, 1], [], []>} : vector<32x64xbf16>, vector<64x16xbf16>, vector<32x16xf32> -> vector<32x16xf32>
    %165 = vector.broadcast %119 : vector<32x1xf32> to vector<32x16xf32>
    %166 = arith.addf %164, %165 : vector<32x16xf32>
    %cst_42 = arith.constant 0.000000e+00 : f32
    %167 = vector.broadcast %cst_42 : f32 to vector<32x16xf32>
    %168 = arith.subf %167, %166 : vector<32x16xf32>
    %169 = math.exp %168 : vector<32x16xf32>
    %cst_43 = arith.constant 1.000000e+00 : f32
    %170 = vector.broadcast %cst_43 : f32 to vector<32x16xf32>
    %171 = arith.addf %170, %169 : vector<32x16xf32>
    %172 = tpu.reciprocal %171 {approx = true} : vector<32x16xf32> -> vector<32x16xf32>
    %173 = arith.mulf %166, %172 : vector<32x16xf32>
    %174 = arith.truncf %173 : vector<32x16xf32> to vector<32x16xbf16>
    %cst_44 = arith.constant dense<0.000000e+00> : vector<32x16xf32>
    %175 = tpu.matmul %114, %174, %cst_44 {dimension_numbers = #tpu.dot_dimension_numbers<[1], [0], [0], [1], [0, 0, 1, 1], [], []>} : vector<32x32xbf16>, vector<32x16xbf16>, vector<32x16xf32> -> vector<32x16xf32>
    %176 = vector.broadcast %120 : vector<32x1xf32> to vector<32x16xf32>
    %177 = arith.addf %175, %176 : vector<32x16xf32>
    %178 = arith.addf %108, %177 : vector<32x16xf32>
    %179 = vector.broadcast %1 : vector<1x16xf32> to vector<32x16xf32>
    %180 = arith.mulf %178, %179 : vector<32x16xf32>
    %c2 = arith.constant 2 : index
    %c0_45 = arith.constant 0 : index
    %c0_46 = arith.constant 0 : index
    %181 = vector.load %arg5[%c2, %c0_45, %c0_46] : memref<4x160x64xbf16, #tpu.memory_space<vmem>>, vector<1x160x64xbf16>
    %182 = vector.shape_cast %181 : vector<1x160x64xbf16> to vector<160x64xbf16>
    %183 = vector.extract_strided_slice %182 {offsets = [0, 0], sizes = [64, 32], strides = [1, 1]} : vector<160x64xbf16> to vector<64x32xbf16>
    %184 = vector.extract_strided_slice %182 {offsets = [64, 0], sizes = [32, 32], strides = [1, 1]} : vector<160x64xbf16> to vector<32x32xbf16>
    %185 = vector.extract_strided_slice %182 {offsets = [96, 0], sizes = [32, 64], strides = [1, 1]} : vector<160x64xbf16> to vector<32x64xbf16>
    %186 = vector.extract_strided_slice %182 {offsets = [128, 0], sizes = [32, 32], strides = [1, 1]} : vector<160x64xbf16> to vector<32x32xbf16>
    %c2_47 = arith.constant 2 : index
    %c0_48 = arith.constant 0 : index
    %c0_49 = arith.constant 0 : index
    %187 = vector.load %arg6[%c2_47, %c0_48, %c0_49] : memref<5x32x8xf32, #tpu.memory_space<vmem>>, vector<1x32x8xf32>
    %188 = vector.shape_cast %187 : vector<1x32x8xf32> to vector<32x8xf32>
    %189 = vector.extract_strided_slice %188 {offsets = [0, 0], sizes = [32, 1], strides = [1, 1]} : vector<32x8xf32> to vector<32x1xf32>
    %190 = vector.extract_strided_slice %188 {offsets = [0, 1], sizes = [32, 1], strides = [1, 1]} : vector<32x8xf32> to vector<32x1xf32>
    %191 = vector.extract_strided_slice %188 {offsets = [0, 2], sizes = [32, 1], strides = [1, 1]} : vector<32x8xf32> to vector<32x1xf32>
    %192 = vector.extract_strided_slice %188 {offsets = [0, 3], sizes = [32, 1], strides = [1, 1]} : vector<32x8xf32> to vector<32x1xf32>
    %193 = vector.extract_strided_slice %188 {offsets = [0, 4], sizes = [32, 1], strides = [1, 1]} : vector<32x8xf32> to vector<32x1xf32>
    %194 = vector.extract_strided_slice %188 {offsets = [0, 5], sizes = [32, 1], strides = [1, 1]} : vector<32x8xf32> to vector<32x1xf32>
    %195 = arith.truncf %180 : vector<32x16xf32> to vector<32x16xbf16>
    %cst_50 = arith.constant dense<0.000000e+00> : vector<64x16xf32>
    %196 = tpu.matmul %183, %195, %cst_50 {dimension_numbers = #tpu.dot_dimension_numbers<[1], [0], [0], [1], [0, 0, 1, 1], [], []>} : vector<64x32xbf16>, vector<32x16xbf16>, vector<64x16xf32> -> vector<64x16xf32>
    %197 = vector.extract_strided_slice %196 {offsets = [0, 0], sizes = [32, 16], strides = [1, 1]} : vector<64x16xf32> to vector<32x16xf32>
    %198 = vector.extract_strided_slice %196 {offsets = [32, 0], sizes = [32, 16], strides = [1, 1]} : vector<64x16xf32> to vector<32x16xf32>
    %199 = tpu.concatenate %197, %198 in 1 : vector<32x16xf32>, vector<32x16xf32> -> vector<32x32xf32>
    %200 = arith.truncf %199 : vector<32x32xf32> to vector<32x32xbf16>
    %cst_51 = arith.constant dense<0.000000e+00> : vector<32x128xf32>
    %201 = tpu.matmul %200, %12, %cst_51 {dimension_numbers = #tpu.dot_dimension_numbers<[1], [0], [0], [1], [0, 0, 1, 1], [], []>} : vector<32x32xbf16>, vector<32x128xbf16>, vector<32x128xf32> -> vector<32x128xf32>
    %202 = vector.broadcast %193 : vector<32x1xf32> to vector<32x128xf32>
    %203 = vector.broadcast %36 : vector<1x128xf32> to vector<32x128xf32>
    %204 = arith.mulf %202, %203 : vector<32x128xf32>
    %205 = arith.addf %201, %204 : vector<32x128xf32>
    %206 = vector.broadcast %194 : vector<32x1xf32> to vector<32x128xf32>
    %207 = vector.broadcast %11 : vector<1x128xf32> to vector<32x128xf32>
    %208 = arith.mulf %206, %207 : vector<32x128xf32>
    %209 = arith.addf %205, %208 : vector<32x128xf32>
    %210 = vector.broadcast %189 : vector<32x1xf32> to vector<32x128xf32>
    %211 = arith.addf %209, %210 : vector<32x128xf32>
    %cst_52 = arith.constant 0.000000e+00 : f32
    %212 = vector.broadcast %cst_52 : f32 to vector<32x128xf32>
    %213 = arith.subf %212, %211 : vector<32x128xf32>
    %214 = math.exp %213 : vector<32x128xf32>
    %cst_53 = arith.constant 1.000000e+00 : f32
    %215 = vector.broadcast %cst_53 : f32 to vector<32x128xf32>
    %216 = arith.addf %215, %214 : vector<32x128xf32>
    %217 = tpu.reciprocal %216 {approx = true} : vector<32x128xf32> -> vector<32x128xf32>
    %218 = arith.mulf %211, %217 : vector<32x128xf32>
    %219 = arith.truncf %218 : vector<32x128xf32> to vector<32x128xbf16>
    %cst_54 = arith.constant dense<0.000000e+00> : vector<32x128xf32>
    %220 = tpu.matmul %184, %219, %cst_54 {dimension_numbers = #tpu.dot_dimension_numbers<[1], [0], [0], [1], [0, 0, 1, 1], [], []>} : vector<32x32xbf16>, vector<32x128xbf16>, vector<32x128xf32> -> vector<32x128xf32>
    %221 = vector.broadcast %190 : vector<32x1xf32> to vector<32x128xf32>
    %222 = arith.addf %220, %221 : vector<32x128xf32>
    %cst_55 = arith.constant 0.000000e+00 : f32
    %223 = vector.broadcast %cst_55 : f32 to vector<32x128xf32>
    %224 = arith.subf %223, %222 : vector<32x128xf32>
    %225 = math.exp %224 : vector<32x128xf32>
    %cst_56 = arith.constant 1.000000e+00 : f32
    %226 = vector.broadcast %cst_56 : f32 to vector<32x128xf32>
    %227 = arith.addf %226, %225 : vector<32x128xf32>
    %228 = tpu.reciprocal %227 {approx = true} : vector<32x128xf32> -> vector<32x128xf32>
    %229 = arith.mulf %222, %228 : vector<32x128xf32>
    %230 = vector.broadcast %9 : vector<1x128xf32> to vector<32x128xf32>
    %231 = arith.mulf %229, %230 : vector<32x128xf32>
    %232 = arith.truncf %231 : vector<32x128xf32> to vector<32x128xbf16>
    %cst_57 = arith.constant dense<0.000000e+00> : vector<32x16xf32>
    %233 = tpu.matmul %232, %13, %cst_57 {dimension_numbers = #tpu.dot_dimension_numbers<[1], [0], [0], [1], [0, 0, 1, 1], [], []>} : vector<32x128xbf16>, vector<128x16xbf16>, vector<32x16xf32> -> vector<32x16xf32>
    %234 = tpu.concatenate %180, %233 in 0 : vector<32x16xf32>, vector<32x16xf32> -> vector<64x16xf32>
    %235 = arith.truncf %234 : vector<64x16xf32> to vector<64x16xbf16>
    %cst_58 = arith.constant dense<0.000000e+00> : vector<32x16xf32>
    %236 = tpu.matmul %185, %235, %cst_58 {dimension_numbers = #tpu.dot_dimension_numbers<[1], [0], [0], [1], [0, 0, 1, 1], [], []>} : vector<32x64xbf16>, vector<64x16xbf16>, vector<32x16xf32> -> vector<32x16xf32>
    %237 = vector.broadcast %191 : vector<32x1xf32> to vector<32x16xf32>
    %238 = arith.addf %236, %237 : vector<32x16xf32>
    %cst_59 = arith.constant 0.000000e+00 : f32
    %239 = vector.broadcast %cst_59 : f32 to vector<32x16xf32>
    %240 = arith.subf %239, %238 : vector<32x16xf32>
    %241 = math.exp %240 : vector<32x16xf32>
    %cst_60 = arith.constant 1.000000e+00 : f32
    %242 = vector.broadcast %cst_60 : f32 to vector<32x16xf32>
    %243 = arith.addf %242, %241 : vector<32x16xf32>
    %244 = tpu.reciprocal %243 {approx = true} : vector<32x16xf32> -> vector<32x16xf32>
    %245 = arith.mulf %238, %244 : vector<32x16xf32>
    %246 = arith.truncf %245 : vector<32x16xf32> to vector<32x16xbf16>
    %cst_61 = arith.constant dense<0.000000e+00> : vector<32x16xf32>
    %247 = tpu.matmul %186, %246, %cst_61 {dimension_numbers = #tpu.dot_dimension_numbers<[1], [0], [0], [1], [0, 0, 1, 1], [], []>} : vector<32x32xbf16>, vector<32x16xbf16>, vector<32x16xf32> -> vector<32x16xf32>
    %248 = vector.broadcast %192 : vector<32x1xf32> to vector<32x16xf32>
    %249 = arith.addf %247, %248 : vector<32x16xf32>
    %250 = arith.addf %180, %249 : vector<32x16xf32>
    %251 = vector.broadcast %1 : vector<1x16xf32> to vector<32x16xf32>
    %252 = arith.mulf %250, %251 : vector<32x16xf32>
    %c3 = arith.constant 3 : index
    %c0_62 = arith.constant 0 : index
    %c0_63 = arith.constant 0 : index
    %253 = vector.load %arg5[%c3, %c0_62, %c0_63] : memref<4x160x64xbf16, #tpu.memory_space<vmem>>, vector<1x160x64xbf16>
    %254 = vector.shape_cast %253 : vector<1x160x64xbf16> to vector<160x64xbf16>
    %255 = vector.extract_strided_slice %254 {offsets = [0, 0], sizes = [64, 32], strides = [1, 1]} : vector<160x64xbf16> to vector<64x32xbf16>
    %256 = vector.extract_strided_slice %254 {offsets = [64, 0], sizes = [32, 32], strides = [1, 1]} : vector<160x64xbf16> to vector<32x32xbf16>
    %257 = vector.extract_strided_slice %254 {offsets = [96, 0], sizes = [32, 64], strides = [1, 1]} : vector<160x64xbf16> to vector<32x64xbf16>
    %258 = vector.extract_strided_slice %254 {offsets = [128, 0], sizes = [32, 32], strides = [1, 1]} : vector<160x64xbf16> to vector<32x32xbf16>
    %c3_64 = arith.constant 3 : index
    %c0_65 = arith.constant 0 : index
    %c0_66 = arith.constant 0 : index
    %259 = vector.load %arg6[%c3_64, %c0_65, %c0_66] : memref<5x32x8xf32, #tpu.memory_space<vmem>>, vector<1x32x8xf32>
    %260 = vector.shape_cast %259 : vector<1x32x8xf32> to vector<32x8xf32>
    %261 = vector.extract_strided_slice %260 {offsets = [0, 0], sizes = [32, 1], strides = [1, 1]} : vector<32x8xf32> to vector<32x1xf32>
    %262 = vector.extract_strided_slice %260 {offsets = [0, 1], sizes = [32, 1], strides = [1, 1]} : vector<32x8xf32> to vector<32x1xf32>
    %263 = vector.extract_strided_slice %260 {offsets = [0, 2], sizes = [32, 1], strides = [1, 1]} : vector<32x8xf32> to vector<32x1xf32>
    %264 = vector.extract_strided_slice %260 {offsets = [0, 3], sizes = [32, 1], strides = [1, 1]} : vector<32x8xf32> to vector<32x1xf32>
    %265 = vector.extract_strided_slice %260 {offsets = [0, 4], sizes = [32, 1], strides = [1, 1]} : vector<32x8xf32> to vector<32x1xf32>
    %266 = vector.extract_strided_slice %260 {offsets = [0, 5], sizes = [32, 1], strides = [1, 1]} : vector<32x8xf32> to vector<32x1xf32>
    %267 = arith.truncf %252 : vector<32x16xf32> to vector<32x16xbf16>
    %cst_67 = arith.constant dense<0.000000e+00> : vector<64x16xf32>
    %268 = tpu.matmul %255, %267, %cst_67 {dimension_numbers = #tpu.dot_dimension_numbers<[1], [0], [0], [1], [0, 0, 1, 1], [], []>} : vector<64x32xbf16>, vector<32x16xbf16>, vector<64x16xf32> -> vector<64x16xf32>
    %269 = vector.extract_strided_slice %268 {offsets = [0, 0], sizes = [32, 16], strides = [1, 1]} : vector<64x16xf32> to vector<32x16xf32>
    %270 = vector.extract_strided_slice %268 {offsets = [32, 0], sizes = [32, 16], strides = [1, 1]} : vector<64x16xf32> to vector<32x16xf32>
    %271 = tpu.concatenate %269, %270 in 1 : vector<32x16xf32>, vector<32x16xf32> -> vector<32x32xf32>
    %272 = arith.truncf %271 : vector<32x32xf32> to vector<32x32xbf16>
    %cst_68 = arith.constant dense<0.000000e+00> : vector<32x128xf32>
    %273 = tpu.matmul %272, %12, %cst_68 {dimension_numbers = #tpu.dot_dimension_numbers<[1], [0], [0], [1], [0, 0, 1, 1], [], []>} : vector<32x32xbf16>, vector<32x128xbf16>, vector<32x128xf32> -> vector<32x128xf32>
    %274 = vector.broadcast %265 : vector<32x1xf32> to vector<32x128xf32>
    %275 = vector.broadcast %36 : vector<1x128xf32> to vector<32x128xf32>
    %276 = arith.mulf %274, %275 : vector<32x128xf32>
    %277 = arith.addf %273, %276 : vector<32x128xf32>
    %278 = vector.broadcast %266 : vector<32x1xf32> to vector<32x128xf32>
    %279 = vector.broadcast %11 : vector<1x128xf32> to vector<32x128xf32>
    %280 = arith.mulf %278, %279 : vector<32x128xf32>
    %281 = arith.addf %277, %280 : vector<32x128xf32>
    %282 = vector.broadcast %261 : vector<32x1xf32> to vector<32x128xf32>
    %283 = arith.addf %281, %282 : vector<32x128xf32>
    %cst_69 = arith.constant 0.000000e+00 : f32
    %284 = vector.broadcast %cst_69 : f32 to vector<32x128xf32>
    %285 = arith.subf %284, %283 : vector<32x128xf32>
    %286 = math.exp %285 : vector<32x128xf32>
    %cst_70 = arith.constant 1.000000e+00 : f32
    %287 = vector.broadcast %cst_70 : f32 to vector<32x128xf32>
    %288 = arith.addf %287, %286 : vector<32x128xf32>
    %289 = tpu.reciprocal %288 {approx = true} : vector<32x128xf32> -> vector<32x128xf32>
    %290 = arith.mulf %283, %289 : vector<32x128xf32>
    %291 = arith.truncf %290 : vector<32x128xf32> to vector<32x128xbf16>
    %cst_71 = arith.constant dense<0.000000e+00> : vector<32x128xf32>
    %292 = tpu.matmul %256, %291, %cst_71 {dimension_numbers = #tpu.dot_dimension_numbers<[1], [0], [0], [1], [0, 0, 1, 1], [], []>} : vector<32x32xbf16>, vector<32x128xbf16>, vector<32x128xf32> -> vector<32x128xf32>
    %293 = vector.broadcast %262 : vector<32x1xf32> to vector<32x128xf32>
    %294 = arith.addf %292, %293 : vector<32x128xf32>
    %cst_72 = arith.constant 0.000000e+00 : f32
    %295 = vector.broadcast %cst_72 : f32 to vector<32x128xf32>
    %296 = arith.subf %295, %294 : vector<32x128xf32>
    %297 = math.exp %296 : vector<32x128xf32>
    %cst_73 = arith.constant 1.000000e+00 : f32
    %298 = vector.broadcast %cst_73 : f32 to vector<32x128xf32>
    %299 = arith.addf %298, %297 : vector<32x128xf32>
    %300 = tpu.reciprocal %299 {approx = true} : vector<32x128xf32> -> vector<32x128xf32>
    %301 = arith.mulf %294, %300 : vector<32x128xf32>
    %302 = vector.broadcast %9 : vector<1x128xf32> to vector<32x128xf32>
    %303 = arith.mulf %301, %302 : vector<32x128xf32>
    %304 = arith.truncf %303 : vector<32x128xf32> to vector<32x128xbf16>
    %cst_74 = arith.constant dense<0.000000e+00> : vector<32x16xf32>
    %305 = tpu.matmul %304, %13, %cst_74 {dimension_numbers = #tpu.dot_dimension_numbers<[1], [0], [0], [1], [0, 0, 1, 1], [], []>} : vector<32x128xbf16>, vector<128x16xbf16>, vector<32x16xf32> -> vector<32x16xf32>
    %306 = tpu.concatenate %252, %305 in 0 : vector<32x16xf32>, vector<32x16xf32> -> vector<64x16xf32>
    %307 = arith.truncf %306 : vector<64x16xf32> to vector<64x16xbf16>
    %cst_75 = arith.constant dense<0.000000e+00> : vector<32x16xf32>
    %308 = tpu.matmul %257, %307, %cst_75 {dimension_numbers = #tpu.dot_dimension_numbers<[1], [0], [0], [1], [0, 0, 1, 1], [], []>} : vector<32x64xbf16>, vector<64x16xbf16>, vector<32x16xf32> -> vector<32x16xf32>
    %309 = vector.broadcast %263 : vector<32x1xf32> to vector<32x16xf32>
    %310 = arith.addf %308, %309 : vector<32x16xf32>
    %cst_76 = arith.constant 0.000000e+00 : f32
    %311 = vector.broadcast %cst_76 : f32 to vector<32x16xf32>
    %312 = arith.subf %311, %310 : vector<32x16xf32>
    %313 = math.exp %312 : vector<32x16xf32>
    %cst_77 = arith.constant 1.000000e+00 : f32
    %314 = vector.broadcast %cst_77 : f32 to vector<32x16xf32>
    %315 = arith.addf %314, %313 : vector<32x16xf32>
    %316 = tpu.reciprocal %315 {approx = true} : vector<32x16xf32> -> vector<32x16xf32>
    %317 = arith.mulf %310, %316 : vector<32x16xf32>
    %318 = arith.truncf %317 : vector<32x16xf32> to vector<32x16xbf16>
    %cst_78 = arith.constant dense<0.000000e+00> : vector<32x16xf32>
    %319 = tpu.matmul %258, %318, %cst_78 {dimension_numbers = #tpu.dot_dimension_numbers<[1], [0], [0], [1], [0, 0, 1, 1], [], []>} : vector<32x32xbf16>, vector<32x16xbf16>, vector<32x16xf32> -> vector<32x16xf32>
    %320 = vector.broadcast %264 : vector<32x1xf32> to vector<32x16xf32>
    %321 = arith.addf %319, %320 : vector<32x16xf32>
    %322 = arith.addf %252, %321 : vector<32x16xf32>
    %323 = vector.broadcast %1 : vector<1x16xf32> to vector<32x16xf32>
    %324 = arith.mulf %322, %323 : vector<32x16xf32>
    %c0_79 = arith.constant 0 : index
    %c0_80 = arith.constant 0 : index
    %c0_81 = arith.constant 0 : index
    %325 = vector.load %arg7[%c0_79, %c0_80, %c0_81] : memref<2x8x33xf32, #tpu.memory_space<vmem>>, vector<1x8x33xf32>
    %326 = vector.shape_cast %325 : vector<1x8x33xf32> to vector<8x33xf32>
    %c1_82 = arith.constant 1 : index
    %c0_83 = arith.constant 0 : index
    %c0_84 = arith.constant 0 : index
    %327 = vector.load %arg7[%c1_82, %c0_83, %c0_84] : memref<2x8x33xf32, #tpu.memory_space<vmem>>, vector<1x8x33xf32>
    %328 = vector.shape_cast %327 : vector<1x8x33xf32> to vector<8x33xf32>
    %329 = vector.extract_strided_slice %326 {offsets = [0, 0], sizes = [8, 32], strides = [1, 1]} : vector<8x33xf32> to vector<8x32xf32>
    %cst_85 = arith.constant dense<0.000000e+00> : vector<8x16xf32>
    %330 = tpu.matmul %329, %324, %cst_85 {dimension_numbers = #tpu.dot_dimension_numbers<[1], [0], [0], [1], [0, 0, 1, 1], [], []>} : vector<8x32xf32>, vector<32x16xf32>, vector<8x16xf32> -> vector<8x16xf32>
    %331 = vector.extract_strided_slice %326 {offsets = [0, 32], sizes = [8, 1], strides = [1, 1]} : vector<8x33xf32> to vector<8x1xf32>
    %332 = vector.broadcast %331 : vector<8x1xf32> to vector<8x16xf32>
    %333 = arith.addf %330, %332 : vector<8x16xf32>
    %334 = vector.broadcast %1 : vector<1x16xf32> to vector<8x16xf32>
    %335 = arith.mulf %333, %334 : vector<8x16xf32>
    %336 = vector.extract_strided_slice %328 {offsets = [0, 0], sizes = [8, 32], strides = [1, 1]} : vector<8x33xf32> to vector<8x32xf32>
    %cst_86 = arith.constant dense<0.000000e+00> : vector<8x128xf32>
    %337 = tpu.matmul %336, %303, %cst_86 {dimension_numbers = #tpu.dot_dimension_numbers<[1], [0], [0], [1], [0, 0, 1, 1], [], []>} : vector<8x32xf32>, vector<32x128xf32>, vector<8x128xf32> -> vector<8x128xf32>
    %338 = vector.extract_strided_slice %328 {offsets = [0, 32], sizes = [8, 1], strides = [1, 1]} : vector<8x33xf32> to vector<8x1xf32>
    %339 = vector.broadcast %338 : vector<8x1xf32> to vector<8x128xf32>
    %340 = arith.addf %337, %339 : vector<8x128xf32>
    %341 = vector.broadcast %9 : vector<1x128xf32> to vector<8x128xf32>
    %342 = arith.mulf %340, %341 : vector<8x128xf32>
    %cst_87 = arith.constant 0.000000e+00 : f32
    %343 = vector.broadcast %cst_87 : f32 to vector<8x112xf32>
    %344 = tpu.concatenate %335, %343 in 1 : vector<8x16xf32>, vector<8x112xf32> -> vector<8x128xf32>
    %345 = tpu.concatenate %344, %342 in 0 : vector<8x128xf32>, vector<8x128xf32> -> vector<16x128xf32>
    %c0_88 = arith.constant 0 : index
    %c0_89 = arith.constant 0 : index
    %346 = vector.load %arg8[%c0_88, %c0_89] : memref<16x128xf32, #tpu.memory_space<vmem>>, vector<16x128xf32>
    tpu.vector_store %arg8[%c0_88, %c0_89], %345 {strides = array<i32>} : memref<16x128xf32, #tpu.memory_space<vmem>>, vector<16x128xf32>,
    return
  }
  func.func @transform_0(%arg0: i32) -> (i32, i32) {
    %c0_i32 = arith.constant 0 : i32
    %c0_i32_0 = arith.constant 0 : i32
    %c0_i32_1 = arith.constant 0 : i32
    return %c0_i32, %c0_i32_0 : i32, i32
  }
  func.func @transform_1(%arg0: i32) -> (i32, i32) {
    %c0_i32 = arith.constant 0 : i32
    %c0_i32_0 = arith.constant 0 : i32
    %c0_i32_1 = arith.constant 0 : i32
    return %c0_i32, %c0_i32_0 : i32, i32
  }
  func.func @transform_2(%arg0: i32) -> (i32, i32) {
    %c0_i32 = arith.constant 0 : i32
    %c0_i32_0 = arith.constant 0 : i32
    %c0_i32_1 = arith.constant 0 : i32
    return %c0_i32, %c0_i32_0 : i32, i32
  }
  func.func @transform_3(%arg0: i32) -> (i32, i32) {
    %c0_i32 = arith.constant 0 : i32
    %c0_i32_0 = arith.constant 0 : i32
    %c0_i32_1 = arith.constant 0 : i32
    return %c0_i32, %c0_i32_0 : i32, i32
  }
  func.func @transform_4(%arg0: i32) -> (i32, i32, i32) {
    %c0_i32 = arith.constant 0 : i32
    %c0_i32_0 = arith.constant 0 : i32
    %c0_i32_1 = arith.constant 0 : i32
    %c0_i32_2 = arith.constant 0 : i32
    return %c0_i32, %c0_i32_0, %c0_i32_1 : i32, i32, i32
  }
  func.func @transform_5(%arg0: i32) -> (i32, i32, i32) {
    %c0_i32 = arith.constant 0 : i32
    %c0_i32_0 = arith.constant 0 : i32
    %c0_i32_1 = arith.constant 0 : i32
    %c0_i32_2 = arith.constant 0 : i32
    return %c0_i32, %c0_i32_0, %c0_i32_1 : i32, i32, i32
  }
  func.func @transform_6(%arg0: i32) -> (i32, i32, i32) {
    %c0_i32 = arith.constant 0 : i32
    %c0_i32_0 = arith.constant 0 : i32
    %c0_i32_1 = arith.constant 0 : i32
    %c0_i32_2 = arith.constant 0 : i32
    return %c0_i32, %c0_i32_0, %c0_i32_1 : i32, i32, i32
  }
  func.func @transform_7(%arg0: i32) -> (i32, i32) {
    %c0_i32 = arith.constant 0 : i32
    %c0_i32_0 = arith.constant 0 : i32
    %c0_i32_1 = arith.constant 0 : i32
    return %c0_i32, %c0_i32_0 : i32, i32
  }
}

</mosaic_0001>

<llo_original>
// kernel: egnn_output_he.1
$region0: #{egnn_output_he.1}
  #allocation0 [shape = 'u32[]', space=smem, size = 0x4, offset = 0x4, fixed_abs, tag = 'smem constant byte address 0x4 - core index']
  #allocation1 [shape = 'u32[144,128]{1,0:T(1,128)}', space=vmem, size = 0x12000, scoped, tag = 'internal scratch']
  %s0 = inlined_call_operand.vmem [shape: f32[8,16], index: 0, kind: input, shape index: {}]
  %s1 = inlined_call_operand.vmem [shape: f32[2,128], index: 1, kind: input, shape index: {}]
  %s2 = inlined_call_operand.vmem [shape: bf16[32,128], index: 2, kind: input, shape index: {}]
  %s3 = inlined_call_operand.vmem [shape: bf16[128,16], index: 3, kind: input, shape index: {}]
  %s4 = inlined_call_operand.vmem [shape: bf16[4,160,64], index: 4, kind: input, shape index: {}]
  %s5 = inlined_call_operand.vmem [shape: f32[5,32,8], index: 5, kind: input, shape index: {}]
  %s6 = inlined_call_operand.vmem [shape: f32[2,8,33], index: 6, kind: input, shape index: {}]
  %s7 = inlined_call_operand.vmem [shape: f32[16,128], index: 7, kind: output, shape index: {}]
  %s8 = sld [smem:[#allocation0]]
  $region38: #{egnn_output_he.1} parent=0
    _
  %s10 = ssub.s32 1, %s8
  %s11 = scalar_select 0, %s10, %s8
  // Predicated region
  $region2: #{egnn_output_he.1} parent=0 // pred_check
    _
  $region3: #{egnn_output_he.1} parent=0 // pred_check_branch
    %13 = sbr.rel (0) target = $region5
  $region4: #{egnn_output_he.1} parent=0 // pred_region
    _
  $region5: #{egnn_output_he.1} parent=0 // pred_fallthru
    _
  // Predicated region
  $region6: #{egnn_output_he.1} parent=0 // pred_check
    _
  $region7: #{egnn_output_he.1} parent=0 // pred_check_branch
    %15 = sbr.rel (0) target = $region9
  $region8: #{egnn_output_he.1} parent=0 // pred_region
    _
  $region9: #{egnn_output_he.1} parent=0 // pred_fallthru
    _
  // Predicated region
  $region10: #{egnn_output_he.1} parent=0 // pred_check
    _
  $region11: #{egnn_output_he.1} parent=0 // pred_check_branch
    %17 = sbr.rel (0) target = $region13
  $region12: #{egnn_output_he.1} parent=0 // pred_region
    _
  $region13: #{egnn_output_he.1} parent=0 // pred_fallthru
    _
  // Predicated region
  $region14: #{egnn_output_he.1} parent=0 // pred_check
    _
  $region15: #{egnn_output_he.1} parent=0 // pred_check_branch
    %19 = sbr.rel (0) target = $region17
  $region16: #{egnn_output_he.1} parent=0 // pred_region
    _
  $region17: #{egnn_output_he.1} parent=0 // pred_fallthru
    _
  // Predicated region
  $region18: #{egnn_output_he.1} parent=0 // pred_check
    _
  $region19: #{egnn_output_he.1} parent=0 // pred_check_branch
    %21 = sbr.rel (0) target = $region21
  $region20: #{egnn_output_he.1} parent=0 // pred_region
    _
  $region21: #{egnn_output_he.1} parent=0 // pred_fallthru
    _
  // Predicated region
  $region22: #{egnn_output_he.1} parent=0 // pred_check
    _
  $region23: #{egnn_output_he.1} parent=0 // pred_check_branch
    %23 = sbr.rel (0) target = $region25
  $region24: #{egnn_output_he.1} parent=0 // pred_region
    _
  $region25: #{egnn_output_he.1} parent=0 // pred_fallthru
    _
  // Predicated region
  $region26: #{egnn_output_he.1} parent=0 // pred_check
    _
  $region27: #{egnn_output_he.1} parent=0 // pred_check_branch
    %25 = sbr.rel (0) target = $region29
  $region28: #{egnn_output_he.1} parent=0 // pred_region
    _
  $region29: #{egnn_output_he.1} parent=0 // pred_fallthru
    _
  %v27 = vld [vmem:[%s0] sm:$0xff]
  %v28 = vlaneseq
  %v29 = vshrl.u32 %v28, 7
  %v30 = vsub.s32 7, %v29
  %v31 = vrot.slane %v27, %v30
  %v32 = vmul.f32 %v27, %v31
  %v33 = vld [vmem:[%s1] sm:$0x3]
  %v35 = vrot.slane %v33, 1
  %v37 = vmul.f32 %v33, %v35
  %v38 = vld [vmem:[%s2] sm:$0xf]
  %v39 = vld [vmem:[%s2 + $0x4] sm:$0xf]
  %v40 = vld [vmem:[%s2 + $0x8] sm:$0xf]
  %v41 = vld [vmem:[%s2 + $0xc] sm:$0xf]
  %v42 = vld [vmem:[%s3] sm:$0xf]
  %v43 = vld [vmem:[%s3 + $0x4] sm:$0xf]
  %v44 = vld [vmem:[%s3 + $0x8] sm:$0xf]
  %v45 = vld [vmem:[%s3 + $0xc] sm:$0xf]
  %v46 = vld [vmem:[%s3 + $0x10] sm:$0xf]
  %v47 = vld [vmem:[%s3 + $0x14] sm:$0xf]
  %v48 = vld [vmem:[%s3 + $0x18] sm:$0xf]
  %v49 = vld [vmem:[%s3 + $0x1c] sm:$0xf]
  %v50 = vld [vmem:[%s3 + $0x20] sm:$0xf]
  %v51 = vld [vmem:[%s3 + $0x24] sm:$0xf]
  %v52 = vld [vmem:[%s3 + $0x28] sm:$0xf]
  %v53 = vld [vmem:[%s3 + $0x2c] sm:$0xf]
  %v54 = vld [vmem:[%s3 + $0x30] sm:$0xf]
  %v55 = vld [vmem:[%s3 + $0x34] sm:$0xf]
  %v56 = vld [vmem:[%s3 + $0x38] sm:$0xf]
  %v57 = vld [vmem:[%s3 + $0x3c] sm:$0xf]
  %s58 = scalar_lea.vmem %s5, 128
  %v59 = vld [vmem:[%s58] sm:$0xff]
  %v60 = vld [vmem:[%s58 + $0x8] sm:$0xff]
  %v61 = vld [vmem:[%s58 + $0x10] sm:$0xff]
  %v62 = vld [vmem:[%s58 + $0x18] sm:$0xff]
  %64 = vset.pattern.permute.xlu0 4
  %65 = vperm.xlu0 %64, %v59
  %v66 = vpop.permute.xlu0 %65
  %69 = vset.pattern.permute.xlu0 4
  %70 = vperm.xlu0 %69, %v60
  %v71 = vpop.permute.xlu0 %70
  %74 = vset.pattern.permute.xlu0 4
  %75 = vperm.xlu0 %74, %v61
  %v76 = vpop.permute.xlu0 %75
  %79 = vset.pattern.permute.xlu0 4
  %80 = vperm.xlu0 %79, %v62
  %v81 = vpop.permute.xlu0 %80
  %vm83 = vcmask 31744
  %v84 = vsel %vm83, %v59, 0
  %v86 = vsel %vm83, %v60, 0
  %v88 = vsel %vm83, %v61, 0
  %v90 = vsel %vm83, %v62, 0
  %vm92 = vcmask 1043456
  %v94 = vsel %vm92, %v32, 0
  %96 = vmatprep.subr.mxu0 0.0
  %97 = vmatpush1.msra.mxu0 %v94
  %98 = vmatprep.subr.mxu0 0.0
  %99 = vmatpush1.msra.mxu0 0.0
  %100 = vmatprep.subr.mxu0 0.0
  %101 = vmatpush1.msra.mxu0 0.0
  %102 = vmatprep.subr.mxu0 0.0
  %103 = vmatpush1.msra.mxu0 0.0
  %104 = vmatprep.subr.mxu0 0.0
  %105 = vmatpush1.msra.mxu0 0.0
  %106 = vmatprep.subr.mxu0 0.0
  %107 = vmatpush1.msra.mxu0 0.0
  %108 = vmatprep.subr.mxu0 0.0
  %109 = vmatpush1.msra.mxu0 0.0
  %110 = vmatprep.subr.mxu0 0.0
  %111 = vmatpush1.msra.mxu0 0.0
  %112 = vmatprep.subr.mxu0 0.0
  %113 = vmatpush1.msra.mxu0 0.0
  %114 = vmatprep.subr.mxu0 0.0
  %115 = vmatpush1.msra.mxu0 0.0
  %116 = vmatprep.subr.mxu0 0.0
  %117 = vmatpush1.msra.mxu0 0.0
  %118 = vmatprep.subr.mxu0 0.0
  %119 = vmatpush1.msra.mxu0 0.0
  %120 = vmatprep.subr.mxu0 0.0
  %121 = vmatpush1.msra.mxu0 0.0
  %122 = vmatprep.subr.mxu0 0.0
  %123 = vmatpush1.msra.mxu0 0.0
  %124 = vmatprep.subr.mxu0 0.0
  %125 = vmatpush1.msra.mxu0 0.0
  %126 = vmatprep.subr.mxu0 0.0
  %127 = vmatpush1.msra.mxu0 0.0
  %128 = vmatprep.subr.mxu0 0.0
  %129 = vmatpush1.msra.mxu0 0.0
  %130 = vmatprep.subr.mxu0 0.0
  %131 = vmatpush1.msra.mxu0 0.0
  %132 = vmatprep.subr.mxu0 0.0
  %133 = vmatpush1.msra.mxu0 0.0
  %134 = vmatprep.subr.mxu0 0.0
  %135 = vmatpush1.msra.mxu0 0.0
  %136 = vmatprep.subr.mxu0 0.0
  %137 = vmatpush1.msra.mxu0 0.0
  %138 = vmatprep.subr.mxu0 0.0
  %139 = vmatpush1.msra.mxu0 0.0
  %140 = vmatprep.subr.mxu0 0.0
  %141 = vmatpush1.msra.mxu0 0.0
  %142 = vmatprep.subr.mxu0 0.0
  %143 = vmatpush1.msra.mxu0 0.0
  %144 = vmatprep.subr.mxu0 0.0
  %145 = vmatpush1.msra.mxu0 0.0
  %146 = vmatprep.subr.mxu0 0.0
  %147 = vmatpush1.msra.mxu0 0.0
  %148 = vmatprep.subr.mxu0 0.0
  %149 = vmatpush1.msra.mxu0 0.0
  %150 = vmatprep.subr.mxu0 0.0
  %151 = vmatpush1.msra.mxu0 0.0
  %152 = vmatprep.subr.mxu0 0.0
  %153 = vmatpush1.msra.mxu0 0.0
  %154 = vmatprep.subr.mxu0 0.0
  %155 = vmatpush1.msra.mxu0 0.0
  %156 = vmatprep.subr.mxu0 0.0
  %157 = vmatpush1.msra.mxu0 0.0
  %158 = vmatprep.subr.mxu0 0.0
  %159 = vmatpush1.msra.mxu0 0.0
  %160 = vmatprep.mubr.f32.mxu0 0.0
  %161 = vmatmul.mubr.f32.gmra.mrb[0].mxu0 %v84
  %v162 = vpop.f32.mrb[0].mxu0
  %v163 = vadd.f32 %v66, %v162
  %v164 = vpop.f32.mrb[0].mxu0
  %165 = vmatprep.mubr.f32.mxu0 0.0
  %166 = vmatmul.mubr.f32.gmra.mrb[0].mxu0 %v86
  %v167 = vpop.f32.mrb[0].mxu0
  %v168 = vadd.f32 %v71, %v167
  %v169 = vpop.f32.mrb[0].mxu0
  %170 = vmatprep.mubr.f32.mxu0 0.0
  %171 = vmatmul.mubr.f32.gmra.mrb[0].mxu0 %v88
  %v172 = vpop.f32.mrb[0].mxu0
  %v173 = vadd.f32 %v76, %v172
  %v174 = vpop.f32.mrb[0].mxu0
  %175 = vmatprep.mubr.f32.mxu0 0.0
  %176 = vmatmul.mubr.f32.gmra.mrb[0].mxu0 %v90
  %v177 = vpop.f32.mrb[0].mxu0
  %v178 = vadd.f32 %v81, %v177
  %v179 = vpop.f32.mrb[0].mxu0
  %180 = vdwg.mxu0
  %v181 = vunpack.c.l.bf16 %v38
  %v182 = vunpack.c.l.bf16 %v39
  %v183 = vunpack.c.l.bf16 %v40
  %v184 = vunpack.c.l.bf16 %v41
  %v185 = vsub.f32 %v181, %v183
  %v186 = vsub.f32 %v182, %v184
  %v187 = vrot.slane %v32, 4
  %vm188 = vcmask 130048
  %v189 = vsel %vm188, %v187, 0
  %191 = vmatprep.subr.mxu0 0.0
  %192 = vmatpush1.msra.mxu0 %v185
  %193 = vmatprep.subr.mxu0 0.0
  %194 = vmatpush1.msra.mxu0 %v186
  %195 = vmatprep.subr.mxu0 0.0
  %196 = vmatpush1.msra.mxu0 0.0
  %197 = vmatprep.subr.mxu0 0.0
  %198 = vmatpush1.msra.mxu0 0.0
  %199 = vmatprep.subr.mxu0 0.0
  %200 = vmatpush1.msra.mxu0 0.0
  %201 = vmatprep.subr.mxu0 0.0
  %202 = vmatpush1.msra.mxu0 0.0
  %203 = vmatprep.subr.mxu0 0.0
  %204 = vmatpush1.msra.mxu0 0.0
  %205 = vmatprep.subr.mxu0 0.0
  %206 = vmatpush1.msra.mxu0 0.0
  %207 = vmatprep.subr.mxu0 0.0
  %208 = vmatpush1.msra.mxu0 0.0
  %209 = vmatprep.subr.mxu0 0.0
  %210 = vmatpush1.msra.mxu0 0.0
  %211 = vmatprep.subr.mxu0 0.0
  %212 = vmatpush1.msra.mxu0 0.0
  %213 = vmatprep.subr.mxu0 0.0
  %214 = vmatpush1.msra.mxu0 0.0
  %215 = vmatprep.subr.mxu0 0.0
  %216 = vmatpush1.msra.mxu0 0.0
  %217 = vmatprep.subr.mxu0 0.0
  %218 = vmatpush1.msra.mxu0 0.0
  %219 = vmatprep.subr.mxu0 0.0
  %220 = vmatpush1.msra.mxu0 0.0
  %221 = vmatprep.subr.mxu0 0.0
  %222 = vmatpush1.msra.mxu0 0.0
  %223 = vmatprep.subr.mxu0 0.0
  %224 = vmatpush1.msra.mxu0 0.0
  %225 = vmatprep.subr.mxu0 0.0
  %226 = vmatpush1.msra.mxu0 0.0
  %227 = vmatprep.subr.mxu0 0.0
  %228 = vmatpush1.msra.mxu0 0.0
  %229 = vmatprep.subr.mxu0 0.0
  %230 = vmatpush1.msra.mxu0 0.0
  %231 = vmatprep.subr.mxu0 0.0
  %232 = vmatpush1.msra.mxu0 0.0
  %233 = vmatprep.subr.mxu0 0.0
  %234 = vmatpush1.msra.mxu0 0.0
  %235 = vmatprep.subr.mxu0 0.0
  %236 = vmatpush1.msra.mxu0 0.0
  %237 = vmatprep.subr.mxu0 0.0
  %238 = vmatpush1.msra.mxu0 0.0
  %239 = vmatprep.subr.mxu0 0.0
  %240 = vmatpush1.msra.mxu0 0.0
  %241 = vmatprep.subr.mxu0 0.0
  %242 = vmatpush1.msra.mxu0 0.0
  %243 = vmatprep.subr.mxu0 0.0
  %244 = vmatpush1.msra.mxu0 0.0
  %245 = vmatprep.subr.mxu0 0.0
  %246 = vmatpush1.msra.mxu0 0.0
  %247 = vmatprep.subr.mxu0 0.0
  %248 = vmatpush1.msra.mxu0 0.0
  %249 = vmatprep.subr.mxu0 0.0
  %250 = vmatpush1.msra.mxu0 0.0
  %251 = vmatprep.subr.mxu0 0.0
  %252 = vmatpush1.msra.mxu0 0.0
  %253 = vmatprep.subr.mxu0 0.0
  %254 = vmatpush1.msra.mxu0 0.0
  %255 = vmatprep.mubr.f32.mxu0 0.0
  %256 = vmatmul.mubr.f32.gmra.mrb[0].mxu0 %v189
  %v257 = vpop.f32.mrb[0].mxu0
  %v258 = vadd.f32 0.0, %v257
  %v259 = vpop.f32.mrb[0].mxu0
  %260 = vdwg.mxu0
  %v261 = vmul.f32 %v258, %v258
  %v263 = vrot.slane %v261, 1
  %v265 = vadd.f32 %v261, %v263
  %v266 = vrot.slane %v261, 2
  %v268 = vadd.f32 %v265, %v266
  %v269 = vld [vmem:[%s4] sm:$0xf]
  %v270 = vld [vmem:[%s4 + $0x4] sm:$0xf]
  %v271 = vld [vmem:[%s4 + $0x8] sm:$0xf]
  %v272 = vld [vmem:[%s4 + $0xc] sm:$0xf]
  %v273 = vld [vmem:[%s4 + $0x10] sm:$0xf]
  %v274 = vld [vmem:[%s4 + $0x14] sm:$0xf]
  %v275 = vld [vmem:[%s4 + $0x18] sm:$0xf]
  %v276 = vld [vmem:[%s4 + $0x1c] sm:$0xf]
  %v277 = vld [vmem:[%s4 + $0x20] sm:$0xf]
  %v278 = vld [vmem:[%s4 + $0x24] sm:$0xf]
  %v279 = vld [vmem:[%s4 + $0x28] sm:$0xf]
  %v280 = vld [vmem:[%s4 + $0x2c] sm:$0xf]
  %v281 = vld [vmem:[%s4 + $0x30] sm:$0xf]
  %v282 = vld [vmem:[%s4 + $0x34] sm:$0xf]
  %v283 = vld [vmem:[%s4 + $0x38] sm:$0xf]
  %v284 = vld [vmem:[%s4 + $0x3c] sm:$0xf]
  %v285 = vld [vmem:[%s4 + $0x40] sm:$0xf]
  %v286 = vld [vmem:[%s4 + $0x44] sm:$0xf]
  %v287 = vld [vmem:[%s4 + $0x48] sm:$0xf]
  %v288 = vld [vmem:[%s4 + $0x4c] sm:$0xf]
  %v289 = vld [vmem:[%s5] sm:$0xff]
  %v290 = vld [vmem:[%s5 + $0x8] sm:$0xff]
  %v291 = vld [vmem:[%s5 + $0x10] sm:$0xff]
  %v292 = vld [vmem:[%s5 + $0x18] sm:$0xff]
  %v293 = vpack.c.bf16 %v168, %v163
  %v294 = vpack.c.bf16 %v178, %v173
  %v303 = vunpack.c.l.b16 %v269
  %v304 = vunpack.c.l.b16 %v270
  %v305 = vunpack.c.l.b16 %v271
  %v306 = vunpack.c.l.b16 %v272
  %v307 = vunpack.c.l.b16 %v273
  %v308 = vunpack.c.l.b16 %v274
  %v309 = vunpack.c.l.b16 %v275
  %v310 = vunpack.c.l.b16 %v276
  %v311 = vpack.c.b16 %v304, %v303
  %v312 = vpack.c.b16 %v306, %v305
  %v313 = vpack.c.b16 %v308, %v307
  %v314 = vpack.c.b16 %v310, %v309
  %vm315 = vcmask 261120
  %v317 = vsel %vm315, %v311, 0
  %v320 = vsel %vm315, %v312, 0
  %v323 = vsel %vm315, %v313, 0
  %v326 = vsel %vm315, %v314, 0
  %328 = vmatprep.subr.bf16.mxu0 0
  %329 = vmatpush1.bf16.msra.mxu0 %v293
  %330 = vmatprep.subr.bf16.mxu0 0
  %331 = vmatpush1.bf16.msra.mxu0 %v294
  %332 = vmatprep.subr.bf16.mxu0 0
  %333 = vmatpush1.bf16.msra.mxu0 0
  %334 = vmatprep.subr.bf16.mxu0 0
  %335 = vmatpush1.bf16.msra.mxu0 0
  %336 = vmatprep.subr.bf16.mxu0 0
  %337 = vmatpush1.bf16.msra.mxu0 0
  %338 = vmatprep.subr.bf16.mxu0 0
  %339 = vmatpush1.bf16.msra.mxu0 0
  %340 = vmatprep.subr.bf16.mxu0 0
  %341 = vmatpush1.bf16.msra.mxu0 0
  %342 = vmatprep.subr.bf16.mxu0 0
  %343 = vmatpush1.bf16.msra.mxu0 0
  %344 = vmatprep.subr.bf16.mxu0 0
  %345 = vmatpush1.bf16.msra.mxu0 0
  %346 = vmatprep.subr.bf16.mxu0 0
  %347 = vmatpush1.bf16.msra.mxu0 0
  %348 = vmatprep.subr.bf16.mxu0 0
  %349 = vmatpush1.bf16.msra.mxu0 0
  %350 = vmatprep.subr.bf16.mxu0 0
  %351 = vmatpush1.bf16.msra.mxu0 0
  %352 = vmatprep.subr.bf16.mxu0 0
  %353 = vmatpush1.bf16.msra.mxu0 0
  %354 = vmatprep.subr.bf16.mxu0 0
  %355 = vmatpush1.bf16.msra.mxu0 0
  %356 = vmatprep.subr.bf16.mxu0 0
  %357 = vmatpush1.bf16.msra.mxu0 0
  %358 = vmatprep.subr.bf16.mxu0 0
  %359 = vmatpush1.bf16.msra.mxu0 0
  %360 = vmatprep.mubr.bf16.mxu0 0
  %361 = vmatmul.mubr.bf16.gmra.mrb[0].mxu0 %v317
  %v362 = vpop.f32.mrb[0].mxu0
  %v363 = vadd.f32 0.0, %v362
  %v364 = vpop.f32.mrb[0].mxu0
  %v365 = vpop.f32.mrb[0].mxu0
  %v366 = vadd.f32 0.0, %v365
  %v367 = vpop.f32.mrb[0].mxu0
  %368 = vmatprep.mubr.bf16.mxu0 0
  %369 = vmatmul.mubr.bf16.gmra.mrb[0].mxu0 %v320
  %v370 = vpop.f32.mrb[0].mxu0
  %v371 = vadd.f32 0.0, %v370
  %v372 = vpop.f32.mrb[0].mxu0
  %v373 = vpop.f32.mrb[0].mxu0
  %v374 = vadd.f32 0.0, %v373
  %v375 = vpop.f32.mrb[0].mxu0
  %376 = vmatprep.mubr.bf16.mxu0 0
  %377 = vmatmul.mubr.bf16.gmra.mrb[0].mxu0 %v323
  %v378 = vpop.f32.mrb[0].mxu0
  %v379 = vadd.f32 0.0, %v378
  %v380 = vpop.f32.mrb[0].mxu0
  %v381 = vpop.f32.mrb[0].mxu0
  %v382 = vadd.f32 0.0, %v381
  %v383 = vpop.f32.mrb[0].mxu0
  %384 = vmatprep.mubr.bf16.mxu0 0
  %385 = vmatmul.mubr.bf16.gmra.mrb[0].mxu0 %v326
  %v386 = vpop.f32.mrb[0].mxu0
  %v387 = vadd.f32 0.0, %v386
  %v388 = vpop.f32.mrb[0].mxu0
  %v389 = vpop.f32.mrb[0].mxu0
  %v390 = vadd.f32 0.0, %v389
  %v391 = vpop.f32.mrb[0].mxu0
  %392 = vdwg.mxu0
  %397 = vrot.lane.b32.xlu0 %v379, 16
  %v398 = vpop.permute.xlu0 %397
  %399 = vrot.lane.b32.xlu0 %v382, 16
  %v400 = vpop.permute.xlu0 %399
  %401 = vrot.lane.b32.xlu0 %v387, 16
  %v402 = vpop.permute.xlu0 %401
  %403 = vrot.lane.b32.xlu0 %v390, 16
  %v404 = vpop.permute.xlu0 %403
  %v409 = vsel %vm188, %v363, %v398
  %v410 = vsel %vm188, %v366, %v400
  %v411 = vsel %vm188, %v371, %v402
  %v412 = vsel %vm188, %v374, %v404
  %v413 = vpack.c.bf16 %v410, %v409
  %v414 = vpack.c.bf16 %v412, %v411
  %416 = vset.pattern.permute.xlu0 4
  %417 = vperm.xlu0 %416, %v289
  %v418 = vpop.permute.xlu0 %417
  %421 = vset.pattern.permute.xlu0 4
  %422 = vperm.xlu0 %421, %v290
  %v423 = vpop.permute.xlu0 %422
  %426 = vset.pattern.permute.xlu0 4
  %427 = vperm.xlu0 %426, %v291
  %v428 = vpop.permute.xlu0 %427
  %431 = vset.pattern.permute.xlu0 4
  %432 = vperm.xlu0 %431, %v292
  %v433 = vpop.permute.xlu0 %432
  %v435 = vlaneseq
  %v436 = vshrl.u32 %v435, 7
  %v437 = vsub.s32 0, %v436
  %v438 = vrot.slane %v268, %v437
  %v439 = vmul.f32 %v418, %v438
  %v440 = vmul.f32 %v423, %v438
  %v441 = vmul.f32 %v428, %v438
  %v442 = vmul.f32 %v433, %v438
  %v447 = vunpack.c.l.b16 %v38
  %v448 = vunpack.c.l.b16 %v39
  %v449 = vunpack.c.l.b16 %v40
  %v450 = vunpack.c.l.b16 %v41
  %v451 = vpack.c.b16 %v448, %v447
  %v452 = vpack.c.b16 %v450, %v449
  %v456 = vsel %vm315, %v413, 0
  %v459 = vsel %vm315, %v414, 0
  %461 = vmatprep.subr.bf16.mxu0 0
  %462 = vmatpush1.bf16.msra.mxu0 %v451
  %463 = vmatprep.subr.bf16.mxu0 0
  %464 = vmatpush1.bf16.msra.mxu0 %v452
  %465 = vmatprep.subr.bf16.mxu0 0
  %466 = vmatpush1.bf16.msra.mxu0 0
  %467 = vmatprep.subr.bf16.mxu0 0
  %468 = vmatpush1.bf16.msra.mxu0 0
  %469 = vmatprep.subr.bf16.mxu0 0
  %470 = vmatpush1.bf16.msra.mxu0 0
  %471 = vmatprep.subr.bf16.mxu0 0
  %472 = vmatpush1.bf16.msra.mxu0 0
  %473 = vmatprep.subr.bf16.mxu0 0
  %474 = vmatpush1.bf16.msra.mxu0 0
  %475 = vmatprep.subr.bf16.mxu0 0
  %476 = vmatpush1.bf16.msra.mxu0 0
  %477 = vmatprep.subr.bf16.mxu0 0
  %478 = vmatpush1.bf16.msra.mxu0 0
  %479 = vmatprep.subr.bf16.mxu0 0
  %480 = vmatpush1.bf16.msra.mxu0 0
  %481 = vmatprep.subr.bf16.mxu0 0
  %482 = vmatpush1.bf16.msra.mxu0 0
  %483 = vmatprep.subr.bf16.mxu0 0
  %484 = vmatpush1.bf16.msra.mxu0 0
  %485 = vmatprep.subr.bf16.mxu0 0
  %486 = vmatpush1.bf16.msra.mxu0 0
  %487 = vmatprep.subr.bf16.mxu0 0
  %488 = vmatpush1.bf16.msra.mxu0 0
  %489 = vmatprep.subr.bf16.mxu0 0
  %490 = vmatpush1.bf16.msra.mxu0 0
  %491 = vmatprep.subr.bf16.mxu0 0
  %492 = vmatpush1.bf16.msra.mxu0 0
  %493 = vmatprep.mubr.bf16.mxu0 0
  %494 = vmatmul.mubr.bf16.gmra.mrb[0].mxu0 %v456
  %v495 = vpop.f32.mrb[0].mxu0
  %v496 = vadd.f32 %v439, %v495
  %v497 = vpop.f32.mrb[0].mxu0
  %v498 = vpop.f32.mrb[0].mxu0
  %v499 = vadd.f32 %v440, %v498
  %v500 = vpop.f32.mrb[0].mxu0
  %501 = vmatprep.mubr.bf16.mxu0 0
  %502 = vmatmul.mubr.bf16.gmra.mrb[0].mxu0 %v459
  %v503 = vpop.f32.mrb[0].mxu0
  %v504 = vadd.f32 %v441, %v503
  %v505 = vpop.f32.mrb[0].mxu0
  %v506 = vpop.f32.mrb[0].mxu0
  %v507 = vadd.f32 %v442, %v506
  %v508 = vpop.f32.mrb[0].mxu0
  %509 = vdwg.mxu0
  %510 = vset.pattern.permute.xlu0 5
  %511 = vperm.xlu0 %510, %v289
  %v512 = vpop.permute.xlu0 %511
  %514 = vset.pattern.permute.xlu0 5
  %515 = vperm.xlu0 %514, %v290
  %v516 = vpop.permute.xlu0 %515
  %518 = vset.pattern.permute.xlu0 5
  %519 = vperm.xlu0 %518, %v291
  %v520 = vpop.permute.xlu0 %519
  %522 = vset.pattern.permute.xlu0 5
  %523 = vperm.xlu0 %522, %v292
  %v524 = vpop.permute.xlu0 %523
  %v526 = vlaneseq
  %v527 = vshrl.u32 %v526, 7
  %v528 = vsub.s32 0, %v527
  %v529 = vrot.slane %v37, %v528
  %v530 = vmul.f32 %v512, %v529
  %v531 = vmul.f32 %v516, %v529
  %v532 = vmul.f32 %v520, %v529
  %v533 = vmul.f32 %v524, %v529
  %v534 = vadd.f32 %v496, %v530
  %v535 = vadd.f32 %v499, %v531
  %v536 = vadd.f32 %v504, %v532
  %v537 = vadd.f32 %v507, %v533
  %538 = vset.pattern.permute.xlu0 0
  %539 = vperm.xlu0 %538, %v289
  %v540 = vpop.permute.xlu0 %539
  %542 = vset.pattern.permute.xlu0 0
  %543 = vperm.xlu0 %542, %v290
  %v544 = vpop.permute.xlu0 %543
  %546 = vset.pattern.permute.xlu0 0
  %547 = vperm.xlu0 %546, %v291
  %v548 = vpop.permute.xlu0 %547
  %550 = vset.pattern.permute.xlu0 0
  %551 = vperm.xlu0 %550, %v292
  %v552 = vpop.permute.xlu0 %551
  %v554 = vadd.f32 %v534, %v540
  %v555 = vadd.f32 %v535, %v544
  %v556 = vadd.f32 %v536, %v548
  %v557 = vadd.f32 %v537, %v552
  %v558 = vsub.f32 0.0, %v554
  %v559 = vsub.f32 0.0, %v555
  %v560 = vsub.f32 0.0, %v556
  %v561 = vsub.f32 0.0, %v557
  %v562 = vmul.f32 %v558, 1.442695
  %v563 = vpow.pop %v562
  %v564 = vmul.f32 %v559, 1.442695
  %v565 = vpow.pop %v564
  %v566 = vmul.f32 %v560, 1.442695
  %v567 = vpow.pop %v566
  %v568 = vmul.f32 %v561, 1.442695
  %v569 = vpow.pop %v568
  %v570 = vadd.f32 %v563, 1.0
  %v571 = vadd.f32 %v565, 1.0
  %v572 = vadd.f32 %v567, 1.0
  %v573 = vadd.f32 %v569, 1.0
  %v574 = vrcp.pop %v570
  %v575 = vrcp.pop %v571
  %v576 = vrcp.pop %v572
  %v577 = vrcp.pop %v573
  %v578 = vmul.f32 %v554, %v574
  %v579 = vmul.f32 %v555, %v575
  %v580 = vmul.f32 %v556, %v576
  %v581 = vmul.f32 %v557, %v577
  %v582 = vpack.c.bf16 %v579, %v578
  %v583 = vpack.c.bf16 %v581, %v580
  %584 = vset.pattern.permute.xlu0 1
  %585 = vperm.xlu0 %584, %v289
  %v586 = vpop.permute.xlu0 %585
  %588 = vset.pattern.permute.xlu0 1
  %589 = vperm.xlu0 %588, %v290
  %v590 = vpop.permute.xlu0 %589
  %592 = vset.pattern.permute.xlu0 1
  %593 = vperm.xlu0 %592, %v291
  %v594 = vpop.permute.xlu0 %593
  %596 = vset.pattern.permute.xlu0 1
  %597 = vperm.xlu0 %596, %v292
  %v598 = vpop.permute.xlu0 %597
  %v604 = vunpack.c.l.b16 %v277
  %v605 = vunpack.c.l.b16 %v278
  %v606 = vunpack.c.l.b16 %v279
  %v607 = vunpack.c.l.b16 %v280
  %v608 = vpack.c.b16 %v605, %v604
  %v609 = vpack.c.b16 %v607, %v606
  %v611 = vsel %vm315, %v608, 0
  %v614 = vsel %vm315, %v609, 0
  %616 = vmatprep.subr.bf16.mxu0 0
  %617 = vmatpush1.bf16.msra.mxu0 %v582
  %618 = vmatprep.subr.bf16.mxu0 0
  %619 = vmatpush1.bf16.msra.mxu0 %v583
  %620 = vmatprep.subr.bf16.mxu0 0
  %621 = vmatpush1.bf16.msra.mxu0 0
  %622 = vmatprep.subr.bf16.mxu0 0
  %623 = vmatpush1.bf16.msra.mxu0 0
  %624 = vmatprep.subr.bf16.mxu0 0
  %625 = vmatpush1.bf16.msra.mxu0 0
  %626 = vmatprep.subr.bf16.mxu0 0
  %627 = vmatpush1.bf16.msra.mxu0 0
  %628 = vmatprep.subr.bf16.mxu0 0
  %629 = vmatpush1.bf16.msra.mxu0 0
  %630 = vmatprep.subr.bf16.mxu0 0
  %631 = vmatpush1.bf16.msra.mxu0 0
  %632 = vmatprep.subr.bf16.mxu0 0
  %633 = vmatpush1.bf16.msra.mxu0 0
  %634 = vmatprep.subr.bf16.mxu0 0
  %635 = vmatpush1.bf16.msra.mxu0 0
  %636 = vmatprep.subr.bf16.mxu0 0
  %637 = vmatpush1.bf16.msra.mxu0 0
  %638 = vmatprep.subr.bf16.mxu0 0
  %639 = vmatpush1.bf16.msra.mxu0 0
  %640 = vmatprep.subr.bf16.mxu0 0
  %641 = vmatpush1.bf16.msra.mxu0 0
  %642 = vmatprep.subr.bf16.mxu0 0
  %643 = vmatpush1.bf16.msra.mxu0 0
  %644 = vmatprep.subr.bf16.mxu0 0
  %645 = vmatpush1.bf16.msra.mxu0 0
  %646 = vmatprep.subr.bf16.mxu0 0
  %647 = vmatpush1.bf16.msra.mxu0 0
  %648 = vmatprep.mubr.bf16.mxu0 0
  %649 = vmatmul.mubr.bf16.gmra.mrb[0].mxu0 %v611
  %v650 = vpop.f32.mrb[0].mxu0
  %v651 = vadd.f32 %v586, %v650
  %v652 = vpop.f32.mrb[0].mxu0
  %v653 = vpop.f32.mrb[0].mxu0
  %v654 = vadd.f32 %v590, %v653
  %v655 = vpop.f32.mrb[0].mxu0
  %656 = vmatprep.mubr.bf16.mxu0 0
  %657 = vmatmul.mubr.bf16.gmra.mrb[0].mxu0 %v614
  %v658 = vpop.f32.mrb[0].mxu0
  %v659 = vadd.f32 %v594, %v658
  %v660 = vpop.f32.mrb[0].mxu0
  %v661 = vpop.f32.mrb[0].mxu0
  %v662 = vadd.f32 %v598, %v661
  %v663 = vpop.f32.mrb[0].mxu0
  %664 = vdwg.mxu0
  %v665 = vsub.f32 0.0, %v651
  %v666 = vsub.f32 0.0, %v654
  %v667 = vsub.f32 0.0, %v659
  %v668 = vsub.f32 0.0, %v662
  %v669 = vmul.f32 %v665, 1.442695
  %v670 = vpow.pop %v669
  %v671 = vmul.f32 %v666, 1.442695
  %v672 = vpow.pop %v671
  %v673 = vmul.f32 %v667, 1.442695
  %v674 = vpow.pop %v673
  %v675 = vmul.f32 %v668, 1.442695
  %v676 = vpow.pop %v675
  %v677 = vadd.f32 %v670, 1.0
  %v678 = vadd.f32 %v672, 1.0
  %v679 = vadd.f32 %v674, 1.0
  %v680 = vadd.f32 %v676, 1.0
  %v681 = vrcp.pop %v677
  %v682 = vrcp.pop %v678
  %v683 = vrcp.pop %v679
  %v684 = vrcp.pop %v680
  %v685 = vmul.f32 %v651, %v681
  %v686 = vmul.f32 %v654, %v682
  %v687 = vmul.f32 %v659, %v683
  %v688 = vmul.f32 %v662, %v684
  %v689 = vlaneseq
  %v690 = vshrl.u32 %v689, 7
  %v691 = vsub.s32 1, %v690
  %v692 = vrot.slane %v33, %v691
  %v693 = vmul.f32 %v685, %v692
  %v694 = vmul.f32 %v686, %v692
  %v695 = vmul.f32 %v687, %v692
  %v696 = vmul.f32 %v688, %v692
  %v697 = vpack.c.bf16 %v694, %v693
  %v698 = vpack.c.bf16 %v696, %v695
  %v715 = vunpack.c.l.b16 %v42
  %v716 = vunpack.c.l.b16 %v43
  %v717 = vunpack.c.l.b16 %v44
  %v718 = vunpack.c.l.b16 %v45
  %v719 = vunpack.c.l.b16 %v46
  %v720 = vunpack.c.l.b16 %v47
  %v721 = vunpack.c.l.b16 %v48
  %v722 = vunpack.c.l.b16 %v49
  %v723 = vunpack.c.l.b16 %v50
  %v724 = vunpack.c.l.b16 %v51
  %v725 = vunpack.c.l.b16 %v52
  %v726 = vunpack.c.l.b16 %v53
  %v727 = vunpack.c.l.b16 %v54
  %v728 = vunpack.c.l.b16 %v55
  %v729 = vunpack.c.l.b16 %v56
  %v730 = vunpack.c.l.b16 %v57
  %v731 = vpack.c.b16 %v716, %v715
  %v732 = vpack.c.b16 %v718, %v717
  %v733 = vpack.c.b16 %v720, %v719
  %v734 = vpack.c.b16 %v722, %v721
  %v735 = vpack.c.b16 %v724, %v723
  %v736 = vpack.c.b16 %v726, %v725
  %v737 = vpack.c.b16 %v728, %v727
  %v738 = vpack.c.b16 %v730, %v729
  %747 = vmatprep.subr.bf16.mxu0 0
  %748 = vmatpush1.bf16.msra.mxu0 %v731
  %749 = vmatprep.subr.bf16.mxu0 0
  %750 = vmatpush1.bf16.msra.mxu0 %v732
  %751 = vmatprep.subr.bf16.mxu0 0
  %752 = vmatpush1.bf16.msra.mxu0 %v733
  %753 = vmatprep.subr.bf16.mxu0 0
  %754 = vmatpush1.bf16.msra.mxu0 %v734
  %755 = vmatprep.subr.bf16.mxu0 0
  %756 = vmatpush1.bf16.msra.mxu0 %v735
  %757 = vmatprep.subr.bf16.mxu0 0
  %758 = vmatpush1.bf16.msra.mxu0 %v736
  %759 = vmatprep.subr.bf16.mxu0 0
  %760 = vmatpush1.bf16.msra.mxu0 %v737
  %761 = vmatprep.subr.bf16.mxu0 0
  %762 = vmatpush1.bf16.msra.mxu0 %v738
  %763 = vmatprep.subr.bf16.mxu0 0
  %764 = vmatpush1.bf16.msra.mxu0 0
  %765 = vmatprep.subr.bf16.mxu0 0
  %766 = vmatpush1.bf16.msra.mxu0 0
  %767 = vmatprep.subr.bf16.mxu0 0
  %768 = vmatpush1.bf16.msra.mxu0 0
  %769 = vmatprep.subr.bf16.mxu0 0
  %770 = vmatpush1.bf16.msra.mxu0 0
  %771 = vmatprep.subr.bf16.mxu0 0
  %772 = vmatpush1.bf16.msra.mxu0 0
  %773 = vmatprep.subr.bf16.mxu0 0
  %774 = vmatpush1.bf16.msra.mxu0 0
  %775 = vmatprep.subr.bf16.mxu0 0
  %776 = vmatpush1.bf16.msra.mxu0 0
  %777 = vmatprep.subr.bf16.mxu0 0
  %778 = vmatpush1.bf16.msra.mxu0 0
  %779 = vmatprep.mubr.bf16.mxu0 0
  %780 = vmatmul.mubr.bf16.gmra.mrb[0].mxu0 %v697
  %v781 = vpop.f32.mrb[0].mxu0
  %v782 = vadd.f32 0.0, %v781
  %v783 = vpop.f32.mrb[0].mxu0
  %v784 = vpop.f32.mrb[0].mxu0
  %v785 = vadd.f32 0.0, %v784
  %v786 = vpop.f32.mrb[0].mxu0
  %787 = vmatprep.mubr.bf16.mxu0 0
  %788 = vmatmul.mubr.bf16.gmra.mrb[0].mxu0 %v698
  %v789 = vpop.f32.mrb[0].mxu0
  %v790 = vadd.f32 0.0, %v789
  %v791 = vpop.f32.mrb[0].mxu0
  %v792 = vpop.f32.mrb[0].mxu0
  %v793 = vadd.f32 0.0, %v792
  %v794 = vpop.f32.mrb[0].mxu0
  %795 = vdwg.mxu0
  %v796 = vpack.c.bf16 %v785, %v782
  %v797 = vpack.c.bf16 %v793, %v790
  %798 = vset.pattern.permute.xlu0 2
  %799 = vperm.xlu0 %798, %v289
  %v800 = vpop.permute.xlu0 %799
  %802 = vset.pattern.permute.xlu0 2
  %803 = vperm.xlu0 %802, %v290
  %v804 = vpop.permute.xlu0 %803
  %806 = vset.pattern.permute.xlu0 2
  %807 = vperm.xlu0 %806, %v291
  %v808 = vpop.permute.xlu0 %807
  %810 = vset.pattern.permute.xlu0 2
  %811 = vperm.xlu0 %810, %v292
  %v812 = vpop.permute.xlu0 %811
  %v818 = vunpack.c.l.b16 %v281
  %v819 = vunpack.c.l.b16 %v282
  %v820 = vunpack.c.l.b16 %v283
  %v821 = vunpack.c.l.b16 %v284
  %v822 = vpack.c.b16 %v819, %v818
  %v823 = vpack.c.b16 %v821, %v820
  %vm824 = vcmask 523264
  %v826 = vsel %vm824, %v822, 0
  %v829 = vsel %vm824, %v823, 0
  %831 = vmatprep.subr.bf16.mxu0 0
  %832 = vmatpush1.bf16.msra.mxu0 %v293
  %833 = vmatprep.subr.bf16.mxu0 0
  %834 = vmatpush1.bf16.msra.mxu0 %v294
  %835 = vmatprep.subr.bf16.mxu0 0
  %836 = vmatpush1.bf16.msra.mxu0 %v796
  %837 = vmatprep.subr.bf16.mxu0 0
  %838 = vmatpush1.bf16.msra.mxu0 %v797
  %839 = vmatprep.subr.bf16.mxu0 0
  %840 = vmatpush1.bf16.msra.mxu0 0
  %841 = vmatprep.subr.bf16.mxu0 0
  %842 = vmatpush1.bf16.msra.mxu0 0
  %843 = vmatprep.subr.bf16.mxu0 0
  %844 = vmatpush1.bf16.msra.mxu0 0
  %845 = vmatprep.subr.bf16.mxu0 0
  %846 = vmatpush1.bf16.msra.mxu0 0
  %847 = vmatprep.subr.bf16.mxu0 0
  %848 = vmatpush1.bf16.msra.mxu0 0
  %849 = vmatprep.subr.bf16.mxu0 0
  %850 = vmatpush1.bf16.msra.mxu0 0
  %851 = vmatprep.subr.bf16.mxu0 0
  %852 = vmatpush1.bf16.msra.mxu0 0
  %853 = vmatprep.subr.bf16.mxu0 0
  %854 = vmatpush1.bf16.msra.mxu0 0
  %855 = vmatprep.subr.bf16.mxu0 0
  %856 = vmatpush1.bf16.msra.mxu0 0
  %857 = vmatprep.subr.bf16.mxu0 0
  %858 = vmatpush1.bf16.msra.mxu0 0
  %859 = vmatprep.subr.bf16.mxu0 0
  %860 = vmatpush1.bf16.msra.mxu0 0
  %861 = vmatprep.subr.bf16.mxu0 0
  %862 = vmatpush1.bf16.msra.mxu0 0
  %863 = vmatprep.mubr.bf16.mxu0 0
  %864 = vmatmul.mubr.bf16.gmra.mrb[0].mxu0 %v826
  %v865 = vpop.f32.mrb[0].mxu0
  %v866 = vadd.f32 %v800, %v865
  %v867 = vpop.f32.mrb[0].mxu0
  %v868 = vpop.f32.mrb[0].mxu0
  %v869 = vadd.f32 %v804, %v868
  %v870 = vpop.f32.mrb[0].mxu0
  %871 = vmatprep.mubr.bf16.mxu0 0
  %872 = vmatmul.mubr.bf16.gmra.mrb[0].mxu0 %v829
  %v873 = vpop.f32.mrb[0].mxu0
  %v874 = vadd.f32 %v808, %v873
  %v875 = vpop.f32.mrb[0].mxu0
  %v876 = vpop.f32.mrb[0].mxu0
  %v877 = vadd.f32 %v812, %v876
  %v878 = vpop.f32.mrb[0].mxu0
  %879 = vdwg.mxu0
  %v880 = vsub.f32 0.0, %v866
  %v881 = vsub.f32 0.0, %v869
  %v882 = vsub.f32 0.0, %v874
  %v883 = vsub.f32 0.0, %v877
  %v884 = vmul.f32 %v880, 1.442695
  %v885 = vpow.pop %v884
  %v886 = vmul.f32 %v881, 1.442695
  %v887 = vpow.pop %v886
  %v888 = vmul.f32 %v882, 1.442695
  %v889 = vpow.pop %v888
  %v890 = vmul.f32 %v883, 1.442695
  %v891 = vpow.pop %v890
  %v892 = vadd.f32 %v885, 1.0
  %v893 = vadd.f32 %v887, 1.0
  %v894 = vadd.f32 %v889, 1.0
  %v895 = vadd.f32 %v891, 1.0
  %v896 = vrcp.pop %v892
  %v897 = vrcp.pop %v893
  %v898 = vrcp.pop %v894
  %v899 = vrcp.pop %v895
  %v900 = vmul.f32 %v866, %v896
  %v901 = vmul.f32 %v869, %v897
  %v902 = vmul.f32 %v874, %v898
  %v903 = vmul.f32 %v877, %v899
  %v904 = vpack.c.bf16 %v901, %v900
  %v905 = vpack.c.bf16 %v903, %v902
  %906 = vset.pattern.permute.xlu0 3
  %907 = vperm.xlu0 %906, %v289
  %v908 = vpop.permute.xlu0 %907
  %910 = vset.pattern.permute.xlu0 3
  %911 = vperm.xlu0 %910, %v290
  %v912 = vpop.permute.xlu0 %911
  %914 = vset.pattern.permute.xlu0 3
  %915 = vperm.xlu0 %914, %v291
  %v916 = vpop.permute.xlu0 %915
  %918 = vset.pattern.permute.xlu0 3
  %919 = vperm.xlu0 %918, %v292
  %v920 = vpop.permute.xlu0 %919
  %v926 = vunpack.c.l.b16 %v285
  %v927 = vunpack.c.l.b16 %v286
  %v928 = vunpack.c.l.b16 %v287
  %v929 = vunpack.c.l.b16 %v288
  %v930 = vpack.c.b16 %v927, %v926
  %v931 = vpack.c.b16 %v929, %v928
  %v933 = vsel %vm315, %v930, 0
  %v936 = vsel %vm315, %v931, 0
  %938 = vmatprep.subr.bf16.mxu0 0
  %939 = vmatpush1.bf16.msra.mxu0 %v904
  %940 = vmatprep.subr.bf16.mxu0 0
  %941 = vmatpush1.bf16.msra.mxu0 %v905
  %942 = vmatprep.subr.bf16.mxu0 0
  %943 = vmatpush1.bf16.msra.mxu0 0
  %944 = vmatprep.subr.bf16.mxu0 0
  %945 = vmatpush1.bf16.msra.mxu0 0
  %946 = vmatprep.subr.bf16.mxu0 0
  %947 = vmatpush1.bf16.msra.mxu0 0
  %948 = vmatprep.subr.bf16.mxu0 0
  %949 = vmatpush1.bf16.msra.mxu0 0
  %950 = vmatprep.subr.bf16.mxu0 0
  %951 = vmatpush1.bf16.msra.mxu0 0
  %952 = vmatprep.subr.bf16.mxu0 0
  %953 = vmatpush1.bf16.msra.mxu0 0
  %954 = vmatprep.subr.bf16.mxu0 0
  %955 = vmatpush1.bf16.msra.mxu0 0
  %956 = vmatprep.subr.bf16.mxu0 0
  %957 = vmatpush1.bf16.msra.mxu0 0
  %958 = vmatprep.subr.bf16.mxu0 0
  %959 = vmatpush1.bf16.msra.mxu0 0
  %960 = vmatprep.subr.bf16.mxu0 0
  %961 = vmatpush1.bf16.msra.mxu0 0
  %962 = vmatprep.subr.bf16.mxu0 0
  %963 = vmatpush1.bf16.msra.mxu0 0
  %964 = vmatprep.subr.bf16.mxu0 0
  %965 = vmatpush1.bf16.msra.mxu0 0
  %966 = vmatprep.subr.bf16.mxu0 0
  %967 = vmatpush1.bf16.msra.mxu0 0
  %968 = vmatprep.subr.bf16.mxu0 0
  %969 = vmatpush1.bf16.msra.mxu0 0
  %970 = vmatprep.mubr.bf16.mxu0 0
  %971 = vmatmul.mubr.bf16.gmra.mrb[0].mxu0 %v933
  %v972 = vpop.f32.mrb[0].mxu0
  %v973 = vadd.f32 %v908, %v972
  %v974 = vpop.f32.mrb[0].mxu0
  %v975 = vpop.f32.mrb[0].mxu0
  %v976 = vadd.f32 %v912, %v975
  %v977 = vpop.f32.mrb[0].mxu0
  %978 = vmatprep.mubr.bf16.mxu0 0
  %979 = vmatmul.mubr.bf16.gmra.mrb[0].mxu0 %v936
  %v980 = vpop.f32.mrb[0].mxu0
  %v981 = vadd.f32 %v916, %v980
  %v982 = vpop.f32.mrb[0].mxu0
  %v983 = vpop.f32.mrb[0].mxu0
  %v984 = vadd.f32 %v920, %v983
  %v985 = vpop.f32.mrb[0].mxu0
  %986 = vdwg.mxu0
  %v987 = vadd.f32 %v163, %v973
  %v988 = vadd.f32 %v168, %v976
  %v989 = vadd.f32 %v173, %v981
  %v990 = vadd.f32 %v178, %v984
  %v991 = vmul.f32 %v987, %v31
  %v992 = vmul.f32 %v988, %v31
  %v993 = vmul.f32 %v989, %v31
  %v994 = vmul.f32 %v990, %v31
  %s995 = scalar_lea.vmem %s4, 80
  %v996 = vld [vmem:[%s995] sm:$0xf]
  %v997 = vld [vmem:[%s995 + $0x4] sm:$0xf]
  %v998 = vld [vmem:[%s995 + $0x8] sm:$0xf]
  %v999 = vld [vmem:[%s995 + $0xc] sm:$0xf]
  %v1000 = vld [vmem:[%s995 + $0x10] sm:$0xf]
  %v1001 = vld [vmem:[%s995 + $0x14] sm:$0xf]
  %v1002 = vld [vmem:[%s995 + $0x18] sm:$0xf]
  %v1003 = vld [vmem:[%s995 + $0x1c] sm:$0xf]
  %v1004 = vld [vmem:[%s995 + $0x20] sm:$0xf]
  %v1005 = vld [vmem:[%s995 + $0x24] sm:$0xf]
  %v1006 = vld [vmem:[%s995 + $0x28] sm:$0xf]
  %v1007 = vld [vmem:[%s995 + $0x2c] sm:$0xf]
  %v1008 = vld [vmem:[%s995 + $0x30] sm:$0xf]
  %v1009 = vld [vmem:[%s995 + $0x34] sm:$0xf]
  %v1010 = vld [vmem:[%s995 + $0x38] sm:$0xf]
  %v1011 = vld [vmem:[%s995 + $0x3c] sm:$0xf]
  %v1012 = vld [vmem:[%s995 + $0x40] sm:$0xf]
  %v1013 = vld [vmem:[%s995 + $0x44] sm:$0xf]
  %v1014 = vld [vmem:[%s995 + $0x48] sm:$0xf]
  %v1015 = vld [vmem:[%s995 + $0x4c] sm:$0xf]
  %s1016 = scalar_lea.vmem %s5, 32
  %v1017 = vld [vmem:[%s1016] sm:$0xff]
  %v1018 = vld [vmem:[%s1016 + $0x8] sm:$0xff]
  %v1019 = vld [vmem:[%s1016 + $0x10] sm:$0xff]
  %v1020 = vld [vmem:[%s1016 + $0x18] sm:$0xff]
  %v1021 = vpack.c.bf16 %v992, %v991
  %v1022 = vpack.c.bf16 %v994, %v993
  %v1031 = vunpack.c.l.b16 %v996
  %v1032 = vunpack.c.l.b16 %v997
  %v1033 = vunpack.c.l.b16 %v998
  %v1034 = vunpack.c.l.b16 %v999
  %v1035 = vunpack.c.l.b16 %v1000
  %v1036 = vunpack.c.l.b16 %v1001
  %v1037 = vunpack.c.l.b16 %v1002
  %v1038 = vunpack.c.l.b16 %v1003
  %v1039 = vpack.c.b16 %v1032, %v1031
  %v1040 = vpack.c.b16 %v1034, %v1033
  %v1041 = vpack.c.b16 %v1036, %v1035
  %v1042 = vpack.c.b16 %v1038, %v1037
  %v1044 = vsel %vm315, %v1039, 0
  %v1047 = vsel %vm315, %v1040, 0
  %v1050 = vsel %vm315, %v1041, 0
  %v1053 = vsel %vm315, %v1042, 0
  %1055 = vmatprep.subr.bf16.mxu0 0
  %1056 = vmatpush1.bf16.msra.mxu0 %v1021
  %1057 = vmatprep.subr.bf16.mxu0 0
  %1058 = vmatpush1.bf16.msra.mxu0 %v1022
  %1059 = vmatprep.subr.bf16.mxu0 0
  %1060 = vmatpush1.bf16.msra.mxu0 0
  %1061 = vmatprep.subr.bf16.mxu0 0
  %1062 = vmatpush1.bf16.msra.mxu0 0
  %1063 = vmatprep.subr.bf16.mxu0 0
  %1064 = vmatpush1.bf16.msra.mxu0 0
  %1065 = vmatprep.subr.bf16.mxu0 0
  %1066 = vmatpush1.bf16.msra.mxu0 0
  %1067 = vmatprep.subr.bf16.mxu0 0
  %1068 = vmatpush1.bf16.msra.mxu0 0
  %1069 = vmatprep.subr.bf16.mxu0 0
  %1070 = vmatpush1.bf16.msra.mxu0 0
  %1071 = vmatprep.subr.bf16.mxu0 0
  %1072 = vmatpush1.bf16.msra.mxu0 0
  %1073 = vmatprep.subr.bf16.mxu0 0
  %1074 = vmatpush1.bf16.msra.mxu0 0
  %1075 = vmatprep.subr.bf16.mxu0 0
  %1076 = vmatpush1.bf16.msra.mxu0 0
  %1077 = vmatprep.subr.bf16.mxu0 0
  %1078 = vmatpush1.bf16.msra.mxu0 0
  %1079 = vmatprep.subr.bf16.mxu0 0
  %1080 = vmatpush1.bf16.msra.mxu0 0
  %1081 = vmatprep.subr.bf16.mxu0 0
  %1082 = vmatpush1.bf16.msra.mxu0 0
  %1083 = vmatprep.subr.bf16.mxu0 0
  %1084 = vmatpush1.bf16.msra.mxu0 0
  %1085 = vmatprep.subr.bf16.mxu0 0
  %1086 = vmatpush1.bf16.msra.mxu0 0
  %1087 = vmatprep.mubr.bf16.mxu0 0
  %1088 = vmatmul.mubr.bf16.gmra.mrb[0].mxu0 %v1044
  %v1089 = vpop.f32.mrb[0].mxu0
  %v1090 = vadd.f32 0.0, %v1089
  %v1091 = vpop.f32.mrb[0].mxu0
  %v1092 = vpop.f32.mrb[0].mxu0
  %v1093 = vadd.f32 0.0, %v1092
  %v1094 = vpop.f32.mrb[0].mxu0
  %1095 = vmatprep.mubr.bf16.mxu0 0
  %1096 = vmatmul.mubr.bf16.gmra.mrb[0].mxu0 %v1047
  %v1097 = vpop.f32.mrb[0].mxu0
  %v1098 = vadd.f32 0.0, %v1097
  %v1099 = vpop.f32.mrb[0].mxu0
  %v1100 = vpop.f32.mrb[0].mxu0
  %v1101 = vadd.f32 0.0, %v1100
  %v1102 = vpop.f32.mrb[0].mxu0
  %1103 = vmatprep.mubr.bf16.mxu0 0
  %1104 = vmatmul.mubr.bf16.gmra.mrb[0].mxu0 %v1050
  %v1105 = vpop.f32.mrb[0].mxu0
  %v1106 = vadd.f32 0.0, %v1105
  %v1107 = vpop.f32.mrb[0].mxu0
  %v1108 = vpop.f32.mrb[0].mxu0
  %v1109 = vadd.f32 0.0, %v1108
  %v1110 = vpop.f32.mrb[0].mxu0
  %1111 = vmatprep.mubr.bf16.mxu0 0
  %1112 = vmatmul.mubr.bf16.gmra.mrb[0].mxu0 %v1053
  %v1113 = vpop.f32.mrb[0].mxu0
  %v1114 = vadd.f32 0.0, %v1113
  %v1115 = vpop.f32.mrb[0].mxu0
  %v1116 = vpop.f32.mrb[0].mxu0
  %v1117 = vadd.f32 0.0, %v1116
  %v1118 = vpop.f32.mrb[0].mxu0
  %1119 = vdwg.mxu0
  %1124 = vrot.lane.b32.xlu0 %v1106, 16
  %v1125 = vpop.permute.xlu0 %1124
  %1126 = vrot.lane.b32.xlu0 %v1109, 16
  %v1127 = vpop.permute.xlu0 %1126
  %1128 = vrot.lane.b32.xlu0 %v1114, 16
  %v1129 = vpop.permute.xlu0 %1128
  %1130 = vrot.lane.b32.xlu0 %v1117, 16
  %v1131 = vpop.permute.xlu0 %1130
  %v1136 = vsel %vm188, %v1090, %v1125
  %v1137 = vsel %vm188, %v1093, %v1127
  %v1138 = vsel %vm188, %v1098, %v1129
  %v1139 = vsel %vm188, %v1101, %v1131
  %v1140 = vpack.c.bf16 %v1137, %v1136
  %v1141 = vpack.c.bf16 %v1139, %v1138
  %1143 = vset.pattern.permute.xlu0 4
  %1144 = vperm.xlu0 %1143, %v1017
  %v1145 = vpop.permute.xlu0 %1144
  %1148 = vset.pattern.permute.xlu0 4
  %1149 = vperm.xlu0 %1148, %v1018
  %v1150 = vpop.permute.xlu0 %1149
  %1153 = vset.pattern.permute.xlu0 4
  %1154 = vperm.xlu0 %1153, %v1019
  %v1155 = vpop.permute.xlu0 %1154
  %1158 = vset.pattern.permute.xlu0 4
  %1159 = vperm.xlu0 %1158, %v1020
  %v1160 = vpop.permute.xlu0 %1159
  %v1162 = vmul.f32 %v1145, %v438
  %v1163 = vmul.f32 %v1150, %v438
  %v1164 = vmul.f32 %v1155, %v438
  %v1165 = vmul.f32 %v1160, %v438
  %v1167 = vsel %vm315, %v1140, 0
  %v1170 = vsel %vm315, %v1141, 0
  %1172 = vmatprep.subr.bf16.mxu0 0
  %1173 = vmatpush1.bf16.msra.mxu0 %v451
  %1174 = vmatprep.subr.bf16.mxu0 0
  %1175 = vmatpush1.bf16.msra.mxu0 %v452
  %1176 = vmatprep.subr.bf16.mxu0 0
  %1177 = vmatpush1.bf16.msra.mxu0 0
  %1178 = vmatprep.subr.bf16.mxu0 0
  %1179 = vmatpush1.bf16.msra.mxu0 0
  %1180 = vmatprep.subr.bf16.mxu0 0
  %1181 = vmatpush1.bf16.msra.mxu0 0
  %1182 = vmatprep.subr.bf16.mxu0 0
  %1183 = vmatpush1.bf16.msra.mxu0 0
  %1184 = vmatprep.subr.bf16.mxu0 0
  %1185 = vmatpush1.bf16.msra.mxu0 0
  %1186 = vmatprep.subr.bf16.mxu0 0
  %1187 = vmatpush1.bf16.msra.mxu0 0
  %1188 = vmatprep.subr.bf16.mxu0 0
  %1189 = vmatpush1.bf16.msra.mxu0 0
  %1190 = vmatprep.subr.bf16.mxu0 0
  %1191 = vmatpush1.bf16.msra.mxu0 0
  %1192 = vmatprep.subr.bf16.mxu0 0
  %1193 = vmatpush1.bf16.msra.mxu0 0
  %1194 = vmatprep.subr.bf16.mxu0 0
  %1195 = vmatpush1.bf16.msra.mxu0 0
  %1196 = vmatprep.subr.bf16.mxu0 0
  %1197 = vmatpush1.bf16.msra.mxu0 0
  %1198 = vmatprep.subr.bf16.mxu0 0
  %1199 = vmatpush1.bf16.msra.mxu0 0
  %1200 = vmatprep.subr.bf16.mxu0 0
  %1201 = vmatpush1.bf16.msra.mxu0 0
  %1202 = vmatprep.subr.bf16.mxu0 0
  %1203 = vmatpush1.bf16.msra.mxu0 0
  %1204 = vmatprep.mubr.bf16.mxu0 0
  %1205 = vmatmul.mubr.bf16.gmra.mrb[0].mxu0 %v1167
  %v1206 = vpop.f32.mrb[0].mxu0
  %v1207 = vadd.f32 %v1162, %v1206
  %v1208 = vpop.f32.mrb[0].mxu0
  %v1209 = vpop.f32.mrb[0].mxu0
  %v1210 = vadd.f32 %v1163, %v1209
  %v1211 = vpop.f32.mrb[0].mxu0
  %1212 = vmatprep.mubr.bf16.mxu0 0
  %1213 = vmatmul.mubr.bf16.gmra.mrb[0].mxu0 %v1170
  %v1214 = vpop.f32.mrb[0].mxu0
  %v1215 = vadd.f32 %v1164, %v1214
  %v1216 = vpop.f32.mrb[0].mxu0
  %v1217 = vpop.f32.mrb[0].mxu0
  %v1218 = vadd.f32 %v1165, %v1217
  %v1219 = vpop.f32.mrb[0].mxu0
  %1220 = vdwg.mxu0
  %1221 = vset.pattern.permute.xlu0 5
  %1222 = vperm.xlu0 %1221, %v1017
  %v1223 = vpop.permute.xlu0 %1222
  %1225 = vset.pattern.permute.xlu0 5
  %1226 = vperm.xlu0 %1225, %v1018
  %v1227 = vpop.permute.xlu0 %1226
  %1229 = vset.pattern.permute.xlu0 5
  %1230 = vperm.xlu0 %1229, %v1019
  %v1231 = vpop.permute.xlu0 %1230
  %1233 = vset.pattern.permute.xlu0 5
  %1234 = vperm.xlu0 %1233, %v1020
  %v1235 = vpop.permute.xlu0 %1234
  %v1237 = vmul.f32 %v1223, %v529
  %v1238 = vmul.f32 %v1227, %v529
  %v1239 = vmul.f32 %v1231, %v529
  %v1240 = vmul.f32 %v1235, %v529
  %v1241 = vadd.f32 %v1207, %v1237
  %v1242 = vadd.f32 %v1210, %v1238
  %v1243 = vadd.f32 %v1215, %v1239
  %v1244 = vadd.f32 %v1218, %v1240
  %1245 = vset.pattern.permute.xlu0 0
  %1246 = vperm.xlu0 %1245, %v1017
  %v1247 = vpop.permute.xlu0 %1246
  %1249 = vset.pattern.permute.xlu0 0
  %1250 = vperm.xlu0 %1249, %v1018
  %v1251 = vpop.permute.xlu0 %1250
  %1253 = vset.pattern.permute.xlu0 0
  %1254 = vperm.xlu0 %1253, %v1019
  %v1255 = vpop.permute.xlu0 %1254
  %1257 = vset.pattern.permute.xlu0 0
  %1258 = vperm.xlu0 %1257, %v1020
  %v1259 = vpop.permute.xlu0 %1258
  %v1261 = vadd.f32 %v1241, %v1247
  %v1262 = vadd.f32 %v1242, %v1251
  %v1263 = vadd.f32 %v1243, %v1255
  %v1264 = vadd.f32 %v1244, %v1259
  %v1265 = vsub.f32 0.0, %v1261
  %v1266 = vsub.f32 0.0, %v1262
  %v1267 = vsub.f32 0.0, %v1263
  %v1268 = vsub.f32 0.0, %v1264
  %v1269 = vmul.f32 %v1265, 1.442695
  %v1270 = vpow.pop %v1269
  %v1271 = vmul.f32 %v1266, 1.442695
  %v1272 = vpow.pop %v1271
  %v1273 = vmul.f32 %v1267, 1.442695
  %v1274 = vpow.pop %v1273
  %v1275 = vmul.f32 %v1268, 1.442695
  %v1276 = vpow.pop %v1275
  %v1277 = vadd.f32 %v1270, 1.0
  %v1278 = vadd.f32 %v1272, 1.0
  %v1279 = vadd.f32 %v1274, 1.0
  %v1280 = vadd.f32 %v1276, 1.0
  %v1281 = vrcp.pop %v1277
  %v1282 = vrcp.pop %v1278
  %v1283 = vrcp.pop %v1279
  %v1284 = vrcp.pop %v1280
  %v1285 = vmul.f32 %v1261, %v1281
  %v1286 = vmul.f32 %v1262, %v1282
  %v1287 = vmul.f32 %v1263, %v1283
  %v1288 = vmul.f32 %v1264, %v1284
  %v1289 = vpack.c.bf16 %v1286, %v1285
  %v1290 = vpack.c.bf16 %v1288, %v1287
  %1291 = vset.pattern.permute.xlu0 1
  %1292 = vperm.xlu0 %1291, %v1017
  %v1293 = vpop.permute.xlu0 %1292
  %1295 = vset.pattern.permute.xlu0 1
  %1296 = vperm.xlu0 %1295, %v1018
  %v1297 = vpop.permute.xlu0 %1296
  %1299 = vset.pattern.permute.xlu0 1
  %1300 = vperm.xlu0 %1299, %v1019
  %v1301 = vpop.permute.xlu0 %1300
  %1303 = vset.pattern.permute.xlu0 1
  %1304 = vperm.xlu0 %1303, %v1020
  %v1305 = vpop.permute.xlu0 %1304
  %v1311 = vunpack.c.l.b16 %v1004
  %v1312 = vunpack.c.l.b16 %v1005
  %v1313 = vunpack.c.l.b16 %v1006
  %v1314 = vunpack.c.l.b16 %v1007
  %v1315 = vpack.c.b16 %v1312, %v1311
  %v1316 = vpack.c.b16 %v1314, %v1313
  %v1318 = vsel %vm315, %v1315, 0
  %v1321 = vsel %vm315, %v1316, 0
  %1323 = vmatprep.subr.bf16.mxu0 0
  %1324 = vmatpush1.bf16.msra.mxu0 %v1289
  %1325 = vmatprep.subr.bf16.mxu0 0
  %1326 = vmatpush1.bf16.msra.mxu0 %v1290
  %1327 = vmatprep.subr.bf16.mxu0 0
  %1328 = vmatpush1.bf16.msra.mxu0 0
  %1329 = vmatprep.subr.bf16.mxu0 0
  %1330 = vmatpush1.bf16.msra.mxu0 0
  %1331 = vmatprep.subr.bf16.mxu0 0
  %1332 = vmatpush1.bf16.msra.mxu0 0
  %1333 = vmatprep.subr.bf16.mxu0 0
  %1334 = vmatpush1.bf16.msra.mxu0 0
  %1335 = vmatprep.subr.bf16.mxu0 0
  %1336 = vmatpush1.bf16.msra.mxu0 0
  %1337 = vmatprep.subr.bf16.mxu0 0
  %1338 = vmatpush1.bf16.msra.mxu0 0
  %1339 = vmatprep.subr.bf16.mxu0 0
  %1340 = vmatpush1.bf16.msra.mxu0 0
  %1341 = vmatprep.subr.bf16.mxu0 0
  %1342 = vmatpush1.bf16.msra.mxu0 0
  %1343 = vmatprep.subr.bf16.mxu0 0
  %1344 = vmatpush1.bf16.msra.mxu0 0
  %1345 = vmatprep.subr.bf16.mxu0 0
  %1346 = vmatpush1.bf16.msra.mxu0 0
  %1347 = vmatprep.subr.bf16.mxu0 0
  %1348 = vmatpush1.bf16.msra.mxu0 0
  %1349 = vmatprep.subr.bf16.mxu0 0
  %1350 = vmatpush1.bf16.msra.mxu0 0
  %1351 = vmatprep.subr.bf16.mxu0 0
  %1352 = vmatpush1.bf16.msra.mxu0 0
  %1353 = vmatprep.subr.bf16.mxu0 0
  %1354 = vmatpush1.bf16.msra.mxu0 0
  %1355 = vmatprep.mubr.bf16.mxu0 0
  %1356 = vmatmul.mubr.bf16.gmra.mrb[0].mxu0 %v1318
  %v1357 = vpop.f32.mrb[0].mxu0
  %v1358 = vadd.f32 %v1293, %v1357
  %v1359 = vpop.f32.mrb[0].mxu0
  %v1360 = vpop.f32.mrb[0].mxu0
  %v1361 = vadd.f32 %v1297, %v1360
  %v1362 = vpop.f32.mrb[0].mxu0
  %1363 = vmatprep.mubr.bf16.mxu0 0
  %1364 = vmatmul.mubr.bf16.gmra.mrb[0].mxu0 %v1321
  %v1365 = vpop.f32.mrb[0].mxu0
  %v1366 = vadd.f32 %v1301, %v1365
  %v1367 = vpop.f32.mrb[0].mxu0
  %v1368 = vpop.f32.mrb[0].mxu0
  %v1369 = vadd.f32 %v1305, %v1368
  %v1370 = vpop.f32.mrb[0].mxu0
  %1371 = vdwg.mxu0
  %v1372 = vsub.f32 0.0, %v1358
  %v1373 = vsub.f32 0.0, %v1361
  %v1374 = vsub.f32 0.0, %v1366
  %v1375 = vsub.f32 0.0, %v1369
  %v1376 = vmul.f32 %v1372, 1.442695
  %v1377 = vpow.pop %v1376
  %v1378 = vmul.f32 %v1373, 1.442695
  %v1379 = vpow.pop %v1378
  %v1380 = vmul.f32 %v1374, 1.442695
  %v1381 = vpow.pop %v1380
  %v1382 = vmul.f32 %v1375, 1.442695
  %v1383 = vpow.pop %v1382
  %v1384 = vadd.f32 %v1377, 1.0
  %v1385 = vadd.f32 %v1379, 1.0
  %v1386 = vadd.f32 %v1381, 1.0
  %v1387 = vadd.f32 %v1383, 1.0
  %v1388 = vrcp.pop %v1384
  %v1389 = vrcp.pop %v1385
  %v1390 = vrcp.pop %v1386
  %v1391 = vrcp.pop %v1387
  %v1392 = vmul.f32 %v1358, %v1388
  %v1393 = vmul.f32 %v1361, %v1389
  %v1394 = vmul.f32 %v1366, %v1390
  %v1395 = vmul.f32 %v1369, %v1391
  %v1396 = vmul.f32 %v1392, %v692
  %v1397 = vmul.f32 %v1393, %v692
  %v1398 = vmul.f32 %v1394, %v692
  %v1399 = vmul.f32 %v1395, %v692
  %v1400 = vpack.c.bf16 %v1397, %v1396
  %v1401 = vpack.c.bf16 %v1399, %v1398
  %1402 = vmatprep.subr.bf16.mxu0 0
  %1403 = vmatpush1.bf16.msra.mxu0 %v731
  %1404 = vmatprep.subr.bf16.mxu0 0
  %1405 = vmatpush1.bf16.msra.mxu0 %v732
  %1406 = vmatprep.subr.bf16.mxu0 0
  %1407 = vmatpush1.bf16.msra.mxu0 %v733
  %1408 = vmatprep.subr.bf16.mxu0 0
  %1409 = vmatpush1.bf16.msra.mxu0 %v734
  %1410 = vmatprep.subr.bf16.mxu0 0
  %1411 = vmatpush1.bf16.msra.mxu0 %v735
  %1412 = vmatprep.subr.bf16.mxu0 0
  %1413 = vmatpush1.bf16.msra.mxu0 %v736
  %1414 = vmatprep.subr.bf16.mxu0 0
  %1415 = vmatpush1.bf16.msra.mxu0 %v737
  %1416 = vmatprep.subr.bf16.mxu0 0
  %1417 = vmatpush1.bf16.msra.mxu0 %v738
  %1418 = vmatprep.subr.bf16.mxu0 0
  %1419 = vmatpush1.bf16.msra.mxu0 0
  %1420 = vmatprep.subr.bf16.mxu0 0
  %1421 = vmatpush1.bf16.msra.mxu0 0
  %1422 = vmatprep.subr.bf16.mxu0 0
  %1423 = vmatpush1.bf16.msra.mxu0 0
  %1424 = vmatprep.subr.bf16.mxu0 0
  %1425 = vmatpush1.bf16.msra.mxu0 0
  %1426 = vmatprep.subr.bf16.mxu0 0
  %1427 = vmatpush1.bf16.msra.mxu0 0
  %1428 = vmatprep.subr.bf16.mxu0 0
  %1429 = vmatpush1.bf16.msra.mxu0 0
  %1430 = vmatprep.subr.bf16.mxu0 0
  %1431 = vmatpush1.bf16.msra.mxu0 0
  %1432 = vmatprep.subr.bf16.mxu0 0
  %1433 = vmatpush1.bf16.msra.mxu0 0
  %1434 = vmatprep.mubr.bf16.mxu0 0
  %1435 = vmatmul.mubr.bf16.gmra.mrb[0].mxu0 %v1400
  %v1436 = vpop.f32.mrb[0].mxu0
  %v1437 = vadd.f32 0.0, %v1436
  %v1438 = vpop.f32.mrb[0].mxu0
  %v1439 = vpop.f32.mrb[0].mxu0
  %v1440 = vadd.f32 0.0, %v1439
  %v1441 = vpop.f32.mrb[0].mxu0
  %1442 = vmatprep.mubr.bf16.mxu0 0
  %1443 = vmatmul.mubr.bf16.gmra.mrb[0].mxu0 %v1401
  %v1444 = vpop.f32.mrb[0].mxu0
  %v1445 = vadd.f32 0.0, %v1444
  %v1446 = vpop.f32.mrb[0].mxu0
  %v1447 = vpop.f32.mrb[0].mxu0
  %v1448 = vadd.f32 0.0, %v1447
  %v1449 = vpop.f32.mrb[0].mxu0
  %1450 = vdwg.mxu0
  %v1451 = vpack.c.bf16 %v1440, %v1437
  %v1452 = vpack.c.bf16 %v1448, %v1445
  %1453 = vset.pattern.permute.xlu0 2
  %1454 = vperm.xlu0 %1453, %v1017
  %v1455 = vpop.permute.xlu0 %1454
  %1457 = vset.pattern.permute.xlu0 2
  %1458 = vperm.xlu0 %1457, %v1018
  %v1459 = vpop.permute.xlu0 %1458
  %1461 = vset.pattern.permute.xlu0 2
  %1462 = vperm.xlu0 %1461, %v1019
  %v1463 = vpop.permute.xlu0 %1462
  %1465 = vset.pattern.permute.xlu0 2
  %1466 = vperm.xlu0 %1465, %v1020
  %v1467 = vpop.permute.xlu0 %1466
  %v1473 = vunpack.c.l.b16 %v1008
  %v1474 = vunpack.c.l.b16 %v1009
  %v1475 = vunpack.c.l.b16 %v1010
  %v1476 = vunpack.c.l.b16 %v1011
  %v1477 = vpack.c.b16 %v1474, %v1473
  %v1478 = vpack.c.b16 %v1476, %v1475
  %v1480 = vsel %vm824, %v1477, 0
  %v1483 = vsel %vm824, %v1478, 0
  %1485 = vmatprep.subr.bf16.mxu0 0
  %1486 = vmatpush1.bf16.msra.mxu0 %v1021
  %1487 = vmatprep.subr.bf16.mxu0 0
  %1488 = vmatpush1.bf16.msra.mxu0 %v1022
  %1489 = vmatprep.subr.bf16.mxu0 0
  %1490 = vmatpush1.bf16.msra.mxu0 %v1451
  %1491 = vmatprep.subr.bf16.mxu0 0
  %1492 = vmatpush1.bf16.msra.mxu0 %v1452
  %1493 = vmatprep.subr.bf16.mxu0 0
  %1494 = vmatpush1.bf16.msra.mxu0 0
  %1495 = vmatprep.subr.bf16.mxu0 0
  %1496 = vmatpush1.bf16.msra.mxu0 0
  %1497 = vmatprep.subr.bf16.mxu0 0
  %1498 = vmatpush1.bf16.msra.mxu0 0
  %1499 = vmatprep.subr.bf16.mxu0 0
  %1500 = vmatpush1.bf16.msra.mxu0 0
  %1501 = vmatprep.subr.bf16.mxu0 0
  %1502 = vmatpush1.bf16.msra.mxu0 0
  %1503 = vmatprep.subr.bf16.mxu0 0
  %1504 = vmatpush1.bf16.msra.mxu0 0
  %1505 = vmatprep.subr.bf16.mxu0 0
  %1506 = vmatpush1.bf16.msra.mxu0 0
  %1507 = vmatprep.subr.bf16.mxu0 0
  %1508 = vmatpush1.bf16.msra.mxu0 0
  %1509 = vmatprep.subr.bf16.mxu0 0
  %1510 = vmatpush1.bf16.msra.mxu0 0
  %1511 = vmatprep.subr.bf16.mxu0 0
  %1512 = vmatpush1.bf16.msra.mxu0 0
  %1513 = vmatprep.subr.bf16.mxu0 0
  %1514 = vmatpush1.bf16.msra.mxu0 0
  %1515 = vmatprep.subr.bf16.mxu0 0
  %1516 = vmatpush1.bf16.msra.mxu0 0
  %1517 = vmatprep.mubr.bf16.mxu0 0
  %1518 = vmatmul.mubr.bf16.gmra.mrb[0].mxu0 %v1480
  %v1519 = vpop.f32.mrb[0].mxu0
  %v1520 = vadd.f32 %v1455, %v1519
  %v1521 = vpop.f32.mrb[0].mxu0
  %v1522 = vpop.f32.mrb[0].mxu0
  %v1523 = vadd.f32 %v1459, %v1522
  %v1524 = vpop.f32.mrb[0].mxu0
  %1525 = vmatprep.mubr.bf16.mxu0 0
  %1526 = vmatmul.mubr.bf16.gmra.mrb[0].mxu0 %v1483
  %v1527 = vpop.f32.mrb[0].mxu0
  %v1528 = vadd.f32 %v1463, %v1527
  %v1529 = vpop.f32.mrb[0].mxu0
  %v1530 = vpop.f32.mrb[0].mxu0
  %v1531 = vadd.f32 %v1467, %v1530
  %v1532 = vpop.f32.mrb[0].mxu0
  %1533 = vdwg.mxu0
  %v1534 = vsub.f32 0.0, %v1520
  %v1535 = vsub.f32 0.0, %v1523
  %v1536 = vsub.f32 0.0, %v1528
  %v1537 = vsub.f32 0.0, %v1531
  %v1538 = vmul.f32 %v1534, 1.442695
  %v1539 = vpow.pop %v1538
  %v1540 = vmul.f32 %v1535, 1.442695
  %v1541 = vpow.pop %v1540
  %v1542 = vmul.f32 %v1536, 1.442695
  %v1543 = vpow.pop %v1542
  %v1544 = vmul.f32 %v1537, 1.442695
  %v1545 = vpow.pop %v1544
  %v1546 = vadd.f32 %v1539, 1.0
  %v1547 = vadd.f32 %v1541, 1.0
  %v1548 = vadd.f32 %v1543, 1.0
  %v1549 = vadd.f32 %v1545, 1.0
  %v1550 = vrcp.pop %v1546
  %v1551 = vrcp.pop %v1547
  %v1552 = vrcp.pop %v1548
  %v1553 = vrcp.pop %v1549
  %v1554 = vmul.f32 %v1520, %v1550
  %v1555 = vmul.f32 %v1523, %v1551
  %v1556 = vmul.f32 %v1528, %v1552
  %v1557 = vmul.f32 %v1531, %v1553
  %v1558 = vpack.c.bf16 %v1555, %v1554
  %v1559 = vpack.c.bf16 %v1557, %v1556
  %1560 = vset.pattern.permute.xlu0 3
  %1561 = vperm.xlu0 %1560, %v1017
  %v1562 = vpop.permute.xlu0 %1561
  %1564 = vset.pattern.permute.xlu0 3
  %1565 = vperm.xlu0 %1564, %v1018
  %v1566 = vpop.permute.xlu0 %1565
  %1568 = vset.pattern.permute.xlu0 3
  %1569 = vperm.xlu0 %1568, %v1019
  %v1570 = vpop.permute.xlu0 %1569
  %1572 = vset.pattern.permute.xlu0 3
  %1573 = vperm.xlu0 %1572, %v1020
  %v1574 = vpop.permute.xlu0 %1573
  %v1580 = vunpack.c.l.b16 %v1012
  %v1581 = vunpack.c.l.b16 %v1013
  %v1582 = vunpack.c.l.b16 %v1014
  %v1583 = vunpack.c.l.b16 %v1015
  %v1584 = vpack.c.b16 %v1581, %v1580
  %v1585 = vpack.c.b16 %v1583, %v1582
  %v1587 = vsel %vm315, %v1584, 0
  %v1590 = vsel %vm315, %v1585, 0
  %1592 = vmatprep.subr.bf16.mxu0 0
  %1593 = vmatpush1.bf16.msra.mxu0 %v1558
  %1594 = vmatprep.subr.bf16.mxu0 0
  %1595 = vmatpush1.bf16.msra.mxu0 %v1559
  %1596 = vmatprep.subr.bf16.mxu0 0
  %1597 = vmatpush1.bf16.msra.mxu0 0
  %1598 = vmatprep.subr.bf16.mxu0 0
  %1599 = vmatpush1.bf16.msra.mxu0 0
  %1600 = vmatprep.subr.bf16.mxu0 0
  %1601 = vmatpush1.bf16.msra.mxu0 0
  %1602 = vmatprep.subr.bf16.mxu0 0
  %1603 = vmatpush1.bf16.msra.mxu0 0
  %1604 = vmatprep.subr.bf16.mxu0 0
  %1605 = vmatpush1.bf16.msra.mxu0 0
  %1606 = vmatprep.subr.bf16.mxu0 0
  %1607 = vmatpush1.bf16.msra.mxu0 0
  %1608 = vmatprep.subr.bf16.mxu0 0
  %1609 = vmatpush1.bf16.msra.mxu0 0
  %1610 = vmatprep.subr.bf16.mxu0 0
  %1611 = vmatpush1.bf16.msra.mxu0 0
  %1612 = vmatprep.subr.bf16.mxu0 0
  %1613 = vmatpush1.bf16.msra.mxu0 0
  %1614 = vmatprep.subr.bf16.mxu0 0
  %1615 = vmatpush1.bf16.msra.mxu0 0
  %1616 = vmatprep.subr.bf16.mxu0 0
  %1617 = vmatpush1.bf16.msra.mxu0 0
  %1618 = vmatprep.subr.bf16.mxu0 0
  %1619 = vmatpush1.bf16.msra.mxu0 0
  %1620 = vmatprep.subr.bf16.mxu0 0
  %1621 = vmatpush1.bf16.msra.mxu0 0
  %1622 = vmatprep.subr.bf16.mxu0 0
  %1623 = vmatpush1.bf16.msra.mxu0 0
  %1624 = vmatprep.mubr.bf16.mxu0 0
  %1625 = vmatmul.mubr.bf16.gmra.mrb[0].mxu0 %v1587
  %v1626 = vpop.f32.mrb[0].mxu0
  %v1627 = vadd.f32 %v1562, %v1626
  %v1628 = vpop.f32.mrb[0].mxu0
  %v1629 = vpop.f32.mrb[0].mxu0
  %v1630 = vadd.f32 %v1566, %v1629
  %v1631 = vpop.f32.mrb[0].mxu0
  %1632 = vmatprep.mubr.bf16.mxu0 0
  %1633 = vmatmul.mubr.bf16.gmra.mrb[0].mxu0 %v1590
  %v1634 = vpop.f32.mrb[0].mxu0
  %v1635 = vadd.f32 %v1570, %v1634
  %v1636 = vpop.f32.mrb[0].mxu0
  %v1637 = vpop.f32.mrb[0].mxu0
  %v1638 = vadd.f32 %v1574, %v1637
  %v1639 = vpop.f32.mrb[0].mxu0
  %1640 = vdwg.mxu0
  %v1641 = vadd.f32 %v991, %v1627
  %v1642 = vadd.f32 %v992, %v1630
  %v1643 = vadd.f32 %v993, %v1635
  %v1644 = vadd.f32 %v994, %v1638
  %v1645 = vmul.f32 %v1641, %v31
  %v1646 = vmul.f32 %v1642, %v31
  %v1647 = vmul.f32 %v1643, %v31
  %v1648 = vmul.f32 %v1644, %v31
  %s1649 = scalar_lea.vmem %s4, 160
  %v1650 = vld [vmem:[%s1649] sm:$0xf]
  %v1651 = vld [vmem:[%s1649 + $0x4] sm:$0xf]
  %v1652 = vld [vmem:[%s1649 + $0x8] sm:$0xf]
  %v1653 = vld [vmem:[%s1649 + $0xc] sm:$0xf]
  %v1654 = vld [vmem:[%s1649 + $0x10] sm:$0xf]
  %v1655 = vld [vmem:[%s1649 + $0x14] sm:$0xf]
  %v1656 = vld [vmem:[%s1649 + $0x18] sm:$0xf]
  %v1657 = vld [vmem:[%s1649 + $0x1c] sm:$0xf]
  %v1658 = vld [vmem:[%s1649 + $0x20] sm:$0xf]
  %v1659 = vld [vmem:[%s1649 + $0x24] sm:$0xf]
  %v1660 = vld [vmem:[%s1649 + $0x28] sm:$0xf]
  %v1661 = vld [vmem:[%s1649 + $0x2c] sm:$0xf]
  %v1662 = vld [vmem:[%s1649 + $0x30] sm:$0xf]
  %v1663 = vld [vmem:[%s1649 + $0x34] sm:$0xf]
  %v1664 = vld [vmem:[%s1649 + $0x38] sm:$0xf]
  %v1665 = vld [vmem:[%s1649 + $0x3c] sm:$0xf]
  %v1666 = vld [vmem:[%s1649 + $0x40] sm:$0xf]
  %v1667 = vld [vmem:[%s1649 + $0x44] sm:$0xf]
  %v1668 = vld [vmem:[%s1649 + $0x48] sm:$0xf]
  %v1669 = vld [vmem:[%s1649 + $0x4c] sm:$0xf]
  %s1670 = scalar_lea.vmem %s5, 64
  %v1671 = vld [vmem:[%s1670] sm:$0xff]
  %v1672 = vld [vmem:[%s1670 + $0x8] sm:$0xff]
  %v1673 = vld [vmem:[%s1670 + $0x10] sm:$0xff]
  %v1674 = vld [vmem:[%s1670 + $0x18] sm:$0xff]
  %v1675 = vpack.c.bf16 %v1646, %v1645
  %v1676 = vpack.c.bf16 %v1648, %v1647
  %v1685 = vunpack.c.l.b16 %v1650
  %v1686 = vunpack.c.l.b16 %v1651
  %v1687 = vunpack.c.l.b16 %v1652
  %v1688 = vunpack.c.l.b16 %v1653
  %v1689 = vunpack.c.l.b16 %v1654
  %v1690 = vunpack.c.l.b16 %v1655
  %v1691 = vunpack.c.l.b16 %v1656
  %v1692 = vunpack.c.l.b16 %v1657
  %v1693 = vpack.c.b16 %v1686, %v1685
  %v1694 = vpack.c.b16 %v1688, %v1687
  %v1695 = vpack.c.b16 %v1690, %v1689
  %v1696 = vpack.c.b16 %v1692, %v1691
  %v1698 = vsel %vm315, %v1693, 0
  %v1701 = vsel %vm315, %v1694, 0
  %v1704 = vsel %vm315, %v1695, 0
  %v1707 = vsel %vm315, %v1696, 0
  %1709 = vmatprep.subr.bf16.mxu0 0
  %1710 = vmatpush1.bf16.msra.mxu0 %v1675
  %1711 = vmatprep.subr.bf16.mxu0 0
  %1712 = vmatpush1.bf16.msra.mxu0 %v1676
  %1713 = vmatprep.subr.bf16.mxu0 0
  %1714 = vmatpush1.bf16.msra.mxu0 0
  %1715 = vmatprep.subr.bf16.mxu0 0
  %1716 = vmatpush1.bf16.msra.mxu0 0
  %1717 = vmatprep.subr.bf16.mxu0 0
  %1718 = vmatpush1.bf16.msra.mxu0 0
  %1719 = vmatprep.subr.bf16.mxu0 0
  %1720 = vmatpush1.bf16.msra.mxu0 0
  %1721 = vmatprep.subr.bf16.mxu0 0
  %1722 = vmatpush1.bf16.msra.mxu0 0
  %1723 = vmatprep.subr.bf16.mxu0 0
  %1724 = vmatpush1.bf16.msra.mxu0 0
  %1725 = vmatprep.subr.bf16.mxu0 0
  %1726 = vmatpush1.bf16.msra.mxu0 0
  %1727 = vmatprep.subr.bf16.mxu0 0
  %1728 = vmatpush1.bf16.msra.mxu0 0
  %1729 = vmatprep.subr.bf16.mxu0 0
  %1730 = vmatpush1.bf16.msra.mxu0 0
  %1731 = vmatprep.subr.bf16.mxu0 0
  %1732 = vmatpush1.bf16.msra.mxu0 0
  %1733 = vmatprep.subr.bf16.mxu0 0
  %1734 = vmatpush1.bf16.msra.mxu0 0
  %1735 = vmatprep.subr.bf16.mxu0 0
  %1736 = vmatpush1.bf16.msra.mxu0 0
  %1737 = vmatprep.subr.bf16.mxu0 0
  %1738 = vmatpush1.bf16.msra.mxu0 0
  %1739 = vmatprep.subr.bf16.mxu0 0
  %1740 = vmatpush1.bf16.msra.mxu0 0
  %1741 = vmatprep.mubr.bf16.mxu0 0
  %1742 = vmatmul.mubr.bf16.gmra.mrb[0].mxu0 %v1698
  %v1743 = vpop.f32.mrb[0].mxu0
  %v1744 = vadd.f32 0.0, %v1743
  %v1745 = vpop.f32.mrb[0].mxu0
  %v1746 = vpop.f32.mrb[0].mxu0
  %v1747 = vadd.f32 0.0, %v1746
  %v1748 = vpop.f32.mrb[0].mxu0
  %1749 = vmatprep.mubr.bf16.mxu0 0
  %1750 = vmatmul.mubr.bf16.gmra.mrb[0].mxu0 %v1701
  %v1751 = vpop.f32.mrb[0].mxu0
  %v1752 = vadd.f32 0.0, %v1751
  %v1753 = vpop.f32.mrb[0].mxu0
  %v1754 = vpop.f32.mrb[0].mxu0
  %v1755 = vadd.f32 0.0, %v1754
  %v1756 = vpop.f32.mrb[0].mxu0
  %1757 = vmatprep.mubr.bf16.mxu0 0
  %1758 = vmatmul.mubr.bf16.gmra.mrb[0].mxu0 %v1704
  %v1759 = vpop.f32.mrb[0].mxu0
  %v1760 = vadd.f32 0.0, %v1759
  %v1761 = vpop.f32.mrb[0].mxu0
  %v1762 = vpop.f32.mrb[0].mxu0
  %v1763 = vadd.f32 0.0, %v1762
  %v1764 = vpop.f32.mrb[0].mxu0
  %1765 = vmatprep.mubr.bf16.mxu0 0
  %1766 = vmatmul.mubr.bf16.gmra.mrb[0].mxu0 %v1707
  %v1767 = vpop.f32.mrb[0].mxu0
  %v1768 = vadd.f32 0.0, %v1767
  %v1769 = vpop.f32.mrb[0].mxu0
  %v1770 = vpop.f32.mrb[0].mxu0
  %v1771 = vadd.f32 0.0, %v1770
  %v1772 = vpop.f32.mrb[0].mxu0
  %1773 = vdwg.mxu0
  %1778 = vrot.lane.b32.xlu0 %v1760, 16
  %v1779 = vpop.permute.xlu0 %1778
  %1780 = vrot.lane.b32.xlu0 %v1763, 16
  %v1781 = vpop.permute.xlu0 %1780
  %1782 = vrot.lane.b32.xlu0 %v1768, 16
  %v1783 = vpop.permute.xlu0 %1782
  %1784 = vrot.lane.b32.xlu0 %v1771, 16
  %v1785 = vpop.permute.xlu0 %1784
  %v1790 = vsel %vm188, %v1744, %v1779
  %v1791 = vsel %vm188, %v1747, %v1781
  %v1792 = vsel %vm188, %v1752, %v1783
  %v1793 = vsel %vm188, %v1755, %v1785
  %v1794 = vpack.c.bf16 %v1791, %v1790
  %v1795 = vpack.c.bf16 %v1793, %v1792
  %1797 = vset.pattern.permute.xlu0 4
  %1798 = vperm.xlu0 %1797, %v1671
  %v1799 = vpop.permute.xlu0 %1798
  %1802 = vset.pattern.permute.xlu0 4
  %1803 = vperm.xlu0 %1802, %v1672
  %v1804 = vpop.permute.xlu0 %1803
  %1807 = vset.pattern.permute.xlu0 4
  %1808 = vperm.xlu0 %1807, %v1673
  %v1809 = vpop.permute.xlu0 %1808
  %1812 = vset.pattern.permute.xlu0 4
  %1813 = vperm.xlu0 %1812, %v1674
  %v1814 = vpop.permute.xlu0 %1813
  %v1816 = vmul.f32 %v1799, %v438
  %v1817 = vmul.f32 %v1804, %v438
  %v1818 = vmul.f32 %v1809, %v438
  %v1819 = vmul.f32 %v1814, %v438
  %v1821 = vsel %vm315, %v1794, 0
  %v1824 = vsel %vm315, %v1795, 0
  %1826 = vmatprep.subr.bf16.mxu0 0
  %1827 = vmatpush1.bf16.msra.mxu0 %v451
  %1828 = vmatprep.subr.bf16.mxu0 0
  %1829 = vmatpush1.bf16.msra.mxu0 %v452
  %1830 = vmatprep.subr.bf16.mxu0 0
  %1831 = vmatpush1.bf16.msra.mxu0 0
  %1832 = vmatprep.subr.bf16.mxu0 0
  %1833 = vmatpush1.bf16.msra.mxu0 0
  %1834 = vmatprep.subr.bf16.mxu0 0
  %1835 = vmatpush1.bf16.msra.mxu0 0
  %1836 = vmatprep.subr.bf16.mxu0 0
  %1837 = vmatpush1.bf16.msra.mxu0 0
  %1838 = vmatprep.subr.bf16.mxu0 0
  %1839 = vmatpush1.bf16.msra.mxu0 0
  %1840 = vmatprep.subr.bf16.mxu0 0
  %1841 = vmatpush1.bf16.msra.mxu0 0
  %1842 = vmatprep.subr.bf16.mxu0 0
  %1843 = vmatpush1.bf16.msra.mxu0 0
  %1844 = vmatprep.subr.bf16.mxu0 0
  %1845 = vmatpush1.bf16.msra.mxu0 0
  %1846 = vmatprep.subr.bf16.mxu0 0
  %1847 = vmatpush1.bf16.msra.mxu0 0
  %1848 = vmatprep.subr.bf16.mxu0 0
  %1849 = vmatpush1.bf16.msra.mxu0 0
  %1850 = vmatprep.subr.bf16.mxu0 0
  %1851 = vmatpush1.bf16.msra.mxu0 0
  %1852 = vmatprep.subr.bf16.mxu0 0
  %1853 = vmatpush1.bf16.msra.mxu0 0
  %1854 = vmatprep.subr.bf16.mxu0 0
  %1855 = vmatpush1.bf16.msra.mxu0 0
  %1856 = vmatprep.subr.bf16.mxu0 0
  %1857 = vmatpush1.bf16.msra.mxu0 0
  %1858 = vmatprep.mubr.bf16.mxu0 0
  %1859 = vmatmul.mubr.bf16.gmra.mrb[0].mxu0 %v1821
  %v1860 = vpop.f32.mrb[0].mxu0
  %v1861 = vadd.f32 %v1816, %v1860
  %v1862 = vpop.f32.mrb[0].mxu0
  %v1863 = vpop.f32.mrb[0].mxu0
  %v1864 = vadd.f32 %v1817, %v1863
  %v1865 = vpop.f32.mrb[0].mxu0
  %1866 = vmatprep.mubr.bf16.mxu0 0
  %1867 = vmatmul.mubr.bf16.gmra.mrb[0].mxu0 %v1824
  %v1868 = vpop.f32.mrb[0].mxu0
  %v1869 = vadd.f32 %v1818, %v1868
  %v1870 = vpop.f32.mrb[0].mxu0
  %v1871 = vpop.f32.mrb[0].mxu0
  %v1872 = vadd.f32 %v1819, %v1871
  %v1873 = vpop.f32.mrb[0].mxu0
  %1874 = vdwg.mxu0
  %1875 = vset.pattern.permute.xlu0 5
  %1876 = vperm.xlu0 %1875, %v1671
  %v1877 = vpop.permute.xlu0 %1876
  %1879 = vset.pattern.permute.xlu0 5
  %1880 = vperm.xlu0 %1879, %v1672
  %v1881 = vpop.permute.xlu0 %1880
  %1883 = vset.pattern.permute.xlu0 5
  %1884 = vperm.xlu0 %1883, %v1673
  %v1885 = vpop.permute.xlu0 %1884
  %1887 = vset.pattern.permute.xlu0 5
  %1888 = vperm.xlu0 %1887, %v1674
  %v1889 = vpop.permute.xlu0 %1888
  %v1891 = vmul.f32 %v1877, %v529
  %v1892 = vmul.f32 %v1881, %v529
  %v1893 = vmul.f32 %v1885, %v529
  %v1894 = vmul.f32 %v1889, %v529
  %v1895 = vadd.f32 %v1861, %v1891
  %v1896 = vadd.f32 %v1864, %v1892
  %v1897 = vadd.f32 %v1869, %v1893
  %v1898 = vadd.f32 %v1872, %v1894
  %1899 = vset.pattern.permute.xlu0 0
  %1900 = vperm.xlu0 %1899, %v1671
  %v1901 = vpop.permute.xlu0 %1900
  %1903 = vset.pattern.permute.xlu0 0
  %1904 = vperm.xlu0 %1903, %v1672
  %v1905 = vpop.permute.xlu0 %1904
  %1907 = vset.pattern.permute.xlu0 0
  %1908 = vperm.xlu0 %1907, %v1673
  %v1909 = vpop.permute.xlu0 %1908
  %1911 = vset.pattern.permute.xlu0 0
  %1912 = vperm.xlu0 %1911, %v1674
  %v1913 = vpop.permute.xlu0 %1912
  %v1915 = vadd.f32 %v1895, %v1901
  %v1916 = vadd.f32 %v1896, %v1905
  %v1917 = vadd.f32 %v1897, %v1909
  %v1918 = vadd.f32 %v1898, %v1913
  %v1919 = vsub.f32 0.0, %v1915
  %v1920 = vsub.f32 0.0, %v1916
  %v1921 = vsub.f32 0.0, %v1917
  %v1922 = vsub.f32 0.0, %v1918
  %v1923 = vmul.f32 %v1919, 1.442695
  %v1924 = vpow.pop %v1923
  %v1925 = vmul.f32 %v1920, 1.442695
  %v1926 = vpow.pop %v1925
  %v1927 = vmul.f32 %v1921, 1.442695
  %v1928 = vpow.pop %v1927
  %v1929 = vmul.f32 %v1922, 1.442695
  %v1930 = vpow.pop %v1929
  %v1931 = vadd.f32 %v1924, 1.0
  %v1932 = vadd.f32 %v1926, 1.0
  %v1933 = vadd.f32 %v1928, 1.0
  %v1934 = vadd.f32 %v1930, 1.0
  %v1935 = vrcp.pop %v1931
  %v1936 = vrcp.pop %v1932
  %v1937 = vrcp.pop %v1933
  %v1938 = vrcp.pop %v1934
  %v1939 = vmul.f32 %v1915, %v1935
  %v1940 = vmul.f32 %v1916, %v1936
  %v1941 = vmul.f32 %v1917, %v1937
  %v1942 = vmul.f32 %v1918, %v1938
  %v1943 = vpack.c.bf16 %v1940, %v1939
  %v1944 = vpack.c.bf16 %v1942, %v1941
  %1945 = vset.pattern.permute.xlu0 1
  %1946 = vperm.xlu0 %1945, %v1671
  %v1947 = vpop.permute.xlu0 %1946
  %1949 = vset.pattern.permute.xlu0 1
  %1950 = vperm.xlu0 %1949, %v1672
  %v1951 = vpop.permute.xlu0 %1950
  %1953 = vset.pattern.permute.xlu0 1
  %1954 = vperm.xlu0 %1953, %v1673
  %v1955 = vpop.permute.xlu0 %1954
  %1957 = vset.pattern.permute.xlu0 1
  %1958 = vperm.xlu0 %1957, %v1674
  %v1959 = vpop.permute.xlu0 %1958
  %v1965 = vunpack.c.l.b16 %v1658
  %v1966 = vunpack.c.l.b16 %v1659
  %v1967 = vunpack.c.l.b16 %v1660
  %v1968 = vunpack.c.l.b16 %v1661
  %v1969 = vpack.c.b16 %v1966, %v1965
  %v1970 = vpack.c.b16 %v1968, %v1967
  %v1972 = vsel %vm315, %v1969, 0
  %v1975 = vsel %vm315, %v1970, 0
  %1977 = vmatprep.subr.bf16.mxu0 0
  %1978 = vmatpush1.bf16.msra.mxu0 %v1943
  %1979 = vmatprep.subr.bf16.mxu0 0
  %1980 = vmatpush1.bf16.msra.mxu0 %v1944
  %1981 = vmatprep.subr.bf16.mxu0 0
  %1982 = vmatpush1.bf16.msra.mxu0 0
  %1983 = vmatprep.subr.bf16.mxu0 0
  %1984 = vmatpush1.bf16.msra.mxu0 0
  %1985 = vmatprep.subr.bf16.mxu0 0
  %1986 = vmatpush1.bf16.msra.mxu0 0
  %1987 = vmatprep.subr.bf16.mxu0 0
  %1988 = vmatpush1.bf16.msra.mxu0 0
  %1989 = vmatprep.subr.bf16.mxu0 0
  %1990 = vmatpush1.bf16.msra.mxu0 0
  %1991 = vmatprep.subr.bf16.mxu0 0
  %1992 = vmatpush1.bf16.msra.mxu0 0
  %1993 = vmatprep.subr.bf16.mxu0 0
  %1994 = vmatpush1.bf16.msra.mxu0 0
  %1995 = vmatprep.subr.bf16.mxu0 0
  %1996 = vmatpush1.bf16.msra.mxu0 0
  %1997 = vmatprep.subr.bf16.mxu0 0
  %1998 = vmatpush1.bf16.msra.mxu0 0
  %1999 = vmatprep.subr.bf16.mxu0 0
  %2000 = vmatpush1.bf16.msra.mxu0 0
  %2001 = vmatprep.subr.bf16.mxu0 0
  %2002 = vmatpush1.bf16.msra.mxu0 0
  %2003 = vmatprep.subr.bf16.mxu0 0
  %2004 = vmatpush1.bf16.msra.mxu0 0
  %2005 = vmatprep.subr.bf16.mxu0 0
  %2006 = vmatpush1.bf16.msra.mxu0 0
  %2007 = vmatprep.subr.bf16.mxu0 0
  %2008 = vmatpush1.bf16.msra.mxu0 0
  %2009 = vmatprep.mubr.bf16.mxu0 0
  %2010 = vmatmul.mubr.bf16.gmra.mrb[0].mxu0 %v1972
  %v2011 = vpop.f32.mrb[0].mxu0
  %v2012 = vadd.f32 %v1947, %v2011
  %v2013 = vpop.f32.mrb[0].mxu0
  %v2014 = vpop.f32.mrb[0].mxu0
  %v2015 = vadd.f32 %v1951, %v2014
  %v2016 = vpop.f32.mrb[0].mxu0
  %2017 = vmatprep.mubr.bf16.mxu0 0
  %2018 = vmatmul.mubr.bf16.gmra.mrb[0].mxu0 %v1975
  %v2019 = vpop.f32.mrb[0].mxu0
  %v2020 = vadd.f32 %v1955, %v2019
  %v2021 = vpop.f32.mrb[0].mxu0
  %v2022 = vpop.f32.mrb[0].mxu0
  %v2023 = vadd.f32 %v1959, %v2022
  %v2024 = vpop.f32.mrb[0].mxu0
  %2025 = vdwg.mxu0
  %v2026 = vsub.f32 0.0, %v2012
  %v2027 = vsub.f32 0.0, %v2015
  %v2028 = vsub.f32 0.0, %v2020
  %v2029 = vsub.f32 0.0, %v2023
  %v2030 = vmul.f32 %v2026, 1.442695
  %v2031 = vpow.pop %v2030
  %v2032 = vmul.f32 %v2027, 1.442695
  %v2033 = vpow.pop %v2032
  %v2034 = vmul.f32 %v2028, 1.442695
  %v2035 = vpow.pop %v2034
  %v2036 = vmul.f32 %v2029, 1.442695
  %v2037 = vpow.pop %v2036
  %v2038 = vadd.f32 %v2031, 1.0
  %v2039 = vadd.f32 %v2033, 1.0
  %v2040 = vadd.f32 %v2035, 1.0
  %v2041 = vadd.f32 %v2037, 1.0
  %v2042 = vrcp.pop %v2038
  %v2043 = vrcp.pop %v2039
  %v2044 = vrcp.pop %v2040
  %v2045 = vrcp.pop %v2041
  %v2046 = vmul.f32 %v2012, %v2042
  %v2047 = vmul.f32 %v2015, %v2043
  %v2048 = vmul.f32 %v2020, %v2044
  %v2049 = vmul.f32 %v2023, %v2045
  %v2050 = vmul.f32 %v2046, %v692
  %v2051 = vmul.f32 %v2047, %v692
  %v2052 = vmul.f32 %v2048, %v692
  %v2053 = vmul.f32 %v2049, %v692
  %v2054 = vpack.c.bf16 %v2051, %v2050
  %v2055 = vpack.c.bf16 %v2053, %v2052
  %2056 = vmatprep.subr.bf16.mxu0 0
  %2057 = vmatpush1.bf16.msra.mxu0 %v731
  %2058 = vmatprep.subr.bf16.mxu0 0
  %2059 = vmatpush1.bf16.msra.mxu0 %v732
  %2060 = vmatprep.subr.bf16.mxu0 0
  %2061 = vmatpush1.bf16.msra.mxu0 %v733
  %2062 = vmatprep.subr.bf16.mxu0 0
  %2063 = vmatpush1.bf16.msra.mxu0 %v734
  %2064 = vmatprep.subr.bf16.mxu0 0
  %2065 = vmatpush1.bf16.msra.mxu0 %v735
  %2066 = vmatprep.subr.bf16.mxu0 0
  %2067 = vmatpush1.bf16.msra.mxu0 %v736
  %2068 = vmatprep.subr.bf16.mxu0 0
  %2069 = vmatpush1.bf16.msra.mxu0 %v737
  %2070 = vmatprep.subr.bf16.mxu0 0
  %2071 = vmatpush1.bf16.msra.mxu0 %v738
  %2072 = vmatprep.subr.bf16.mxu0 0
  %2073 = vmatpush1.bf16.msra.mxu0 0
  %2074 = vmatprep.subr.bf16.mxu0 0
  %2075 = vmatpush1.bf16.msra.mxu0 0
  %2076 = vmatprep.subr.bf16.mxu0 0
  %2077 = vmatpush1.bf16.msra.mxu0 0
  %2078 = vmatprep.subr.bf16.mxu0 0
  %2079 = vmatpush1.bf16.msra.mxu0 0
  %2080 = vmatprep.subr.bf16.mxu0 0
  %2081 = vmatpush1.bf16.msra.mxu0 0
  %2082 = vmatprep.subr.bf16.mxu0 0
  %2083 = vmatpush1.bf16.msra.mxu0 0
  %2084 = vmatprep.subr.bf16.mxu0 0
  %2085 = vmatpush1.bf16.msra.mxu0 0
  %2086 = vmatprep.subr.bf16.mxu0 0
  %2087 = vmatpush1.bf16.msra.mxu0 0
  %2088 = vmatprep.mubr.bf16.mxu0 0
  %2089 = vmatmul.mubr.bf16.gmra.mrb[0].mxu0 %v2054
  %v2090 = vpop.f32.mrb[0].mxu0
  %v2091 = vadd.f32 0.0, %v2090
  %v2092 = vpop.f32.mrb[0].mxu0
  %v2093 = vpop.f32.mrb[0].mxu0
  %v2094 = vadd.f32 0.0, %v2093
  %v2095 = vpop.f32.mrb[0].mxu0
  %2096 = vmatprep.mubr.bf16.mxu0 0
  %2097 = vmatmul.mubr.bf16.gmra.mrb[0].mxu0 %v2055
  %v2098 = vpop.f32.mrb[0].mxu0
  %v2099 = vadd.f32 0.0, %v2098
  %v2100 = vpop.f32.mrb[0].mxu0
  %v2101 = vpop.f32.mrb[0].mxu0
  %v2102 = vadd.f32 0.0, %v2101
  %v2103 = vpop.f32.mrb[0].mxu0
  %2104 = vdwg.mxu0
  %v2105 = vpack.c.bf16 %v2094, %v2091
  %v2106 = vpack.c.bf16 %v2102, %v2099
  %2107 = vset.pattern.permute.xlu0 2
  %2108 = vperm.xlu0 %2107, %v1671
  %v2109 = vpop.permute.xlu0 %2108
  %2111 = vset.pattern.permute.xlu0 2
  %2112 = vperm.xlu0 %2111, %v1672
  %v2113 = vpop.permute.xlu0 %2112
  %2115 = vset.pattern.permute.xlu0 2
  %2116 = vperm.xlu0 %2115, %v1673
  %v2117 = vpop.permute.xlu0 %2116
  %2119 = vset.pattern.permute.xlu0 2
  %2120 = vperm.xlu0 %2119, %v1674
  %v2121 = vpop.permute.xlu0 %2120
  %v2127 = vunpack.c.l.b16 %v1662
  %v2128 = vunpack.c.l.b16 %v1663
  %v2129 = vunpack.c.l.b16 %v1664
  %v2130 = vunpack.c.l.b16 %v1665
  %v2131 = vpack.c.b16 %v2128, %v2127
  %v2132 = vpack.c.b16 %v2130, %v2129
  %v2134 = vsel %vm824, %v2131, 0
  %v2137 = vsel %vm824, %v2132, 0
  %2139 = vmatprep.subr.bf16.mxu0 0
  %2140 = vmatpush1.bf16.msra.mxu0 %v1675
  %2141 = vmatprep.subr.bf16.mxu0 0
  %2142 = vmatpush1.bf16.msra.mxu0 %v1676
  %2143 = vmatprep.subr.bf16.mxu0 0
  %2144 = vmatpush1.bf16.msra.mxu0 %v2105
  %2145 = vmatprep.subr.bf16.mxu0 0
  %2146 = vmatpush1.bf16.msra.mxu0 %v2106
  %2147 = vmatprep.subr.bf16.mxu0 0
  %2148 = vmatpush1.bf16.msra.mxu0 0
  %2149 = vmatprep.subr.bf16.mxu0 0
  %2150 = vmatpush1.bf16.msra.mxu0 0
  %2151 = vmatprep.subr.bf16.mxu0 0
  %2152 = vmatpush1.bf16.msra.mxu0 0
  %2153 = vmatprep.subr.bf16.mxu0 0
  %2154 = vmatpush1.bf16.msra.mxu0 0
  %2155 = vmatprep.subr.bf16.mxu0 0
  %2156 = vmatpush1.bf16.msra.mxu0 0
  %2157 = vmatprep.subr.bf16.mxu0 0
  %2158 = vmatpush1.bf16.msra.mxu0 0
  %2159 = vmatprep.subr.bf16.mxu0 0
  %2160 = vmatpush1.bf16.msra.mxu0 0
  %2161 = vmatprep.subr.bf16.mxu0 0
  %2162 = vmatpush1.bf16.msra.mxu0 0
  %2163 = vmatprep.subr.bf16.mxu0 0
  %2164 = vmatpush1.bf16.msra.mxu0 0
  %2165 = vmatprep.subr.bf16.mxu0 0
  %2166 = vmatpush1.bf16.msra.mxu0 0
  %2167 = vmatprep.subr.bf16.mxu0 0
  %2168 = vmatpush1.bf16.msra.mxu0 0
  %2169 = vmatprep.subr.bf16.mxu0 0
  %2170 = vmatpush1.bf16.msra.mxu0 0
  %2171 = vmatprep.mubr.bf16.mxu0 0
  %2172 = vmatmul.mubr.bf16.gmra.mrb[0].mxu0 %v2134
  %v2173 = vpop.f32.mrb[0].mxu0
  %v2174 = vadd.f32 %v2109, %v2173
  %v2175 = vpop.f32.mrb[0].mxu0
  %v2176 = vpop.f32.mrb[0].mxu0
  %v2177 = vadd.f32 %v2113, %v2176
  %v2178 = vpop.f32.mrb[0].mxu0
  %2179 = vmatprep.mubr.bf16.mxu0 0
  %2180 = vmatmul.mubr.bf16.gmra.mrb[0].mxu0 %v2137
  %v2181 = vpop.f32.mrb[0].mxu0
  %v2182 = vadd.f32 %v2117, %v2181
  %v2183 = vpop.f32.mrb[0].mxu0
  %v2184 = vpop.f32.mrb[0].mxu0
  %v2185 = vadd.f32 %v2121, %v2184
  %v2186 = vpop.f32.mrb[0].mxu0
  %2187 = vdwg.mxu0
  %v2188 = vsub.f32 0.0, %v2174
  %v2189 = vsub.f32 0.0, %v2177
  %v2190 = vsub.f32 0.0, %v2182
  %v2191 = vsub.f32 0.0, %v2185
  %v2192 = vmul.f32 %v2188, 1.442695
  %v2193 = vpow.pop %v2192
  %v2194 = vmul.f32 %v2189, 1.442695
  %v2195 = vpow.pop %v2194
  %v2196 = vmul.f32 %v2190, 1.442695
  %v2197 = vpow.pop %v2196
  %v2198 = vmul.f32 %v2191, 1.442695
  %v2199 = vpow.pop %v2198
  %v2200 = vadd.f32 %v2193, 1.0
  %v2201 = vadd.f32 %v2195, 1.0
  %v2202 = vadd.f32 %v2197, 1.0
  %v2203 = vadd.f32 %v2199, 1.0
  %v2204 = vrcp.pop %v2200
  %v2205 = vrcp.pop %v2201
  %v2206 = vrcp.pop %v2202
  %v2207 = vrcp.pop %v2203
  %v2208 = vmul.f32 %v2174, %v2204
  %v2209 = vmul.f32 %v2177, %v2205
  %v2210 = vmul.f32 %v2182, %v2206
  %v2211 = vmul.f32 %v2185, %v2207
  %v2212 = vpack.c.bf16 %v2209, %v2208
  %v2213 = vpack.c.bf16 %v2211, %v2210
  %2214 = vset.pattern.permute.xlu0 3
  %2215 = vperm.xlu0 %2214, %v1671
  %v2216 = vpop.permute.xlu0 %2215
  %2218 = vset.pattern.permute.xlu0 3
  %2219 = vperm.xlu0 %2218, %v1672
  %v2220 = vpop.permute.xlu0 %2219
  %2222 = vset.pattern.permute.xlu0 3
  %2223 = vperm.xlu0 %2222, %v1673
  %v2224 = vpop.permute.xlu0 %2223
  %2226 = vset.pattern.permute.xlu0 3
  %2227 = vperm.xlu0 %2226, %v1674
  %v2228 = vpop.permute.xlu0 %2227
  %v2234 = vunpack.c.l.b16 %v1666
  %v2235 = vunpack.c.l.b16 %v1667
  %v2236 = vunpack.c.l.b16 %v1668
  %v2237 = vunpack.c.l.b16 %v1669
  %v2238 = vpack.c.b16 %v2235, %v2234
  %v2239 = vpack.c.b16 %v2237, %v2236
  %v2241 = vsel %vm315, %v2238, 0
  %v2244 = vsel %vm315, %v2239, 0
  %2246 = vmatprep.subr.bf16.mxu0 0
  %2247 = vmatpush1.bf16.msra.mxu0 %v2212
  %2248 = vmatprep.subr.bf16.mxu0 0
  %2249 = vmatpush1.bf16.msra.mxu0 %v2213
  %2250 = vmatprep.subr.bf16.mxu0 0
  %2251 = vmatpush1.bf16.msra.mxu0 0
  %2252 = vmatprep.subr.bf16.mxu0 0
  %2253 = vmatpush1.bf16.msra.mxu0 0
  %2254 = vmatprep.subr.bf16.mxu0 0
  %2255 = vmatpush1.bf16.msra.mxu0 0
  %2256 = vmatprep.subr.bf16.mxu0 0
  %2257 = vmatpush1.bf16.msra.mxu0 0
  %2258 = vmatprep.subr.bf16.mxu0 0
  %2259 = vmatpush1.bf16.msra.mxu0 0
  %2260 = vmatprep.subr.bf16.mxu0 0
  %2261 = vmatpush1.bf16.msra.mxu0 0
  %2262 = vmatprep.subr.bf16.mxu0 0
  %2263 = vmatpush1.bf16.msra.mxu0 0
  %2264 = vmatprep.subr.bf16.mxu0 0
  %2265 = vmatpush1.bf16.msra.mxu0 0
  %2266 = vmatprep.subr.bf16.mxu0 0
  %2267 = vmatpush1.bf16.msra.mxu0 0
  %2268 = vmatprep.subr.bf16.mxu0 0
  %2269 = vmatpush1.bf16.msra.mxu0 0
  %2270 = vmatprep.subr.bf16.mxu0 0
  %2271 = vmatpush1.bf16.msra.mxu0 0
  %2272 = vmatprep.subr.bf16.mxu0 0
  %2273 = vmatpush1.bf16.msra.mxu0 0
  %2274 = vmatprep.subr.bf16.mxu0 0
  %2275 = vmatpush1.bf16.msra.mxu0 0
  %2276 = vmatprep.subr.bf16.mxu0 0
  %2277 = vmatpush1.bf16.msra.mxu0 0
  %2278 = vmatprep.mubr.bf16.mxu0 0
  %2279 = vmatmul.mubr.bf16.gmra.mrb[0].mxu0 %v2241
  %v2280 = vpop.f32.mrb[0].mxu0
  %v2281 = vadd.f32 %v2216, %v2280
  %v2282 = vpop.f32.mrb[0].mxu0
  %v2283 = vpop.f32.mrb[0].mxu0
  %v2284 = vadd.f32 %v2220, %v2283
  %v2285 = vpop.f32.mrb[0].mxu0
  %2286 = vmatprep.mubr.bf16.mxu0 0
  %2287 = vmatmul.mubr.bf16.gmra.mrb[0].mxu0 %v2244
  %v2288 = vpop.f32.mrb[0].mxu0
  %v2289 = vadd.f32 %v2224, %v2288
  %v2290 = vpop.f32.mrb[0].mxu0
  %v2291 = vpop.f32.mrb[0].mxu0
  %v2292 = vadd.f32 %v2228, %v2291
  %v2293 = vpop.f32.mrb[0].mxu0
  %2294 = vdwg.mxu0
  %v2295 = vadd.f32 %v1645, %v2281
  %v2296 = vadd.f32 %v1646, %v2284
  %v2297 = vadd.f32 %v1647, %v2289
  %v2298 = vadd.f32 %v1648, %v2292
  %v2299 = vmul.f32 %v2295, %v31
  %v2300 = vmul.f32 %v2296, %v31
  %v2301 = vmul.f32 %v2297, %v31
  %v2302 = vmul.f32 %v2298, %v31
  %s2303 = scalar_lea.vmem %s4, 240
  %v2304 = vld [vmem:[%s2303] sm:$0xf]
  %v2305 = vld [vmem:[%s2303 + $0x4] sm:$0xf]
  %v2306 = vld [vmem:[%s2303 + $0x8] sm:$0xf]
  %v2307 = vld [vmem:[%s2303 + $0xc] sm:$0xf]
  %v2308 = vld [vmem:[%s2303 + $0x10] sm:$0xf]
  %v2309 = vld [vmem:[%s2303 + $0x14] sm:$0xf]
  %v2310 = vld [vmem:[%s2303 + $0x18] sm:$0xf]
  %v2311 = vld [vmem:[%s2303 + $0x1c] sm:$0xf]
  %v2312 = vld [vmem:[%s2303 + $0x20] sm:$0xf]
  %v2313 = vld [vmem:[%s2303 + $0x24] sm:$0xf]
  %v2314 = vld [vmem:[%s2303 + $0x28] sm:$0xf]
  %v2315 = vld [vmem:[%s2303 + $0x2c] sm:$0xf]
  %v2316 = vld [vmem:[%s2303 + $0x30] sm:$0xf]
  %v2317 = vld [vmem:[%s2303 + $0x34] sm:$0xf]
  %v2318 = vld [vmem:[%s2303 + $0x38] sm:$0xf]
  %v2319 = vld [vmem:[%s2303 + $0x3c] sm:$0xf]
  %v2320 = vld [vmem:[%s2303 + $0x40] sm:$0xf]
  %v2321 = vld [vmem:[%s2303 + $0x44] sm:$0xf]
  %v2322 = vld [vmem:[%s2303 + $0x48] sm:$0xf]
  %v2323 = vld [vmem:[%s2303 + $0x4c] sm:$0xf]
  %s2324 = scalar_lea.vmem %s5, 96
  %v2325 = vld [vmem:[%s2324] sm:$0xff]
  %v2326 = vld [vmem:[%s2324 + $0x8] sm:$0xff]
  %v2327 = vld [vmem:[%s2324 + $0x10] sm:$0xff]
  %v2328 = vld [vmem:[%s2324 + $0x18] sm:$0xff]
  %v2329 = vpack.c.bf16 %v2300, %v2299
  %v2330 = vpack.c.bf16 %v2302, %v2301
  %v2339 = vunpack.c.l.b16 %v2304
  %v2340 = vunpack.c.l.b16 %v2305
  %v2341 = vunpack.c.l.b16 %v2306
  %v2342 = vunpack.c.l.b16 %v2307
  %v2343 = vunpack.c.l.b16 %v2308
  %v2344 = vunpack.c.l.b16 %v2309
  %v2345 = vunpack.c.l.b16 %v2310
  %v2346 = vunpack.c.l.b16 %v2311
  %v2347 = vpack.c.b16 %v2340, %v2339
  %v2348 = vpack.c.b16 %v2342, %v2341
  %v2349 = vpack.c.b16 %v2344, %v2343
  %v2350 = vpack.c.b16 %v2346, %v2345
  %v2352 = vsel %vm315, %v2347, 0
  %v2355 = vsel %vm315, %v2348, 0
  %v2358 = vsel %vm315, %v2349, 0
  %v2361 = vsel %vm315, %v2350, 0
  %2363 = vmatprep.subr.bf16.mxu0 0
  %2364 = vmatpush1.bf16.msra.mxu0 %v2329
  %2365 = vmatprep.subr.bf16.mxu0 0
  %2366 = vmatpush1.bf16.msra.mxu0 %v2330
  %2367 = vmatprep.subr.bf16.mxu0 0
  %2368 = vmatpush1.bf16.msra.mxu0 0
  %2369 = vmatprep.subr.bf16.mxu0 0
  %2370 = vmatpush1.bf16.msra.mxu0 0
  %2371 = vmatprep.subr.bf16.mxu0 0
  %2372 = vmatpush1.bf16.msra.mxu0 0
  %2373 = vmatprep.subr.bf16.mxu0 0
  %2374 = vmatpush1.bf16.msra.mxu0 0
  %2375 = vmatprep.subr.bf16.mxu0 0
  %2376 = vmatpush1.bf16.msra.mxu0 0
  %2377 = vmatprep.subr.bf16.mxu0 0
  %2378 = vmatpush1.bf16.msra.mxu0 0
  %2379 = vmatprep.subr.bf16.mxu0 0
  %2380 = vmatpush1.bf16.msra.mxu0 0
  %2381 = vmatprep.subr.bf16.mxu0 0
  %2382 = vmatpush1.bf16.msra.mxu0 0
  %2383 = vmatprep.subr.bf16.mxu0 0
  %2384 = vmatpush1.bf16.msra.mxu0 0
  %2385 = vmatprep.subr.bf16.mxu0 0
  %2386 = vmatpush1.bf16.msra.mxu0 0
  %2387 = vmatprep.subr.bf16.mxu0 0
  %2388 = vmatpush1.bf16.msra.mxu0 0
  %2389 = vmatprep.subr.bf16.mxu0 0
  %2390 = vmatpush1.bf16.msra.mxu0 0
  %2391 = vmatprep.subr.bf16.mxu0 0
  %2392 = vmatpush1.bf16.msra.mxu0 0
  %2393 = vmatprep.subr.bf16.mxu0 0
  %2394 = vmatpush1.bf16.msra.mxu0 0
  %2395 = vmatprep.mubr.bf16.mxu0 0
  %2396 = vmatmul.mubr.bf16.gmra.mrb[0].mxu0 %v2352
  %v2397 = vpop.f32.mrb[0].mxu0
  %v2398 = vadd.f32 0.0, %v2397
  %v2399 = vpop.f32.mrb[0].mxu0
  %v2400 = vpop.f32.mrb[0].mxu0
  %v2401 = vadd.f32 0.0, %v2400
  %v2402 = vpop.f32.mrb[0].mxu0
  %2403 = vmatprep.mubr.bf16.mxu0 0
  %2404 = vmatmul.mubr.bf16.gmra.mrb[0].mxu0 %v2355
  %v2405 = vpop.f32.mrb[0].mxu0
  %v2406 = vadd.f32 0.0, %v2405
  %v2407 = vpop.f32.mrb[0].mxu0
  %v2408 = vpop.f32.mrb[0].mxu0
  %v2409 = vadd.f32 0.0, %v2408
  %v2410 = vpop.f32.mrb[0].mxu0
  %2411 = vmatprep.mubr.bf16.mxu0 0
  %2412 = vmatmul.mubr.bf16.gmra.mrb[0].mxu0 %v2358
  %v2413 = vpop.f32.mrb[0].mxu0
  %v2414 = vadd.f32 0.0, %v2413
  %v2415 = vpop.f32.mrb[0].mxu0
  %v2416 = vpop.f32.mrb[0].mxu0
  %v2417 = vadd.f32 0.0, %v2416
  %v2418 = vpop.f32.mrb[0].mxu0
  %2419 = vmatprep.mubr.bf16.mxu0 0
  %2420 = vmatmul.mubr.bf16.gmra.mrb[0].mxu0 %v2361
  %v2421 = vpop.f32.mrb[0].mxu0
  %v2422 = vadd.f32 0.0, %v2421
  %v2423 = vpop.f32.mrb[0].mxu0
  %v2424 = vpop.f32.mrb[0].mxu0
  %v2425 = vadd.f32 0.0, %v2424
  %v2426 = vpop.f32.mrb[0].mxu0
  %2427 = vdwg.mxu0
  %2432 = vrot.lane.b32.xlu0 %v2414, 16
  %v2433 = vpop.permute.xlu0 %2432
  %2434 = vrot.lane.b32.xlu0 %v2417, 16
  %v2435 = vpop.permute.xlu0 %2434
  %2436 = vrot.lane.b32.xlu0 %v2422, 16
  %v2437 = vpop.permute.xlu0 %2436
  %2438 = vrot.lane.b32.xlu0 %v2425, 16
  %v2439 = vpop.permute.xlu0 %2438
  %v2444 = vsel %vm188, %v2398, %v2433
  %v2445 = vsel %vm188, %v2401, %v2435
  %v2446 = vsel %vm188, %v2406, %v2437
  %v2447 = vsel %vm188, %v2409, %v2439
  %v2448 = vpack.c.bf16 %v2445, %v2444
  %v2449 = vpack.c.bf16 %v2447, %v2446
  %2451 = vset.pattern.permute.xlu0 4
  %2452 = vperm.xlu0 %2451, %v2325
  %v2453 = vpop.permute.xlu0 %2452
  %2456 = vset.pattern.permute.xlu0 4
  %2457 = vperm.xlu0 %2456, %v2326
  %v2458 = vpop.permute.xlu0 %2457
  %2461 = vset.pattern.permute.xlu0 4
  %2462 = vperm.xlu0 %2461, %v2327
  %v2463 = vpop.permute.xlu0 %2462
  %2466 = vset.pattern.permute.xlu0 4
  %2467 = vperm.xlu0 %2466, %v2328
  %v2468 = vpop.permute.xlu0 %2467
  %v2470 = vmul.f32 %v2453, %v438
  %v2471 = vmul.f32 %v2458, %v438
  %v2472 = vmul.f32 %v2463, %v438
  %v2473 = vmul.f32 %v2468, %v438
  %v2475 = vsel %vm315, %v2448, 0
  %v2478 = vsel %vm315, %v2449, 0
  %2480 = vmatprep.subr.bf16.mxu0 0
  %2481 = vmatpush1.bf16.msra.mxu0 %v451
  %2482 = vmatprep.subr.bf16.mxu0 0
  %2483 = vmatpush1.bf16.msra.mxu0 %v452
  %2484 = vmatprep.subr.bf16.mxu0 0
  %2485 = vmatpush1.bf16.msra.mxu0 0
  %2486 = vmatprep.subr.bf16.mxu0 0
  %2487 = vmatpush1.bf16.msra.mxu0 0
  %2488 = vmatprep.subr.bf16.mxu0 0
  %2489 = vmatpush1.bf16.msra.mxu0 0
  %2490 = vmatprep.subr.bf16.mxu0 0
  %2491 = vmatpush1.bf16.msra.mxu0 0
  %2492 = vmatprep.subr.bf16.mxu0 0
  %2493 = vmatpush1.bf16.msra.mxu0 0
  %2494 = vmatprep.subr.bf16.mxu0 0
  %2495 = vmatpush1.bf16.msra.mxu0 0
  %2496 = vmatprep.subr.bf16.mxu0 0
  %2497 = vmatpush1.bf16.msra.mxu0 0
  %2498 = vmatprep.subr.bf16.mxu0 0
  %2499 = vmatpush1.bf16.msra.mxu0 0
  %2500 = vmatprep.subr.bf16.mxu0 0
  %2501 = vmatpush1.bf16.msra.mxu0 0
  %2502 = vmatprep.subr.bf16.mxu0 0
  %2503 = vmatpush1.bf16.msra.mxu0 0
  %2504 = vmatprep.subr.bf16.mxu0 0
  %2505 = vmatpush1.bf16.msra.mxu0 0
  %2506 = vmatprep.subr.bf16.mxu0 0
  %2507 = vmatpush1.bf16.msra.mxu0 0
  %2508 = vmatprep.subr.bf16.mxu0 0
  %2509 = vmatpush1.bf16.msra.mxu0 0
  %2510 = vmatprep.subr.bf16.mxu0 0
  %2511 = vmatpush1.bf16.msra.mxu0 0
  %2512 = vmatprep.mubr.bf16.mxu0 0
  %2513 = vmatmul.mubr.bf16.gmra.mrb[0].mxu0 %v2475
  %v2514 = vpop.f32.mrb[0].mxu0
  %v2515 = vadd.f32 %v2470, %v2514
  %v2516 = vpop.f32.mrb[0].mxu0
  %v2517 = vpop.f32.mrb[0].mxu0
  %v2518 = vadd.f32 %v2471, %v2517
  %v2519 = vpop.f32.mrb[0].mxu0
  %2520 = vmatprep.mubr.bf16.mxu0 0
  %2521 = vmatmul.mubr.bf16.gmra.mrb[0].mxu0 %v2478
  %v2522 = vpop.f32.mrb[0].mxu0
  %v2523 = vadd.f32 %v2472, %v2522
  %v2524 = vpop.f32.mrb[0].mxu0
  %v2525 = vpop.f32.mrb[0].mxu0
  %v2526 = vadd.f32 %v2473, %v2525
  %v2527 = vpop.f32.mrb[0].mxu0
  %2528 = vdwg.mxu0
  %2529 = vset.pattern.permute.xlu0 5
  %2530 = vperm.xlu0 %2529, %v2325
  %v2531 = vpop.permute.xlu0 %2530
  %2533 = vset.pattern.permute.xlu0 5
  %2534 = vperm.xlu0 %2533, %v2326
  %v2535 = vpop.permute.xlu0 %2534
  %2537 = vset.pattern.permute.xlu0 5
  %2538 = vperm.xlu0 %2537, %v2327
  %v2539 = vpop.permute.xlu0 %2538
  %2541 = vset.pattern.permute.xlu0 5
  %2542 = vperm.xlu0 %2541, %v2328
  %v2543 = vpop.permute.xlu0 %2542
  %v2545 = vmul.f32 %v2531, %v529
  %v2546 = vmul.f32 %v2535, %v529
  %v2547 = vmul.f32 %v2539, %v529
  %v2548 = vmul.f32 %v2543, %v529
  %v2549 = vadd.f32 %v2515, %v2545
  %v2550 = vadd.f32 %v2518, %v2546
  %v2551 = vadd.f32 %v2523, %v2547
  %v2552 = vadd.f32 %v2526, %v2548
  %2553 = vset.pattern.permute.xlu0 0
  %2554 = vperm.xlu0 %2553, %v2325
  %v2555 = vpop.permute.xlu0 %2554
  %2557 = vset.pattern.permute.xlu0 0
  %2558 = vperm.xlu0 %2557, %v2326
  %v2559 = vpop.permute.xlu0 %2558
  %2561 = vset.pattern.permute.xlu0 0
  %2562 = vperm.xlu0 %2561, %v2327
  %v2563 = vpop.permute.xlu0 %2562
  %2565 = vset.pattern.permute.xlu0 0
  %2566 = vperm.xlu0 %2565, %v2328
  %v2567 = vpop.permute.xlu0 %2566
  %v2569 = vadd.f32 %v2549, %v2555
  %v2570 = vadd.f32 %v2550, %v2559
  %v2571 = vadd.f32 %v2551, %v2563
  %v2572 = vadd.f32 %v2552, %v2567
  %v2573 = vsub.f32 0.0, %v2569
  %v2574 = vsub.f32 0.0, %v2570
  %v2575 = vsub.f32 0.0, %v2571
  %v2576 = vsub.f32 0.0, %v2572
  %v2577 = vmul.f32 %v2573, 1.442695
  %v2578 = vpow.pop %v2577
  %v2579 = vmul.f32 %v2574, 1.442695
  %v2580 = vpow.pop %v2579
  %v2581 = vmul.f32 %v2575, 1.442695
  %v2582 = vpow.pop %v2581
  %v2583 = vmul.f32 %v2576, 1.442695
  %v2584 = vpow.pop %v2583
  %v2585 = vadd.f32 %v2578, 1.0
  %v2586 = vadd.f32 %v2580, 1.0
  %v2587 = vadd.f32 %v2582, 1.0
  %v2588 = vadd.f32 %v2584, 1.0
  %v2589 = vrcp.pop %v2585
  %v2590 = vrcp.pop %v2586
  %v2591 = vrcp.pop %v2587
  %v2592 = vrcp.pop %v2588
  %v2593 = vmul.f32 %v2569, %v2589
  %v2594 = vmul.f32 %v2570, %v2590
  %v2595 = vmul.f32 %v2571, %v2591
  %v2596 = vmul.f32 %v2572, %v2592
  %v2597 = vpack.c.bf16 %v2594, %v2593
  %v2598 = vpack.c.bf16 %v2596, %v2595
  %2599 = vset.pattern.permute.xlu0 1
  %2600 = vperm.xlu0 %2599, %v2325
  %v2601 = vpop.permute.xlu0 %2600
  %2603 = vset.pattern.permute.xlu0 1
  %2604 = vperm.xlu0 %2603, %v2326
  %v2605 = vpop.permute.xlu0 %2604
  %2607 = vset.pattern.permute.xlu0 1
  %2608 = vperm.xlu0 %2607, %v2327
  %v2609 = vpop.permute.xlu0 %2608
  %2611 = vset.pattern.permute.xlu0 1
  %2612 = vperm.xlu0 %2611, %v2328
  %v2613 = vpop.permute.xlu0 %2612
  %v2619 = vunpack.c.l.b16 %v2312
  %v2620 = vunpack.c.l.b16 %v2313
  %v2621 = vunpack.c.l.b16 %v2314
  %v2622 = vunpack.c.l.b16 %v2315
  %v2623 = vpack.c.b16 %v2620, %v2619
  %v2624 = vpack.c.b16 %v2622, %v2621
  %v2626 = vsel %vm315, %v2623, 0
  %v2629 = vsel %vm315, %v2624, 0
  %2631 = vmatprep.subr.bf16.mxu0 0
  %2632 = vmatpush1.bf16.msra.mxu0 %v2597
  %2633 = vmatprep.subr.bf16.mxu0 0
  %2634 = vmatpush1.bf16.msra.mxu0 %v2598
  %2635 = vmatprep.subr.bf16.mxu0 0
  %2636 = vmatpush1.bf16.msra.mxu0 0
  %2637 = vmatprep.subr.bf16.mxu0 0
  %2638 = vmatpush1.bf16.msra.mxu0 0
  %2639 = vmatprep.subr.bf16.mxu0 0
  %2640 = vmatpush1.bf16.msra.mxu0 0
  %2641 = vmatprep.subr.bf16.mxu0 0
  %2642 = vmatpush1.bf16.msra.mxu0 0
  %2643 = vmatprep.subr.bf16.mxu0 0
  %2644 = vmatpush1.bf16.msra.mxu0 0
  %2645 = vmatprep.subr.bf16.mxu0 0
  %2646 = vmatpush1.bf16.msra.mxu0 0
  %2647 = vmatprep.subr.bf16.mxu0 0
  %2648 = vmatpush1.bf16.msra.mxu0 0
  %2649 = vmatprep.subr.bf16.mxu0 0
  %2650 = vmatpush1.bf16.msra.mxu0 0
  %2651 = vmatprep.subr.bf16.mxu0 0
  %2652 = vmatpush1.bf16.msra.mxu0 0
  %2653 = vmatprep.subr.bf16.mxu0 0
  %2654 = vmatpush1.bf16.msra.mxu0 0
  %2655 = vmatprep.subr.bf16.mxu0 0
  %2656 = vmatpush1.bf16.msra.mxu0 0
  %2657 = vmatprep.subr.bf16.mxu0 0
  %2658 = vmatpush1.bf16.msra.mxu0 0
  %2659 = vmatprep.subr.bf16.mxu0 0
  %2660 = vmatpush1.bf16.msra.mxu0 0
  %2661 = vmatprep.subr.bf16.mxu0 0
  %2662 = vmatpush1.bf16.msra.mxu0 0
  %2663 = vmatprep.mubr.bf16.mxu0 0
  %2664 = vmatmul.mubr.bf16.gmra.mrb[0].mxu0 %v2626
  %v2665 = vpop.f32.mrb[0].mxu0
  %v2666 = vadd.f32 %v2601, %v2665
  %v2667 = vpop.f32.mrb[0].mxu0
  %v2668 = vpop.f32.mrb[0].mxu0
  %v2669 = vadd.f32 %v2605, %v2668
  %v2670 = vpop.f32.mrb[0].mxu0
  %2671 = vmatprep.mubr.bf16.mxu0 0
  %2672 = vmatmul.mubr.bf16.gmra.mrb[0].mxu0 %v2629
  %v2673 = vpop.f32.mrb[0].mxu0
  %v2674 = vadd.f32 %v2609, %v2673
  %v2675 = vpop.f32.mrb[0].mxu0
  %v2676 = vpop.f32.mrb[0].mxu0
  %v2677 = vadd.f32 %v2613, %v2676
  %v2678 = vpop.f32.mrb[0].mxu0
  %2679 = vdwg.mxu0
  %v2680 = vsub.f32 0.0, %v2666
  %v2681 = vsub.f32 0.0, %v2669
  %v2682 = vsub.f32 0.0, %v2674
  %v2683 = vsub.f32 0.0, %v2677
  %v2684 = vmul.f32 %v2680, 1.442695
  %v2685 = vpow.pop %v2684
  %v2686 = vmul.f32 %v2681, 1.442695
  %v2687 = vpow.pop %v2686
  %v2688 = vmul.f32 %v2682, 1.442695
  %v2689 = vpow.pop %v2688
  %v2690 = vmul.f32 %v2683, 1.442695
  %v2691 = vpow.pop %v2690
  %v2692 = vadd.f32 %v2685, 1.0
  %v2693 = vadd.f32 %v2687, 1.0
  %v2694 = vadd.f32 %v2689, 1.0
  %v2695 = vadd.f32 %v2691, 1.0
  %v2696 = vrcp.pop %v2692
  %v2697 = vrcp.pop %v2693
  %v2698 = vrcp.pop %v2694
  %v2699 = vrcp.pop %v2695
  %v2700 = vmul.f32 %v2666, %v2696
  %v2701 = vmul.f32 %v2669, %v2697
  %v2702 = vmul.f32 %v2674, %v2698
  %v2703 = vmul.f32 %v2677, %v2699
  %v2704 = vmul.f32 %v2700, %v692
  %v2705 = vmul.f32 %v2701, %v692
  %v2706 = vmul.f32 %v2702, %v692
  %v2707 = vmul.f32 %v2703, %v692
  %v2708 = vpack.c.bf16 %v2705, %v2704
  %v2709 = vpack.c.bf16 %v2707, %v2706
  %2710 = vmatprep.subr.bf16.mxu0 0
  %2711 = vmatpush1.bf16.msra.mxu0 %v731
  %2712 = vmatprep.subr.bf16.mxu0 0
  %2713 = vmatpush1.bf16.msra.mxu0 %v732
  %2714 = vmatprep.subr.bf16.mxu0 0
  %2715 = vmatpush1.bf16.msra.mxu0 %v733
  %2716 = vmatprep.subr.bf16.mxu0 0
  %2717 = vmatpush1.bf16.msra.mxu0 %v734
  %2718 = vmatprep.subr.bf16.mxu0 0
  %2719 = vmatpush1.bf16.msra.mxu0 %v735
  %2720 = vmatprep.subr.bf16.mxu0 0
  %2721 = vmatpush1.bf16.msra.mxu0 %v736
  %2722 = vmatprep.subr.bf16.mxu0 0
  %2723 = vmatpush1.bf16.msra.mxu0 %v737
  %2724 = vmatprep.subr.bf16.mxu0 0
  %2725 = vmatpush1.bf16.msra.mxu0 %v738
  %2726 = vmatprep.subr.bf16.mxu0 0
  %2727 = vmatpush1.bf16.msra.mxu0 0
  %2728 = vmatprep.subr.bf16.mxu0 0
  %2729 = vmatpush1.bf16.msra.mxu0 0
  %2730 = vmatprep.subr.bf16.mxu0 0
  %2731 = vmatpush1.bf16.msra.mxu0 0
  %2732 = vmatprep.subr.bf16.mxu0 0
  %2733 = vmatpush1.bf16.msra.mxu0 0
  %2734 = vmatprep.subr.bf16.mxu0 0
  %2735 = vmatpush1.bf16.msra.mxu0 0
  %2736 = vmatprep.subr.bf16.mxu0 0
  %2737 = vmatpush1.bf16.msra.mxu0 0
  %2738 = vmatprep.subr.bf16.mxu0 0
  %2739 = vmatpush1.bf16.msra.mxu0 0
  %2740 = vmatprep.subr.bf16.mxu0 0
  %2741 = vmatpush1.bf16.msra.mxu0 0
  %2742 = vmatprep.mubr.bf16.mxu0 0
  %2743 = vmatmul.mubr.bf16.gmra.mrb[0].mxu0 %v2708
  %v2744 = vpop.f32.mrb[0].mxu0
  %v2745 = vadd.f32 0.0, %v2744
  %v2746 = vpop.f32.mrb[0].mxu0
  %v2747 = vpop.f32.mrb[0].mxu0
  %v2748 = vadd.f32 0.0, %v2747
  %v2749 = vpop.f32.mrb[0].mxu0
  %2750 = vmatprep.mubr.bf16.mxu0 0
  %2751 = vmatmul.mubr.bf16.gmra.mrb[0].mxu0 %v2709
  %v2752 = vpop.f32.mrb[0].mxu0
  %v2753 = vadd.f32 0.0, %v2752
  %v2754 = vpop.f32.mrb[0].mxu0
  %v2755 = vpop.f32.mrb[0].mxu0
  %v2756 = vadd.f32 0.0, %v2755
  %v2757 = vpop.f32.mrb[0].mxu0
  %2758 = vdwg.mxu0
  %v2759 = vpack.c.bf16 %v2748, %v2745
  %v2760 = vpack.c.bf16 %v2756, %v2753
  %2761 = vset.pattern.permute.xlu0 2
  %2762 = vperm.xlu0 %2761, %v2325
  %v2763 = vpop.permute.xlu0 %2762
  %2765 = vset.pattern.permute.xlu0 2
  %2766 = vperm.xlu0 %2765, %v2326
  %v2767 = vpop.permute.xlu0 %2766
  %2769 = vset.pattern.permute.xlu0 2
  %2770 = vperm.xlu0 %2769, %v2327
  %v2771 = vpop.permute.xlu0 %2770
  %2773 = vset.pattern.permute.xlu0 2
  %2774 = vperm.xlu0 %2773, %v2328
  %v2775 = vpop.permute.xlu0 %2774
  %v2781 = vunpack.c.l.b16 %v2316
  %v2782 = vunpack.c.l.b16 %v2317
  %v2783 = vunpack.c.l.b16 %v2318
  %v2784 = vunpack.c.l.b16 %v2319
  %v2785 = vpack.c.b16 %v2782, %v2781
  %v2786 = vpack.c.b16 %v2784, %v2783
  %v2788 = vsel %vm824, %v2785, 0
  %v2791 = vsel %vm824, %v2786, 0
  %2793 = vmatprep.subr.bf16.mxu0 0
  %2794 = vmatpush1.bf16.msra.mxu0 %v2329
  %2795 = vmatprep.subr.bf16.mxu0 0
  %2796 = vmatpush1.bf16.msra.mxu0 %v2330
  %2797 = vmatprep.subr.bf16.mxu0 0
  %2798 = vmatpush1.bf16.msra.mxu0 %v2759
  %2799 = vmatprep.subr.bf16.mxu0 0
  %2800 = vmatpush1.bf16.msra.mxu0 %v2760
  %2801 = vmatprep.subr.bf16.mxu0 0
  %2802 = vmatpush1.bf16.msra.mxu0 0
  %2803 = vmatprep.subr.bf16.mxu0 0
  %2804 = vmatpush1.bf16.msra.mxu0 0
  %2805 = vmatprep.subr.bf16.mxu0 0
  %2806 = vmatpush1.bf16.msra.mxu0 0
  %2807 = vmatprep.subr.bf16.mxu0 0
  %2808 = vmatpush1.bf16.msra.mxu0 0
  %2809 = vmatprep.subr.bf16.mxu0 0
  %2810 = vmatpush1.bf16.msra.mxu0 0
  %2811 = vmatprep.subr.bf16.mxu0 0
  %2812 = vmatpush1.bf16.msra.mxu0 0
  %2813 = vmatprep.subr.bf16.mxu0 0
  %2814 = vmatpush1.bf16.msra.mxu0 0
  %2815 = vmatprep.subr.bf16.mxu0 0
  %2816 = vmatpush1.bf16.msra.mxu0 0
  %2817 = vmatprep.subr.bf16.mxu0 0
  %2818 = vmatpush1.bf16.msra.mxu0 0
  %2819 = vmatprep.subr.bf16.mxu0 0
  %2820 = vmatpush1.bf16.msra.mxu0 0
  %2821 = vmatprep.subr.bf16.mxu0 0
  %2822 = vmatpush1.bf16.msra.mxu0 0
  %2823 = vmatprep.subr.bf16.mxu0 0
  %2824 = vmatpush1.bf16.msra.mxu0 0
  %2825 = vmatprep.mubr.bf16.mxu0 0
  %2826 = vmatmul.mubr.bf16.gmra.mrb[0].mxu0 %v2788
  %v2827 = vpop.f32.mrb[0].mxu0
  %v2828 = vadd.f32 %v2763, %v2827
  %v2829 = vpop.f32.mrb[0].mxu0
  %v2830 = vpop.f32.mrb[0].mxu0
  %v2831 = vadd.f32 %v2767, %v2830
  %v2832 = vpop.f32.mrb[0].mxu0
  %2833 = vmatprep.mubr.bf16.mxu0 0
  %2834 = vmatmul.mubr.bf16.gmra.mrb[0].mxu0 %v2791
  %v2835 = vpop.f32.mrb[0].mxu0
  %v2836 = vadd.f32 %v2771, %v2835
  %v2837 = vpop.f32.mrb[0].mxu0
  %v2838 = vpop.f32.mrb[0].mxu0
  %v2839 = vadd.f32 %v2775, %v2838
  %v2840 = vpop.f32.mrb[0].mxu0
  %2841 = vdwg.mxu0
  %v2842 = vsub.f32 0.0, %v2828
  %v2843 = vsub.f32 0.0, %v2831
  %v2844 = vsub.f32 0.0, %v2836
  %v2845 = vsub.f32 0.0, %v2839
  %v2846 = vmul.f32 %v2842, 1.442695
  %v2847 = vpow.pop %v2846
  %v2848 = vmul.f32 %v2843, 1.442695
  %v2849 = vpow.pop %v2848
  %v2850 = vmul.f32 %v2844, 1.442695
  %v2851 = vpow.pop %v2850
  %v2852 = vmul.f32 %v2845, 1.442695
  %v2853 = vpow.pop %v2852
  %v2854 = vadd.f32 %v2847, 1.0
  %v2855 = vadd.f32 %v2849, 1.0
  %v2856 = vadd.f32 %v2851, 1.0
  %v2857 = vadd.f32 %v2853, 1.0
  %v2858 = vrcp.pop %v2854
  %v2859 = vrcp.pop %v2855
  %v2860 = vrcp.pop %v2856
  %v2861 = vrcp.pop %v2857
  %v2862 = vmul.f32 %v2828, %v2858
  %v2863 = vmul.f32 %v2831, %v2859
  %v2864 = vmul.f32 %v2836, %v2860
  %v2865 = vmul.f32 %v2839, %v2861
  %v2866 = vpack.c.bf16 %v2863, %v2862
  %v2867 = vpack.c.bf16 %v2865, %v2864
  %2868 = vset.pattern.permute.xlu0 3
  %2869 = vperm.xlu0 %2868, %v2325
  %v2870 = vpop.permute.xlu0 %2869
  %2872 = vset.pattern.permute.xlu0 3
  %2873 = vperm.xlu0 %2872, %v2326
  %v2874 = vpop.permute.xlu0 %2873
  %2876 = vset.pattern.permute.xlu0 3
  %2877 = vperm.xlu0 %2876, %v2327
  %v2878 = vpop.permute.xlu0 %2877
  %2880 = vset.pattern.permute.xlu0 3
  %2881 = vperm.xlu0 %2880, %v2328
  %v2882 = vpop.permute.xlu0 %2881
  %v2888 = vunpack.c.l.b16 %v2320
  %v2889 = vunpack.c.l.b16 %v2321
  %v2890 = vunpack.c.l.b16 %v2322
  %v2891 = vunpack.c.l.b16 %v2323
  %v2892 = vpack.c.b16 %v2889, %v2888
  %v2893 = vpack.c.b16 %v2891, %v2890
  %v2895 = vsel %vm315, %v2892, 0
  %v2898 = vsel %vm315, %v2893, 0
  %2900 = vmatprep.subr.bf16.mxu0 0
  %2901 = vmatpush1.bf16.msra.mxu0 %v2866
  %2902 = vmatprep.subr.bf16.mxu0 0
  %2903 = vmatpush1.bf16.msra.mxu0 %v2867
  %2904 = vmatprep.subr.bf16.mxu0 0
  %2905 = vmatpush1.bf16.msra.mxu0 0
  %2906 = vmatprep.subr.bf16.mxu0 0
  %2907 = vmatpush1.bf16.msra.mxu0 0
  %2908 = vmatprep.subr.bf16.mxu0 0
  %2909 = vmatpush1.bf16.msra.mxu0 0
  %2910 = vmatprep.subr.bf16.mxu0 0
  %2911 = vmatpush1.bf16.msra.mxu0 0
  %2912 = vmatprep.subr.bf16.mxu0 0
  %2913 = vmatpush1.bf16.msra.mxu0 0
  %2914 = vmatprep.subr.bf16.mxu0 0
  %2915 = vmatpush1.bf16.msra.mxu0 0
  %2916 = vmatprep.subr.bf16.mxu0 0
  %2917 = vmatpush1.bf16.msra.mxu0 0
  %2918 = vmatprep.subr.bf16.mxu0 0
  %2919 = vmatpush1.bf16.msra.mxu0 0
  %2920 = vmatprep.subr.bf16.mxu0 0
  %2921 = vmatpush1.bf16.msra.mxu0 0
  %2922 = vmatprep.subr.bf16.mxu0 0
  %2923 = vmatpush1.bf16.msra.mxu0 0
  %2924 = vmatprep.subr.bf16.mxu0 0
  %2925 = vmatpush1.bf16.msra.mxu0 0
  %2926 = vmatprep.subr.bf16.mxu0 0
  %2927 = vmatpush1.bf16.msra.mxu0 0
  %2928 = vmatprep.subr.bf16.mxu0 0
  %2929 = vmatpush1.bf16.msra.mxu0 0
  %2930 = vmatprep.subr.bf16.mxu0 0
  %2931 = vmatpush1.bf16.msra.mxu0 0
  %2932 = vmatprep.mubr.bf16.mxu0 0
  %2933 = vmatmul.mubr.bf16.gmra.mrb[0].mxu0 %v2895
  %v2934 = vpop.f32.mrb[0].mxu0
  %v2935 = vadd.f32 %v2870, %v2934
  %v2936 = vpop.f32.mrb[0].mxu0
  %v2937 = vpop.f32.mrb[0].mxu0
  %v2938 = vadd.f32 %v2874, %v2937
  %v2939 = vpop.f32.mrb[0].mxu0
  %2940 = vmatprep.mubr.bf16.mxu0 0
  %2941 = vmatmul.mubr.bf16.gmra.mrb[0].mxu0 %v2898
  %v2942 = vpop.f32.mrb[0].mxu0
  %v2943 = vadd.f32 %v2878, %v2942
  %v2944 = vpop.f32.mrb[0].mxu0
  %v2945 = vpop.f32.mrb[0].mxu0
  %v2946 = vadd.f32 %v2882, %v2945
  %v2947 = vpop.f32.mrb[0].mxu0
  %2948 = vdwg.mxu0
  %v2949 = vadd.f32 %v2299, %v2935
  %v2950 = vadd.f32 %v2300, %v2938
  %v2951 = vadd.f32 %v2301, %v2943
  %v2952 = vadd.f32 %v2302, %v2946
  %v2953 = vmul.f32 %v2949, %v31
  %v2954 = vmul.f32 %v2950, %v31
  %v2955 = vmul.f32 %v2951, %v31
  %v2956 = vmul.f32 %v2952, %v31
  %v2957 = vld [vmem:[%s6] sm:$0xff]
  %s2958 = scalar_lea.vmem %s6, 8
  %v2959 = vld [vmem:[%s2958] sm:$0xff]
  %2961 = vset.pattern.permute.xlu0 32
  %2962 = vperm.xlu0 %2961, %v2957
  %v2963 = vpop.permute.xlu0 %2962
  %v2965 = vsel %vm315, %v2957, 0
  %2967 = vmatprep.subr.mxu0 0.0
  %2968 = vmatpush1.msra.mxu0 %v2953
  %2969 = vmatprep.subr.mxu0 0.0
  %2970 = vmatpush1.msra.mxu0 %v2954
  %2971 = vmatprep.subr.mxu0 0.0
  %2972 = vmatpush1.msra.mxu0 %v2955
  %2973 = vmatprep.subr.mxu0 0.0
  %2974 = vmatpush1.msra.mxu0 %v2956
  %2975 = vmatprep.subr.mxu0 0.0
  %2976 = vmatpush1.msra.mxu0 0.0
  %2977 = vmatprep.subr.mxu0 0.0
  %2978 = vmatpush1.msra.mxu0 0.0
  %2979 = vmatprep.subr.mxu0 0.0
  %2980 = vmatpush1.msra.mxu0 0.0
  %2981 = vmatprep.subr.mxu0 0.0
  %2982 = vmatpush1.msra.mxu0 0.0
  %2983 = vmatprep.subr.mxu0 0.0
  %2984 = vmatpush1.msra.mxu0 0.0
  %2985 = vmatprep.subr.mxu0 0.0
  %2986 = vmatpush1.msra.mxu0 0.0
  %2987 = vmatprep.subr.mxu0 0.0
  %2988 = vmatpush1.msra.mxu0 0.0
  %2989 = vmatprep.subr.mxu0 0.0
  %2990 = vmatpush1.msra.mxu0 0.0
  %2991 = vmatprep.subr.mxu0 0.0
  %2992 = vmatpush1.msra.mxu0 0.0
  %2993 = vmatprep.subr.mxu0 0.0
  %2994 = vmatpush1.msra.mxu0 0.0
  %2995 = vmatprep.subr.mxu0 0.0
  %2996 = vmatpush1.msra.mxu0 0.0
  %2997 = vmatprep.subr.mxu0 0.0
  %2998 = vmatpush1.msra.mxu0 0.0
  %2999 = vmatprep.subr.mxu0 0.0
  %3000 = vmatpush1.msra.mxu0 0.0
  %3001 = vmatprep.subr.mxu0 0.0
  %3002 = vmatpush1.msra.mxu0 0.0
  %3003 = vmatprep.subr.mxu0 0.0
  %3004 = vmatpush1.msra.mxu0 0.0
  %3005 = vmatprep.subr.mxu0 0.0
  %3006 = vmatpush1.msra.mxu0 0.0
  %3007 = vmatprep.subr.mxu0 0.0
  %3008 = vmatpush1.msra.mxu0 0.0
  %3009 = vmatprep.subr.mxu0 0.0
  %3010 = vmatpush1.msra.mxu0 0.0
  %3011 = vmatprep.subr.mxu0 0.0
  %3012 = vmatpush1.msra.mxu0 0.0
  %3013 = vmatprep.subr.mxu0 0.0
  %3014 = vmatpush1.msra.mxu0 0.0
  %3015 = vmatprep.subr.mxu0 0.0
  %3016 = vmatpush1.msra.mxu0 0.0
  %3017 = vmatprep.subr.mxu0 0.0
  %3018 = vmatpush1.msra.mxu0 0.0
  %3019 = vmatprep.subr.mxu0 0.0
  %3020 = vmatpush1.msra.mxu0 0.0
  %3021 = vmatprep.subr.mxu0 0.0
  %3022 = vmatpush1.msra.mxu0 0.0
  %3023 = vmatprep.subr.mxu0 0.0
  %3024 = vmatpush1.msra.mxu0 0.0
  %3025 = vmatprep.subr.mxu0 0.0
  %3026 = vmatpush1.msra.mxu0 0.0
  %3027 = vmatprep.subr.mxu0 0.0
  %3028 = vmatpush1.msra.mxu0 0.0
  %3029 = vmatprep.subr.mxu0 0.0
  %3030 = vmatpush1.msra.mxu0 0.0
  %3031 = vmatprep.mubr.f32.mxu0 0.0
  %3032 = vmatmul.mubr.f32.gmra.mrb[0].mxu0 %v2965
  %v3033 = vpop.f32.mrb[0].mxu0
  %v3034 = vadd.f32 %v2963, %v3033
  %v3035 = vpop.f32.mrb[0].mxu0
  %3036 = vdwg.mxu0
  %v3037 = vmul.f32 %v3034, %v31
  %3039 = vset.pattern.permute.xlu0 32
  %3040 = vperm.xlu0 %3039, %v2959
  %v3041 = vpop.permute.xlu0 %3040
  %v3043 = vsel %vm315, %v2959, 0
  %3045 = vmatprep.subr.mxu0 0.0
  %3046 = vmatpush1.msra.mxu0 %v2704
  %3047 = vmatprep.subr.mxu0 0.0
  %3048 = vmatpush1.msra.mxu0 %v2705
  %3049 = vmatprep.subr.mxu0 0.0
  %3050 = vmatpush1.msra.mxu0 %v2706
  %3051 = vmatprep.subr.mxu0 0.0
  %3052 = vmatpush1.msra.mxu0 %v2707
  %3053 = vmatprep.subr.mxu0 0.0
  %3054 = vmatpush1.msra.mxu0 0.0
  %3055 = vmatprep.subr.mxu0 0.0
  %3056 = vmatpush1.msra.mxu0 0.0
  %3057 = vmatprep.subr.mxu0 0.0
  %3058 = vmatpush1.msra.mxu0 0.0
  %3059 = vmatprep.subr.mxu0 0.0
  %3060 = vmatpush1.msra.mxu0 0.0
  %3061 = vmatprep.subr.mxu0 0.0
  %3062 = vmatpush1.msra.mxu0 0.0
  %3063 = vmatprep.subr.mxu0 0.0
  %3064 = vmatpush1.msra.mxu0 0.0
  %3065 = vmatprep.subr.mxu0 0.0
  %3066 = vmatpush1.msra.mxu0 0.0
  %3067 = vmatprep.subr.mxu0 0.0
  %3068 = vmatpush1.msra.mxu0 0.0
  %3069 = vmatprep.subr.mxu0 0.0
  %3070 = vmatpush1.msra.mxu0 0.0
  %3071 = vmatprep.subr.mxu0 0.0
  %3072 = vmatpush1.msra.mxu0 0.0
  %3073 = vmatprep.subr.mxu0 0.0
  %3074 = vmatpush1.msra.mxu0 0.0
  %3075 = vmatprep.subr.mxu0 0.0
  %3076 = vmatpush1.msra.mxu0 0.0
  %3077 = vmatprep.subr.mxu0 0.0
  %3078 = vmatpush1.msra.mxu0 0.0
  %3079 = vmatprep.subr.mxu0 0.0
  %3080 = vmatpush1.msra.mxu0 0.0
  %3081 = vmatprep.subr.mxu0 0.0
  %3082 = vmatpush1.msra.mxu0 0.0
  %3083 = vmatprep.subr.mxu0 0.0
  %3084 = vmatpush1.msra.mxu0 0.0
  %3085 = vmatprep.subr.mxu0 0.0
  %3086 = vmatpush1.msra.mxu0 0.0
  %3087 = vmatprep.subr.mxu0 0.0
  %3088 = vmatpush1.msra.mxu0 0.0
  %3089 = vmatprep.subr.mxu0 0.0
  %3090 = vmatpush1.msra.mxu0 0.0
  %3091 = vmatprep.subr.mxu0 0.0
  %3092 = vmatpush1.msra.mxu0 0.0
  %3093 = vmatprep.subr.mxu0 0.0
  %3094 = vmatpush1.msra.mxu0 0.0
  %3095 = vmatprep.subr.mxu0 0.0
  %3096 = vmatpush1.msra.mxu0 0.0
  %3097 = vmatprep.subr.mxu0 0.0
  %3098 = vmatpush1.msra.mxu0 0.0
  %3099 = vmatprep.subr.mxu0 0.0
  %3100 = vmatpush1.msra.mxu0 0.0
  %3101 = vmatprep.subr.mxu0 0.0
  %3102 = vmatpush1.msra.mxu0 0.0
  %3103 = vmatprep.subr.mxu0 0.0
  %3104 = vmatpush1.msra.mxu0 0.0
  %3105 = vmatprep.subr.mxu0 0.0
  %3106 = vmatpush1.msra.mxu0 0.0
  %3107 = vmatprep.subr.mxu0 0.0
  %3108 = vmatpush1.msra.mxu0 0.0
  %3109 = vmatprep.mubr.f32.mxu0 0.0
  %3110 = vmatmul.mubr.f32.gmra.mrb[0].mxu0 %v3043
  %v3111 = vpop.f32.mrb[0].mxu0
  %v3112 = vadd.f32 %v3041, %v3111
  %v3113 = vpop.f32.mrb[0].mxu0
  %3114 = vdwg.mxu0
  %v3115 = vmul.f32 %v3112, %v692
  %v3116 = vsel %vm188, %v3037, 0.0
  %3117 = vst [vmem:[%s7] sm:$0xff] %v3116
  %3118 = vst [vmem:[%s7 + $0x8] sm:$0xff] %v3115
  // Predicated region
  $region30: #{egnn_output_he.1} parent=0 // pred_check
    _
  $region31: #{egnn_output_he.1} parent=0 // pred_check_branch
    %3120 = sbr.rel (0) target = $region33
  $region32: #{egnn_output_he.1} parent=0 // pred_region
    _
  $region33: #{egnn_output_he.1} parent=0 // pred_fallthru
    _
  // Predicated region
  $region34: #{egnn_output_he.1} parent=0 // pred_check
    _
  $region35: #{egnn_output_he.1} parent=0 // pred_check_branch
    %3122 = sbr.rel (0) target = $region37
  $region36: #{egnn_output_he.1} parent=0 // pred_region
    _
  $region37: #{egnn_output_he.1} parent=0 // pred_fallthru
    _

</llo_original>
